<compile_context>
chip_gen: v7x
topology: tpu7x:2x2x1
jax: 0.10.0
libtpu: 0.0.40
codegen_flags: <defaults>
</compile_context>

<pallas_src>
import math
import jax
import jax.numpy as jnp
from jax import lax
from jax.experimental import pallas as pl
from jax.experimental.pallas import tpu as pltpu


def _make_kernel(T, N, D, H, P):
    inv_sqrt_h = 1.0 / math.sqrt(H)

    def kernel(x_ref, A_ref, At_ref, Wcat_ref, b_ref, h_out_ref):
        # Everything is VMEM-resident; load the loop-invariant operands once.
        A = A_ref[...]            # (N, H, P)
        At = At_ref[...]          # (N, P, H)
        Wcat = Wcat_ref[...]      # (D + 2H, 4H)
        b = b_ref[...]            # (1, 4H)

        # h0 = c0 = mean of A over spatial positions (done once).
        h0 = jnp.mean(A, axis=2)                                       # (N, H)

        def step(t, carry):
            prev_h, prev_c = carry                                     # (N, H), (N, H)

            # ---- scaled dot-product attention (MXU-mapped, per-n since N is tiny) ----
            scores = jnp.concatenate(
                [jnp.dot(prev_h[n:n + 1, :], A[n],
                         preferred_element_type=jnp.float32)           # (1, P)
                 for n in range(N)], axis=0) * inv_sqrt_h               # (N, P)
            scores = scores - jnp.max(scores, axis=-1, keepdims=True)
            e = jnp.exp(scores)
            w = e * pl.reciprocal(jnp.sum(e, axis=-1, keepdims=True),
                                  approx=True)                          # (N, P)
            attn = jnp.concatenate(
                [jnp.dot(w[n:n + 1, :], At[n],
                         preferred_element_type=jnp.float32)            # (1, H)
                 for n in range(N)], axis=0)                             # (N, H)

            # ---- LSTM step: single fused gate matmul on the MXU ----
            x_t = x_ref[t]                                               # (N, D)
            z = jnp.concatenate([x_t, prev_h, attn], axis=1)             # (N, D+2H)
            a = jnp.dot(z, Wcat, preferred_element_type=jnp.float32) + b  # (N, 4H)

            ifo = jax.nn.sigmoid(a[:, 0:3 * H])      # one 3H-wide sigmoid
            g = jnp.tanh(a[:, 3 * H:4 * H])          # one H-wide tanh
            i = ifo[:, 0:H]
            f = ifo[:, H:2 * H]
            o = ifo[:, 2 * H:3 * H]

            next_c = f * prev_c + i * g
            next_h = o * jnp.tanh(next_c)

            h_out_ref[t] = next_h                    # VMEM-resident output slab
            return next_h, next_c

        # Sequential recurrence fully inside the kernel; T is small -> unroll.
        lax.fori_loop(0, T, step, (h0, h0), unroll=True)

    return kernel


def attention_lstm_forward(x, A, Wx, Wh, Wattn, b):
    """x: (N, T, D), A: (N, H, P, P). Returns h: (N, T, H) (float32)."""
    N, T, D = x.shape
    _, H, Pa, Pb = A.shape
    P = Pa * Pb

    x_t = jnp.transpose(x, (1, 0, 2)).astype(jnp.float32)               # (T, N, D)
    A_flat = A.reshape(N, H, P).astype(jnp.float32)                      # (N, H, P)
    A_T = jnp.transpose(A_flat, (0, 2, 1))                               # (N, P, H)
    W_cat = jnp.concatenate([Wx.astype(jnp.float32),
                             Wh.astype(jnp.float32),
                             Wattn.astype(jnp.float32)], axis=0)         # (D+2H, 4H)
    b2 = b.reshape(1, 4 * H).astype(jnp.float32)

    # TODO(synk): for large N on v7x, add a leading batch-tile grid axis marked
    # "parallel" so the second TensorCore is used; pointless at N=2.
    vmem_specs = [pl.BlockSpec(memory_space=pltpu.MemorySpace.VMEM)
                  for _ in range(5)]

    h_tnh = pl.pallas_call(
        _make_kernel(T, N, D, H, P),
        out_shape=jax.ShapeDtypeStruct((T, N, H), jnp.float32),
        in_specs=vmem_specs,
        out_specs=pl.BlockSpec(memory_space=pltpu.MemorySpace.VMEM),
    )(x_t, A_flat, A_T, W_cat, b2)

    return jnp.transpose(h_tnh, (1, 0, 2))                               # (N, T, H)


# -------------------- pure-JAX reference (for verification) --------------------
def _reference(x, A, Wx, Wh, Wattn, b):
    N, T, D = x.shape
    _, H, Pa, Pb = A.shape
    A_flat = A.reshape(N, H, Pa * Pb)
    h0 = jnp.mean(A_flat, axis=2)
    prev_h, prev_c = h0, h0
    hs = []
    for t in range(T):
        scores = jnp.einsum('nh,nhp->np', prev_h, A_flat) / math.sqrt(H)
        w = jax.nn.softmax(scores, axis=-1)
        attn = jnp.einsum('nhp,np->nh', A_flat, w)
        a = x[:, t, :] @ Wx + prev_h @ Wh + b + attn @ Wattn
        i = jax.nn.sigmoid(a[:, 0:H])
        f = jax.nn.sigmoid(a[:, H:2 * H])
        o = jax.nn.sigmoid(a[:, 2 * H:3 * H])
        g = jnp.tanh(a[:, 3 * H:4 * H])
        prev_c = f * prev_c + i * g
        prev_h = o * jnp.tanh(prev_c)
        hs.append(prev_h)
    return jnp.stack(hs, axis=1)


if __name__ == "__main__":
    N, T, D, H, P = 2, 8, 16, 32, 10   # P=10 spatial side to match N_P=10

    key = jax.random.PRNGKey(0)
    kx, kA, kWx, kWh, kWa = jax.random.split(key, 5)

    # inputs
    x = jax.random.normal(kx, (N, T, D), dtype=jnp.float32)
    A = jax.random.normal(kA, (N, H, P, P), dtype=jnp.float32)

    # deterministic parameter init (matches torch.randn(...).div(sqrt(fan_in)))
    Wx = jax.random.normal(kWx, (D, 4 * H), dtype=jnp.float32) / math.sqrt(D)
    Wh = jax.random.normal(kWh, (H, 4 * H), dtype=jnp.float32) / math.sqrt(H)
    Wattn = jax.random.normal(kWa, (H, 4 * H), dtype=jnp.float32) / math.sqrt(H)
    b = jnp.zeros((4 * H,), dtype=jnp.float32)

    h = attention_lstm_forward(x, A, Wx, Wh, Wattn, b)
    h = jax.block_until_ready(h)

    h_ref = _reference(x, A, Wx, Wh, Wattn, b)
    assert h.shape == (N, T, H)
    # slightly looser tol: softmax denominator uses the approximate EUP reciprocal
    assert jnp.allclose(h, h_ref, atol=2e-3, rtol=2e-3), "mismatch vs reference"

    print("KERNEL_OK")
</pallas_src>

<mosaic_0001>
module attributes {stable_mosaic.version = 11 : i64} {
  func.func @kernel(%arg0: memref<8x2x16xf32, #tpu.memory_space<vmem>>, %arg1: memref<2x32x100xf32, #tpu.memory_space<vmem>>, %arg2: memref<2x100x32xf32, #tpu.memory_space<vmem>>, %arg3: memref<80x128xf32, #tpu.memory_space<vmem>>, %arg4: memref<1x128xf32, #tpu.memory_space<vmem>>, %arg5: memref<8x2x32xf32, #tpu.memory_space<vmem>>) attributes {dimension_semantics = [], scalar_prefetch = 0 : i64, scratch_operands = 0 : i64, tpu.core_type = #tpu.core_type<tc>} {
    %c0 = arith.constant 0 : index
    %c0_0 = arith.constant 0 : index
    %c0_1 = arith.constant 0 : index
    %0 = vector.load %arg1[%c0, %c0_0, %c0_1] : memref<2x32x100xf32, #tpu.memory_space<vmem>>, vector<2x32x100xf32>
    %c0_2 = arith.constant 0 : index
    %c0_3 = arith.constant 0 : index
    %c0_4 = arith.constant 0 : index
    %1 = vector.load %arg2[%c0_2, %c0_3, %c0_4] : memref<2x100x32xf32, #tpu.memory_space<vmem>>, vector<2x100x32xf32>
    %c0_5 = arith.constant 0 : index
    %c0_6 = arith.constant 0 : index
    %2 = vector.load %arg3[%c0_5, %c0_6] : memref<80x128xf32, #tpu.memory_space<vmem>>, vector<80x128xf32>
    %c0_7 = arith.constant 0 : index
    %c0_8 = arith.constant 0 : index
    %3 = vector.load %arg4[%c0_7, %c0_8] : memref<1x128xf32, #tpu.memory_space<vmem>>, vector<1x128xf32>
    %cst = arith.constant dense<0.000000e+00> : vector<2x32xf32>
    %4 = vector.multi_reduction <add>, %0, %cst [2] : vector<2x32x100xf32> to vector<2x32xf32>
    %cst_9 = arith.constant 1.000000e+02 : f32
    %5 = vector.broadcast %cst_9 : f32 to vector<2x32xf32>
    %6 = arith.divf %4, %5 : vector<2x32xf32>
    %c0_i32 = arith.constant 0 : i32
    %7 = vector.extract_strided_slice %6 {offsets = [0, 0], sizes = [1, 32], strides = [1, 1]} : vector<2x32xf32> to vector<1x32xf32>
    %8 = vector.extract_strided_slice %0 {offsets = [0, 0, 0], sizes = [1, 32, 100], strides = [1, 1, 1]} : vector<2x32x100xf32> to vector<1x32x100xf32>
    %9 = vector.shape_cast %8 : vector<1x32x100xf32> to vector<32x100xf32>
    %cst_10 = arith.constant dense<0.000000e+00> : vector<1x100xf32>
    %10 = tpu.matmul %7, %9, %cst_10 {dimension_numbers = #tpu.dot_dimension_numbers<[1], [0], [0], [1], [0, 0, 1, 1], [], []>} : vector<1x32xf32>, vector<32x100xf32>, vector<1x100xf32> -> vector<1x100xf32>
    %11 = vector.extract_strided_slice %6 {offsets = [1, 0], sizes = [1, 32], strides = [1, 1]} : vector<2x32xf32> to vector<1x32xf32>
    %12 = vector.extract_strided_slice %0 {offsets = [1, 0, 0], sizes = [1, 32, 100], strides = [1, 1, 1]} : vector<2x32x100xf32> to vector<1x32x100xf32>
    %13 = vector.shape_cast %12 : vector<1x32x100xf32> to vector<32x100xf32>
    %cst_11 = arith.constant dense<0.000000e+00> : vector<1x100xf32>
    %14 = tpu.matmul %11, %13, %cst_11 {dimension_numbers = #tpu.dot_dimension_numbers<[1], [0], [0], [1], [0, 0, 1, 1], [], []>} : vector<1x32xf32>, vector<32x100xf32>, vector<1x100xf32> -> vector<1x100xf32>
    %15 = tpu.concatenate %10, %14 in 0 : vector<1x100xf32>, vector<1x100xf32> -> vector<2x100xf32>
    %cst_12 = arith.constant 0.176776692 : f32
    %16 = vector.broadcast %cst_12 : f32 to vector<2x100xf32>
    %17 = arith.mulf %15, %16 : vector<2x100xf32>
    %cst_13 = arith.constant dense<0xFF800000> : vector<2xf32>
    %18 = vector.multi_reduction <maximumf>, %17, %cst_13 [1] : vector<2x100xf32> to vector<2xf32>
    %19 = vector.shape_cast %18 : vector<2xf32> to vector<2x1xf32>
    %20 = vector.broadcast %19 : vector<2x1xf32> to vector<2x100xf32>
    %21 = arith.subf %17, %20 : vector<2x100xf32>
    %22 = math.exp %21 : vector<2x100xf32>
    %cst_14 = arith.constant dense<0.000000e+00> : vector<2xf32>
    %23 = vector.multi_reduction <add>, %22, %cst_14 [1] : vector<2x100xf32> to vector<2xf32>
    %24 = vector.shape_cast %23 : vector<2xf32> to vector<2x1xf32>
    %25 = tpu.reciprocal %24 {approx = true} : vector<2x1xf32> -> vector<2x1xf32>
    %26 = vector.broadcast %25 : vector<2x1xf32> to vector<2x100xf32>
    %27 = arith.mulf %22, %26 : vector<2x100xf32>
    %28 = vector.extract_strided_slice %27 {offsets = [0, 0], sizes = [1, 100], strides = [1, 1]} : vector<2x100xf32> to vector<1x100xf32>
    %29 = vector.extract_strided_slice %1 {offsets = [0, 0, 0], sizes = [1, 100, 32], strides = [1, 1, 1]} : vector<2x100x32xf32> to vector<1x100x32xf32>
    %30 = vector.shape_cast %29 : vector<1x100x32xf32> to vector<100x32xf32>
    %cst_15 = arith.constant dense<0.000000e+00> : vector<1x32xf32>
    %31 = tpu.matmul %28, %30, %cst_15 {dimension_numbers = #tpu.dot_dimension_numbers<[1], [0], [0], [1], [0, 0, 1, 1], [], []>} : vector<1x100xf32>, vector<100x32xf32>, vector<1x32xf32> -> vector<1x32xf32>
    %32 = vector.extract_strided_slice %27 {offsets = [1, 0], sizes = [1, 100], strides = [1, 1]} : vector<2x100xf32> to vector<1x100xf32>
    %33 = vector.extract_strided_slice %1 {offsets = [1, 0, 0], sizes = [1, 100, 32], strides = [1, 1, 1]} : vector<2x100x32xf32> to vector<1x100x32xf32>
    %34 = vector.shape_cast %33 : vector<1x100x32xf32> to vector<100x32xf32>
    %cst_16 = arith.constant dense<0.000000e+00> : vector<1x32xf32>
    %35 = tpu.matmul %32, %34, %cst_16 {dimension_numbers = #tpu.dot_dimension_numbers<[1], [0], [0], [1], [0, 0, 1, 1], [], []>} : vector<1x100xf32>, vector<100x32xf32>, vector<1x32xf32> -> vector<1x32xf32>
    %36 = tpu.concatenate %31, %35 in 0 : vector<1x32xf32>, vector<1x32xf32> -> vector<2x32xf32>
    %37 = arith.index_cast %c0_i32 : i32 to index
    %c0_17 = arith.constant 0 : index
    %c0_18 = arith.constant 0 : index
    %38 = vector.load %arg0[%37, %c0_17, %c0_18] : memref<8x2x16xf32, #tpu.memory_space<vmem>>, vector<1x2x16xf32>
    %39 = vector.shape_cast %38 : vector<1x2x16xf32> to vector<2x16xf32>
    %40 = tpu.concatenate %39, %6, %36 in 1 : vector<2x16xf32>, vector<2x32xf32>, vector<2x32xf32> -> vector<2x80xf32>
    %cst_19 = arith.constant dense<0.000000e+00> : vector<2x128xf32>
    %41 = tpu.matmul %40, %2, %cst_19 {dimension_numbers = #tpu.dot_dimension_numbers<[1], [0], [0], [1], [0, 0, 1, 1], [], []>} : vector<2x80xf32>, vector<80x128xf32>, vector<2x128xf32> -> vector<2x128xf32>
    %42 = vector.broadcast %3 : vector<1x128xf32> to vector<2x128xf32>
    %43 = arith.addf %41, %42 : vector<2x128xf32>
    %44 = vector.extract_strided_slice %43 {offsets = [0, 0], sizes = [2, 96], strides = [1, 1]} : vector<2x128xf32> to vector<2x96xf32>
    %45 = arith.negf %44 : vector<2x96xf32>
    %46 = math.exp %45 : vector<2x96xf32>
    %cst_20 = arith.constant 1.000000e+00 : f32
    %47 = vector.broadcast %cst_20 : f32 to vector<2x96xf32>
    %48 = arith.addf %47, %46 : vector<2x96xf32>
    %49 = arith.divf %47, %48 : vector<2x96xf32>
    %50 = vector.extract_strided_slice %43 {offsets = [0, 96], sizes = [2, 32], strides = [1, 1]} : vector<2x128xf32> to vector<2x32xf32>
    %51 = math.tanh %50 : vector<2x32xf32>
    %52 = vector.extract_strided_slice %49 {offsets = [0, 0], sizes = [2, 32], strides = [1, 1]} : vector<2x96xf32> to vector<2x32xf32>
    %53 = vector.extract_strided_slice %49 {offsets = [0, 32], sizes = [2, 32], strides = [1, 1]} : vector<2x96xf32> to vector<2x32xf32>
    %54 = vector.extract_strided_slice %49 {offsets = [0, 64], sizes = [2, 32], strides = [1, 1]} : vector<2x96xf32> to vector<2x32xf32>
    %55 = arith.mulf %53, %6 : vector<2x32xf32>
    %56 = arith.mulf %52, %51 : vector<2x32xf32>
    %57 = arith.addf %55, %56 : vector<2x32xf32>
    %58 = math.tanh %57 : vector<2x32xf32>
    %59 = arith.mulf %54, %58 : vector<2x32xf32>
    %60 = arith.index_cast %c0_i32 : i32 to index
    %c0_21 = arith.constant 0 : index
    %c0_22 = arith.constant 0 : index
    %61 = vector.load %arg5[%60, %c0_21, %c0_22] : memref<8x2x32xf32, #tpu.memory_space<vmem>>, vector<1x2x32xf32>
    %62 = vector.shape_cast %61 : vector<1x2x32xf32> to vector<2x32xf32>
    %63 = vector.shape_cast %59 : vector<2x32xf32> to vector<1x2x32xf32>
    tpu.vector_store %arg5[%60, %c0_21, %c0_22], %63 {strides = array<i32>} : memref<8x2x32xf32, #tpu.memory_space<vmem>>, vector<1x2x32xf32>,
    %c1_i32 = arith.constant 1 : i32
    %64 = vector.extract_strided_slice %59 {offsets = [0, 0], sizes = [1, 32], strides = [1, 1]} : vector<2x32xf32> to vector<1x32xf32>
    %65 = vector.extract_strided_slice %0 {offsets = [0, 0, 0], sizes = [1, 32, 100], strides = [1, 1, 1]} : vector<2x32x100xf32> to vector<1x32x100xf32>
    %66 = vector.shape_cast %65 : vector<1x32x100xf32> to vector<32x100xf32>
    %cst_23 = arith.constant dense<0.000000e+00> : vector<1x100xf32>
    %67 = tpu.matmul %64, %66, %cst_23 {dimension_numbers = #tpu.dot_dimension_numbers<[1], [0], [0], [1], [0, 0, 1, 1], [], []>} : vector<1x32xf32>, vector<32x100xf32>, vector<1x100xf32> -> vector<1x100xf32>
    %68 = vector.extract_strided_slice %59 {offsets = [1, 0], sizes = [1, 32], strides = [1, 1]} : vector<2x32xf32> to vector<1x32xf32>
    %69 = vector.extract_strided_slice %0 {offsets = [1, 0, 0], sizes = [1, 32, 100], strides = [1, 1, 1]} : vector<2x32x100xf32> to vector<1x32x100xf32>
    %70 = vector.shape_cast %69 : vector<1x32x100xf32> to vector<32x100xf32>
    %cst_24 = arith.constant dense<0.000000e+00> : vector<1x100xf32>
    %71 = tpu.matmul %68, %70, %cst_24 {dimension_numbers = #tpu.dot_dimension_numbers<[1], [0], [0], [1], [0, 0, 1, 1], [], []>} : vector<1x32xf32>, vector<32x100xf32>, vector<1x100xf32> -> vector<1x100xf32>
    %72 = tpu.concatenate %67, %71 in 0 : vector<1x100xf32>, vector<1x100xf32> -> vector<2x100xf32>
    %cst_25 = arith.constant 0.176776692 : f32
    %73 = vector.broadcast %cst_25 : f32 to vector<2x100xf32>
    %74 = arith.mulf %72, %73 : vector<2x100xf32>
    %cst_26 = arith.constant dense<0xFF800000> : vector<2xf32>
    %75 = vector.multi_reduction <maximumf>, %74, %cst_26 [1] : vector<2x100xf32> to vector<2xf32>
    %76 = vector.shape_cast %75 : vector<2xf32> to vector<2x1xf32>
    %77 = vector.broadcast %76 : vector<2x1xf32> to vector<2x100xf32>
    %78 = arith.subf %74, %77 : vector<2x100xf32>
    %79 = math.exp %78 : vector<2x100xf32>
    %cst_27 = arith.constant dense<0.000000e+00> : vector<2xf32>
    %80 = vector.multi_reduction <add>, %79, %cst_27 [1] : vector<2x100xf32> to vector<2xf32>
    %81 = vector.shape_cast %80 : vector<2xf32> to vector<2x1xf32>
    %82 = tpu.reciprocal %81 {approx = true} : vector<2x1xf32> -> vector<2x1xf32>
    %83 = vector.broadcast %82 : vector<2x1xf32> to vector<2x100xf32>
    %84 = arith.mulf %79, %83 : vector<2x100xf32>
    %85 = vector.extract_strided_slice %84 {offsets = [0, 0], sizes = [1, 100], strides = [1, 1]} : vector<2x100xf32> to vector<1x100xf32>
    %86 = vector.extract_strided_slice %1 {offsets = [0, 0, 0], sizes = [1, 100, 32], strides = [1, 1, 1]} : vector<2x100x32xf32> to vector<1x100x32xf32>
    %87 = vector.shape_cast %86 : vector<1x100x32xf32> to vector<100x32xf32>
    %cst_28 = arith.constant dense<0.000000e+00> : vector<1x32xf32>
    %88 = tpu.matmul %85, %87, %cst_28 {dimension_numbers = #tpu.dot_dimension_numbers<[1], [0], [0], [1], [0, 0, 1, 1], [], []>} : vector<1x100xf32>, vector<100x32xf32>, vector<1x32xf32> -> vector<1x32xf32>
    %89 = vector.extract_strided_slice %84 {offsets = [1, 0], sizes = [1, 100], strides = [1, 1]} : vector<2x100xf32> to vector<1x100xf32>
    %90 = vector.extract_strided_slice %1 {offsets = [1, 0, 0], sizes = [1, 100, 32], strides = [1, 1, 1]} : vector<2x100x32xf32> to vector<1x100x32xf32>
    %91 = vector.shape_cast %90 : vector<1x100x32xf32> to vector<100x32xf32>
    %cst_29 = arith.constant dense<0.000000e+00> : vector<1x32xf32>
    %92 = tpu.matmul %89, %91, %cst_29 {dimension_numbers = #tpu.dot_dimension_numbers<[1], [0], [0], [1], [0, 0, 1, 1], [], []>} : vector<1x100xf32>, vector<100x32xf32>, vector<1x32xf32> -> vector<1x32xf32>
    %93 = tpu.concatenate %88, %92 in 0 : vector<1x32xf32>, vector<1x32xf32> -> vector<2x32xf32>
    %94 = arith.index_cast %c1_i32 : i32 to index
    %c0_30 = arith.constant 0 : index
    %c0_31 = arith.constant 0 : index
    %95 = vector.load %arg0[%94, %c0_30, %c0_31] : memref<8x2x16xf32, #tpu.memory_space<vmem>>, vector<1x2x16xf32>
    %96 = vector.shape_cast %95 : vector<1x2x16xf32> to vector<2x16xf32>
    %97 = tpu.concatenate %96, %59, %93 in 1 : vector<2x16xf32>, vector<2x32xf32>, vector<2x32xf32> -> vector<2x80xf32>
    %cst_32 = arith.constant dense<0.000000e+00> : vector<2x128xf32>
    %98 = tpu.matmul %97, %2, %cst_32 {dimension_numbers = #tpu.dot_dimension_numbers<[1], [0], [0], [1], [0, 0, 1, 1], [], []>} : vector<2x80xf32>, vector<80x128xf32>, vector<2x128xf32> -> vector<2x128xf32>
    %99 = vector.broadcast %3 : vector<1x128xf32> to vector<2x128xf32>
    %100 = arith.addf %98, %99 : vector<2x128xf32>
    %101 = vector.extract_strided_slice %100 {offsets = [0, 0], sizes = [2, 96], strides = [1, 1]} : vector<2x128xf32> to vector<2x96xf32>
    %102 = arith.negf %101 : vector<2x96xf32>
    %103 = math.exp %102 : vector<2x96xf32>
    %cst_33 = arith.constant 1.000000e+00 : f32
    %104 = vector.broadcast %cst_33 : f32 to vector<2x96xf32>
    %105 = arith.addf %104, %103 : vector<2x96xf32>
    %106 = arith.divf %104, %105 : vector<2x96xf32>
    %107 = vector.extract_strided_slice %100 {offsets = [0, 96], sizes = [2, 32], strides = [1, 1]} : vector<2x128xf32> to vector<2x32xf32>
    %108 = math.tanh %107 : vector<2x32xf32>
    %109 = vector.extract_strided_slice %106 {offsets = [0, 0], sizes = [2, 32], strides = [1, 1]} : vector<2x96xf32> to vector<2x32xf32>
    %110 = vector.extract_strided_slice %106 {offsets = [0, 32], sizes = [2, 32], strides = [1, 1]} : vector<2x96xf32> to vector<2x32xf32>
    %111 = vector.extract_strided_slice %106 {offsets = [0, 64], sizes = [2, 32], strides = [1, 1]} : vector<2x96xf32> to vector<2x32xf32>
    %112 = arith.mulf %110, %57 : vector<2x32xf32>
    %113 = arith.mulf %109, %108 : vector<2x32xf32>
    %114 = arith.addf %112, %113 : vector<2x32xf32>
    %115 = math.tanh %114 : vector<2x32xf32>
    %116 = arith.mulf %111, %115 : vector<2x32xf32>
    %117 = arith.index_cast %c1_i32 : i32 to index
    %c0_34 = arith.constant 0 : index
    %c0_35 = arith.constant 0 : index
    %118 = vector.load %arg5[%117, %c0_34, %c0_35] : memref<8x2x32xf32, #tpu.memory_space<vmem>>, vector<1x2x32xf32>
    %119 = vector.shape_cast %118 : vector<1x2x32xf32> to vector<2x32xf32>
    %120 = vector.shape_cast %116 : vector<2x32xf32> to vector<1x2x32xf32>
    tpu.vector_store %arg5[%117, %c0_34, %c0_35], %120 {strides = array<i32>} : memref<8x2x32xf32, #tpu.memory_space<vmem>>, vector<1x2x32xf32>,
    %c2_i32 = arith.constant 2 : i32
    %121 = vector.extract_strided_slice %116 {offsets = [0, 0], sizes = [1, 32], strides = [1, 1]} : vector<2x32xf32> to vector<1x32xf32>
    %122 = vector.extract_strided_slice %0 {offsets = [0, 0, 0], sizes = [1, 32, 100], strides = [1, 1, 1]} : vector<2x32x100xf32> to vector<1x32x100xf32>
    %123 = vector.shape_cast %122 : vector<1x32x100xf32> to vector<32x100xf32>
    %cst_36 = arith.constant dense<0.000000e+00> : vector<1x100xf32>
    %124 = tpu.matmul %121, %123, %cst_36 {dimension_numbers = #tpu.dot_dimension_numbers<[1], [0], [0], [1], [0, 0, 1, 1], [], []>} : vector<1x32xf32>, vector<32x100xf32>, vector<1x100xf32> -> vector<1x100xf32>
    %125 = vector.extract_strided_slice %116 {offsets = [1, 0], sizes = [1, 32], strides = [1, 1]} : vector<2x32xf32> to vector<1x32xf32>
    %126 = vector.extract_strided_slice %0 {offsets = [1, 0, 0], sizes = [1, 32, 100], strides = [1, 1, 1]} : vector<2x32x100xf32> to vector<1x32x100xf32>
    %127 = vector.shape_cast %126 : vector<1x32x100xf32> to vector<32x100xf32>
    %cst_37 = arith.constant dense<0.000000e+00> : vector<1x100xf32>
    %128 = tpu.matmul %125, %127, %cst_37 {dimension_numbers = #tpu.dot_dimension_numbers<[1], [0], [0], [1], [0, 0, 1, 1], [], []>} : vector<1x32xf32>, vector<32x100xf32>, vector<1x100xf32> -> vector<1x100xf32>
    %129 = tpu.concatenate %124, %128 in 0 : vector<1x100xf32>, vector<1x100xf32> -> vector<2x100xf32>
    %cst_38 = arith.constant 0.176776692 : f32
    %130 = vector.broadcast %cst_38 : f32 to vector<2x100xf32>
    %131 = arith.mulf %129, %130 : vector<2x100xf32>
    %cst_39 = arith.constant dense<0xFF800000> : vector<2xf32>
    %132 = vector.multi_reduction <maximumf>, %131, %cst_39 [1] : vector<2x100xf32> to vector<2xf32>
    %133 = vector.shape_cast %132 : vector<2xf32> to vector<2x1xf32>
    %134 = vector.broadcast %133 : vector<2x1xf32> to vector<2x100xf32>
    %135 = arith.subf %131, %134 : vector<2x100xf32>
    %136 = math.exp %135 : vector<2x100xf32>
    %cst_40 = arith.constant dense<0.000000e+00> : vector<2xf32>
    %137 = vector.multi_reduction <add>, %136, %cst_40 [1] : vector<2x100xf32> to vector<2xf32>
    %138 = vector.shape_cast %137 : vector<2xf32> to vector<2x1xf32>
    %139 = tpu.reciprocal %138 {approx = true} : vector<2x1xf32> -> vector<2x1xf32>
    %140 = vector.broadcast %139 : vector<2x1xf32> to vector<2x100xf32>
    %141 = arith.mulf %136, %140 : vector<2x100xf32>
    %142 = vector.extract_strided_slice %141 {offsets = [0, 0], sizes = [1, 100], strides = [1, 1]} : vector<2x100xf32> to vector<1x100xf32>
    %143 = vector.extract_strided_slice %1 {offsets = [0, 0, 0], sizes = [1, 100, 32], strides = [1, 1, 1]} : vector<2x100x32xf32> to vector<1x100x32xf32>
    %144 = vector.shape_cast %143 : vector<1x100x32xf32> to vector<100x32xf32>
    %cst_41 = arith.constant dense<0.000000e+00> : vector<1x32xf32>
    %145 = tpu.matmul %142, %144, %cst_41 {dimension_numbers = #tpu.dot_dimension_numbers<[1], [0], [0], [1], [0, 0, 1, 1], [], []>} : vector<1x100xf32>, vector<100x32xf32>, vector<1x32xf32> -> vector<1x32xf32>
    %146 = vector.extract_strided_slice %141 {offsets = [1, 0], sizes = [1, 100], strides = [1, 1]} : vector<2x100xf32> to vector<1x100xf32>
    %147 = vector.extract_strided_slice %1 {offsets = [1, 0, 0], sizes = [1, 100, 32], strides = [1, 1, 1]} : vector<2x100x32xf32> to vector<1x100x32xf32>
    %148 = vector.shape_cast %147 : vector<1x100x32xf32> to vector<100x32xf32>
    %cst_42 = arith.constant dense<0.000000e+00> : vector<1x32xf32>
    %149 = tpu.matmul %146, %148, %cst_42 {dimension_numbers = #tpu.dot_dimension_numbers<[1], [0], [0], [1], [0, 0, 1, 1], [], []>} : vector<1x100xf32>, vector<100x32xf32>, vector<1x32xf32> -> vector<1x32xf32>
    %150 = tpu.concatenate %145, %149 in 0 : vector<1x32xf32>, vector<1x32xf32> -> vector<2x32xf32>
    %151 = arith.index_cast %c2_i32 : i32 to index
    %c0_43 = arith.constant 0 : index
    %c0_44 = arith.constant 0 : index
    %152 = vector.load %arg0[%151, %c0_43, %c0_44] : memref<8x2x16xf32, #tpu.memory_space<vmem>>, vector<1x2x16xf32>
    %153 = vector.shape_cast %152 : vector<1x2x16xf32> to vector<2x16xf32>
    %154 = tpu.concatenate %153, %116, %150 in 1 : vector<2x16xf32>, vector<2x32xf32>, vector<2x32xf32> -> vector<2x80xf32>
    %cst_45 = arith.constant dense<0.000000e+00> : vector<2x128xf32>
    %155 = tpu.matmul %154, %2, %cst_45 {dimension_numbers = #tpu.dot_dimension_numbers<[1], [0], [0], [1], [0, 0, 1, 1], [], []>} : vector<2x80xf32>, vector<80x128xf32>, vector<2x128xf32> -> vector<2x128xf32>
    %156 = vector.broadcast %3 : vector<1x128xf32> to vector<2x128xf32>
    %157 = arith.addf %155, %156 : vector<2x128xf32>
    %158 = vector.extract_strided_slice %157 {offsets = [0, 0], sizes = [2, 96], strides = [1, 1]} : vector<2x128xf32> to vector<2x96xf32>
    %159 = arith.negf %158 : vector<2x96xf32>
    %160 = math.exp %159 : vector<2x96xf32>
    %cst_46 = arith.constant 1.000000e+00 : f32
    %161 = vector.broadcast %cst_46 : f32 to vector<2x96xf32>
    %162 = arith.addf %161, %160 : vector<2x96xf32>
    %163 = arith.divf %161, %162 : vector<2x96xf32>
    %164 = vector.extract_strided_slice %157 {offsets = [0, 96], sizes = [2, 32], strides = [1, 1]} : vector<2x128xf32> to vector<2x32xf32>
    %165 = math.tanh %164 : vector<2x32xf32>
    %166 = vector.extract_strided_slice %163 {offsets = [0, 0], sizes = [2, 32], strides = [1, 1]} : vector<2x96xf32> to vector<2x32xf32>
    %167 = vector.extract_strided_slice %163 {offsets = [0, 32], sizes = [2, 32], strides = [1, 1]} : vector<2x96xf32> to vector<2x32xf32>
    %168 = vector.extract_strided_slice %163 {offsets = [0, 64], sizes = [2, 32], strides = [1, 1]} : vector<2x96xf32> to vector<2x32xf32>
    %169 = arith.mulf %167, %114 : vector<2x32xf32>
    %170 = arith.mulf %166, %165 : vector<2x32xf32>
    %171 = arith.addf %169, %170 : vector<2x32xf32>
    %172 = math.tanh %171 : vector<2x32xf32>
    %173 = arith.mulf %168, %172 : vector<2x32xf32>
    %174 = arith.index_cast %c2_i32 : i32 to index
    %c0_47 = arith.constant 0 : index
    %c0_48 = arith.constant 0 : index
    %175 = vector.load %arg5[%174, %c0_47, %c0_48] : memref<8x2x32xf32, #tpu.memory_space<vmem>>, vector<1x2x32xf32>
    %176 = vector.shape_cast %175 : vector<1x2x32xf32> to vector<2x32xf32>
    %177 = vector.shape_cast %173 : vector<2x32xf32> to vector<1x2x32xf32>
    tpu.vector_store %arg5[%174, %c0_47, %c0_48], %177 {strides = array<i32>} : memref<8x2x32xf32, #tpu.memory_space<vmem>>, vector<1x2x32xf32>,
    %c3_i32 = arith.constant 3 : i32
    %178 = vector.extract_strided_slice %173 {offsets = [0, 0], sizes = [1, 32], strides = [1, 1]} : vector<2x32xf32> to vector<1x32xf32>
    %179 = vector.extract_strided_slice %0 {offsets = [0, 0, 0], sizes = [1, 32, 100], strides = [1, 1, 1]} : vector<2x32x100xf32> to vector<1x32x100xf32>
    %180 = vector.shape_cast %179 : vector<1x32x100xf32> to vector<32x100xf32>
    %cst_49 = arith.constant dense<0.000000e+00> : vector<1x100xf32>
    %181 = tpu.matmul %178, %180, %cst_49 {dimension_numbers = #tpu.dot_dimension_numbers<[1], [0], [0], [1], [0, 0, 1, 1], [], []>} : vector<1x32xf32>, vector<32x100xf32>, vector<1x100xf32> -> vector<1x100xf32>
    %182 = vector.extract_strided_slice %173 {offsets = [1, 0], sizes = [1, 32], strides = [1, 1]} : vector<2x32xf32> to vector<1x32xf32>
    %183 = vector.extract_strided_slice %0 {offsets = [1, 0, 0], sizes = [1, 32, 100], strides = [1, 1, 1]} : vector<2x32x100xf32> to vector<1x32x100xf32>
    %184 = vector.shape_cast %183 : vector<1x32x100xf32> to vector<32x100xf32>
    %cst_50 = arith.constant dense<0.000000e+00> : vector<1x100xf32>
    %185 = tpu.matmul %182, %184, %cst_50 {dimension_numbers = #tpu.dot_dimension_numbers<[1], [0], [0], [1], [0, 0, 1, 1], [], []>} : vector<1x32xf32>, vector<32x100xf32>, vector<1x100xf32> -> vector<1x100xf32>
    %186 = tpu.concatenate %181, %185 in 0 : vector<1x100xf32>, vector<1x100xf32> -> vector<2x100xf32>
    %cst_51 = arith.constant 0.176776692 : f32
    %187 = vector.broadcast %cst_51 : f32 to vector<2x100xf32>
    %188 = arith.mulf %186, %187 : vector<2x100xf32>
    %cst_52 = arith.constant dense<0xFF800000> : vector<2xf32>
    %189 = vector.multi_reduction <maximumf>, %188, %cst_52 [1] : vector<2x100xf32> to vector<2xf32>
    %190 = vector.shape_cast %189 : vector<2xf32> to vector<2x1xf32>
    %191 = vector.broadcast %190 : vector<2x1xf32> to vector<2x100xf32>
    %192 = arith.subf %188, %191 : vector<2x100xf32>
    %193 = math.exp %192 : vector<2x100xf32>
    %cst_53 = arith.constant dense<0.000000e+00> : vector<2xf32>
    %194 = vector.multi_reduction <add>, %193, %cst_53 [1] : vector<2x100xf32> to vector<2xf32>
    %195 = vector.shape_cast %194 : vector<2xf32> to vector<2x1xf32>
    %196 = tpu.reciprocal %195 {approx = true} : vector<2x1xf32> -> vector<2x1xf32>
    %197 = vector.broadcast %196 : vector<2x1xf32> to vector<2x100xf32>
    %198 = arith.mulf %193, %197 : vector<2x100xf32>
    %199 = vector.extract_strided_slice %198 {offsets = [0, 0], sizes = [1, 100], strides = [1, 1]} : vector<2x100xf32> to vector<1x100xf32>
    %200 = vector.extract_strided_slice %1 {offsets = [0, 0, 0], sizes = [1, 100, 32], strides = [1, 1, 1]} : vector<2x100x32xf32> to vector<1x100x32xf32>
    %201 = vector.shape_cast %200 : vector<1x100x32xf32> to vector<100x32xf32>
    %cst_54 = arith.constant dense<0.000000e+00> : vector<1x32xf32>
    %202 = tpu.matmul %199, %201, %cst_54 {dimension_numbers = #tpu.dot_dimension_numbers<[1], [0], [0], [1], [0, 0, 1, 1], [], []>} : vector<1x100xf32>, vector<100x32xf32>, vector<1x32xf32> -> vector<1x32xf32>
    %203 = vector.extract_strided_slice %198 {offsets = [1, 0], sizes = [1, 100], strides = [1, 1]} : vector<2x100xf32> to vector<1x100xf32>
    %204 = vector.extract_strided_slice %1 {offsets = [1, 0, 0], sizes = [1, 100, 32], strides = [1, 1, 1]} : vector<2x100x32xf32> to vector<1x100x32xf32>
    %205 = vector.shape_cast %204 : vector<1x100x32xf32> to vector<100x32xf32>
    %cst_55 = arith.constant dense<0.000000e+00> : vector<1x32xf32>
    %206 = tpu.matmul %203, %205, %cst_55 {dimension_numbers = #tpu.dot_dimension_numbers<[1], [0], [0], [1], [0, 0, 1, 1], [], []>} : vector<1x100xf32>, vector<100x32xf32>, vector<1x32xf32> -> vector<1x32xf32>
    %207 = tpu.concatenate %202, %206 in 0 : vector<1x32xf32>, vector<1x32xf32> -> vector<2x32xf32>
    %208 = arith.index_cast %c3_i32 : i32 to index
    %c0_56 = arith.constant 0 : index
    %c0_57 = arith.constant 0 : index
    %209 = vector.load %arg0[%208, %c0_56, %c0_57] : memref<8x2x16xf32, #tpu.memory_space<vmem>>, vector<1x2x16xf32>
    %210 = vector.shape_cast %209 : vector<1x2x16xf32> to vector<2x16xf32>
    %211 = tpu.concatenate %210, %173, %207 in 1 : vector<2x16xf32>, vector<2x32xf32>, vector<2x32xf32> -> vector<2x80xf32>
    %cst_58 = arith.constant dense<0.000000e+00> : vector<2x128xf32>
    %212 = tpu.matmul %211, %2, %cst_58 {dimension_numbers = #tpu.dot_dimension_numbers<[1], [0], [0], [1], [0, 0, 1, 1], [], []>} : vector<2x80xf32>, vector<80x128xf32>, vector<2x128xf32> -> vector<2x128xf32>
    %213 = vector.broadcast %3 : vector<1x128xf32> to vector<2x128xf32>
    %214 = arith.addf %212, %213 : vector<2x128xf32>
    %215 = vector.extract_strided_slice %214 {offsets = [0, 0], sizes = [2, 96], strides = [1, 1]} : vector<2x128xf32> to vector<2x96xf32>
    %216 = arith.negf %215 : vector<2x96xf32>
    %217 = math.exp %216 : vector<2x96xf32>
    %cst_59 = arith.constant 1.000000e+00 : f32
    %218 = vector.broadcast %cst_59 : f32 to vector<2x96xf32>
    %219 = arith.addf %218, %217 : vector<2x96xf32>
    %220 = arith.divf %218, %219 : vector<2x96xf32>
    %221 = vector.extract_strided_slice %214 {offsets = [0, 96], sizes = [2, 32], strides = [1, 1]} : vector<2x128xf32> to vector<2x32xf32>
    %222 = math.tanh %221 : vector<2x32xf32>
    %223 = vector.extract_strided_slice %220 {offsets = [0, 0], sizes = [2, 32], strides = [1, 1]} : vector<2x96xf32> to vector<2x32xf32>
    %224 = vector.extract_strided_slice %220 {offsets = [0, 32], sizes = [2, 32], strides = [1, 1]} : vector<2x96xf32> to vector<2x32xf32>
    %225 = vector.extract_strided_slice %220 {offsets = [0, 64], sizes = [2, 32], strides = [1, 1]} : vector<2x96xf32> to vector<2x32xf32>
    %226 = arith.mulf %224, %171 : vector<2x32xf32>
    %227 = arith.mulf %223, %222 : vector<2x32xf32>
    %228 = arith.addf %226, %227 : vector<2x32xf32>
    %229 = math.tanh %228 : vector<2x32xf32>
    %230 = arith.mulf %225, %229 : vector<2x32xf32>
    %231 = arith.index_cast %c3_i32 : i32 to index
    %c0_60 = arith.constant 0 : index
    %c0_61 = arith.constant 0 : index
    %232 = vector.load %arg5[%231, %c0_60, %c0_61] : memref<8x2x32xf32, #tpu.memory_space<vmem>>, vector<1x2x32xf32>
    %233 = vector.shape_cast %232 : vector<1x2x32xf32> to vector<2x32xf32>
    %234 = vector.shape_cast %230 : vector<2x32xf32> to vector<1x2x32xf32>
    tpu.vector_store %arg5[%231, %c0_60, %c0_61], %234 {strides = array<i32>} : memref<8x2x32xf32, #tpu.memory_space<vmem>>, vector<1x2x32xf32>,
    %c4_i32 = arith.constant 4 : i32
    %235 = vector.extract_strided_slice %230 {offsets = [0, 0], sizes = [1, 32], strides = [1, 1]} : vector<2x32xf32> to vector<1x32xf32>
    %236 = vector.extract_strided_slice %0 {offsets = [0, 0, 0], sizes = [1, 32, 100], strides = [1, 1, 1]} : vector<2x32x100xf32> to vector<1x32x100xf32>
    %237 = vector.shape_cast %236 : vector<1x32x100xf32> to vector<32x100xf32>
    %cst_62 = arith.constant dense<0.000000e+00> : vector<1x100xf32>
    %238 = tpu.matmul %235, %237, %cst_62 {dimension_numbers = #tpu.dot_dimension_numbers<[1], [0], [0], [1], [0, 0, 1, 1], [], []>} : vector<1x32xf32>, vector<32x100xf32>, vector<1x100xf32> -> vector<1x100xf32>
    %239 = vector.extract_strided_slice %230 {offsets = [1, 0], sizes = [1, 32], strides = [1, 1]} : vector<2x32xf32> to vector<1x32xf32>
    %240 = vector.extract_strided_slice %0 {offsets = [1, 0, 0], sizes = [1, 32, 100], strides = [1, 1, 1]} : vector<2x32x100xf32> to vector<1x32x100xf32>
    %241 = vector.shape_cast %240 : vector<1x32x100xf32> to vector<32x100xf32>
    %cst_63 = arith.constant dense<0.000000e+00> : vector<1x100xf32>
    %242 = tpu.matmul %239, %241, %cst_63 {dimension_numbers = #tpu.dot_dimension_numbers<[1], [0], [0], [1], [0, 0, 1, 1], [], []>} : vector<1x32xf32>, vector<32x100xf32>, vector<1x100xf32> -> vector<1x100xf32>
    %243 = tpu.concatenate %238, %242 in 0 : vector<1x100xf32>, vector<1x100xf32> -> vector<2x100xf32>
    %cst_64 = arith.constant 0.176776692 : f32
    %244 = vector.broadcast %cst_64 : f32 to vector<2x100xf32>
    %245 = arith.mulf %243, %244 : vector<2x100xf32>
    %cst_65 = arith.constant dense<0xFF800000> : vector<2xf32>
    %246 = vector.multi_reduction <maximumf>, %245, %cst_65 [1] : vector<2x100xf32> to vector<2xf32>
    %247 = vector.shape_cast %246 : vector<2xf32> to vector<2x1xf32>
    %248 = vector.broadcast %247 : vector<2x1xf32> to vector<2x100xf32>
    %249 = arith.subf %245, %248 : vector<2x100xf32>
    %250 = math.exp %249 : vector<2x100xf32>
    %cst_66 = arith.constant dense<0.000000e+00> : vector<2xf32>
    %251 = vector.multi_reduction <add>, %250, %cst_66 [1] : vector<2x100xf32> to vector<2xf32>
    %252 = vector.shape_cast %251 : vector<2xf32> to vector<2x1xf32>
    %253 = tpu.reciprocal %252 {approx = true} : vector<2x1xf32> -> vector<2x1xf32>
    %254 = vector.broadcast %253 : vector<2x1xf32> to vector<2x100xf32>
    %255 = arith.mulf %250, %254 : vector<2x100xf32>
    %256 = vector.extract_strided_slice %255 {offsets = [0, 0], sizes = [1, 100], strides = [1, 1]} : vector<2x100xf32> to vector<1x100xf32>
    %257 = vector.extract_strided_slice %1 {offsets = [0, 0, 0], sizes = [1, 100, 32], strides = [1, 1, 1]} : vector<2x100x32xf32> to vector<1x100x32xf32>
    %258 = vector.shape_cast %257 : vector<1x100x32xf32> to vector<100x32xf32>
    %cst_67 = arith.constant dense<0.000000e+00> : vector<1x32xf32>
    %259 = tpu.matmul %256, %258, %cst_67 {dimension_numbers = #tpu.dot_dimension_numbers<[1], [0], [0], [1], [0, 0, 1, 1], [], []>} : vector<1x100xf32>, vector<100x32xf32>, vector<1x32xf32> -> vector<1x32xf32>
    %260 = vector.extract_strided_slice %255 {offsets = [1, 0], sizes = [1, 100], strides = [1, 1]} : vector<2x100xf32> to vector<1x100xf32>
    %261 = vector.extract_strided_slice %1 {offsets = [1, 0, 0], sizes = [1, 100, 32], strides = [1, 1, 1]} : vector<2x100x32xf32> to vector<1x100x32xf32>
    %262 = vector.shape_cast %261 : vector<1x100x32xf32> to vector<100x32xf32>
    %cst_68 = arith.constant dense<0.000000e+00> : vector<1x32xf32>
    %263 = tpu.matmul %260, %262, %cst_68 {dimension_numbers = #tpu.dot_dimension_numbers<[1], [0], [0], [1], [0, 0, 1, 1], [], []>} : vector<1x100xf32>, vector<100x32xf32>, vector<1x32xf32> -> vector<1x32xf32>
    %264 = tpu.concatenate %259, %263 in 0 : vector<1x32xf32>, vector<1x32xf32> -> vector<2x32xf32>
    %265 = arith.index_cast %c4_i32 : i32 to index
    %c0_69 = arith.constant 0 : index
    %c0_70 = arith.constant 0 : index
    %266 = vector.load %arg0[%265, %c0_69, %c0_70] : memref<8x2x16xf32, #tpu.memory_space<vmem>>, vector<1x2x16xf32>
    %267 = vector.shape_cast %266 : vector<1x2x16xf32> to vector<2x16xf32>
    %268 = tpu.concatenate %267, %230, %264 in 1 : vector<2x16xf32>, vector<2x32xf32>, vector<2x32xf32> -> vector<2x80xf32>
    %cst_71 = arith.constant dense<0.000000e+00> : vector<2x128xf32>
    %269 = tpu.matmul %268, %2, %cst_71 {dimension_numbers = #tpu.dot_dimension_numbers<[1], [0], [0], [1], [0, 0, 1, 1], [], []>} : vector<2x80xf32>, vector<80x128xf32>, vector<2x128xf32> -> vector<2x128xf32>
    %270 = vector.broadcast %3 : vector<1x128xf32> to vector<2x128xf32>
    %271 = arith.addf %269, %270 : vector<2x128xf32>
    %272 = vector.extract_strided_slice %271 {offsets = [0, 0], sizes = [2, 96], strides = [1, 1]} : vector<2x128xf32> to vector<2x96xf32>
    %273 = arith.negf %272 : vector<2x96xf32>
    %274 = math.exp %273 : vector<2x96xf32>
    %cst_72 = arith.constant 1.000000e+00 : f32
    %275 = vector.broadcast %cst_72 : f32 to vector<2x96xf32>
    %276 = arith.addf %275, %274 : vector<2x96xf32>
    %277 = arith.divf %275, %276 : vector<2x96xf32>
    %278 = vector.extract_strided_slice %271 {offsets = [0, 96], sizes = [2, 32], strides = [1, 1]} : vector<2x128xf32> to vector<2x32xf32>
    %279 = math.tanh %278 : vector<2x32xf32>
    %280 = vector.extract_strided_slice %277 {offsets = [0, 0], sizes = [2, 32], strides = [1, 1]} : vector<2x96xf32> to vector<2x32xf32>
    %281 = vector.extract_strided_slice %277 {offsets = [0, 32], sizes = [2, 32], strides = [1, 1]} : vector<2x96xf32> to vector<2x32xf32>
    %282 = vector.extract_strided_slice %277 {offsets = [0, 64], sizes = [2, 32], strides = [1, 1]} : vector<2x96xf32> to vector<2x32xf32>
    %283 = arith.mulf %281, %228 : vector<2x32xf32>
    %284 = arith.mulf %280, %279 : vector<2x32xf32>
    %285 = arith.addf %283, %284 : vector<2x32xf32>
    %286 = math.tanh %285 : vector<2x32xf32>
    %287 = arith.mulf %282, %286 : vector<2x32xf32>
    %288 = arith.index_cast %c4_i32 : i32 to index
    %c0_73 = arith.constant 0 : index
    %c0_74 = arith.constant 0 : index
    %289 = vector.load %arg5[%288, %c0_73, %c0_74] : memref<8x2x32xf32, #tpu.memory_space<vmem>>, vector<1x2x32xf32>
    %290 = vector.shape_cast %289 : vector<1x2x32xf32> to vector<2x32xf32>
    %291 = vector.shape_cast %287 : vector<2x32xf32> to vector<1x2x32xf32>
    tpu.vector_store %arg5[%288, %c0_73, %c0_74], %291 {strides = array<i32>} : memref<8x2x32xf32, #tpu.memory_space<vmem>>, vector<1x2x32xf32>,
    %c5_i32 = arith.constant 5 : i32
    %292 = vector.extract_strided_slice %287 {offsets = [0, 0], sizes = [1, 32], strides = [1, 1]} : vector<2x32xf32> to vector<1x32xf32>
    %293 = vector.extract_strided_slice %0 {offsets = [0, 0, 0], sizes = [1, 32, 100], strides = [1, 1, 1]} : vector<2x32x100xf32> to vector<1x32x100xf32>
    %294 = vector.shape_cast %293 : vector<1x32x100xf32> to vector<32x100xf32>
    %cst_75 = arith.constant dense<0.000000e+00> : vector<1x100xf32>
    %295 = tpu.matmul %292, %294, %cst_75 {dimension_numbers = #tpu.dot_dimension_numbers<[1], [0], [0], [1], [0, 0, 1, 1], [], []>} : vector<1x32xf32>, vector<32x100xf32>, vector<1x100xf32> -> vector<1x100xf32>
    %296 = vector.extract_strided_slice %287 {offsets = [1, 0], sizes = [1, 32], strides = [1, 1]} : vector<2x32xf32> to vector<1x32xf32>
    %297 = vector.extract_strided_slice %0 {offsets = [1, 0, 0], sizes = [1, 32, 100], strides = [1, 1, 1]} : vector<2x32x100xf32> to vector<1x32x100xf32>
    %298 = vector.shape_cast %297 : vector<1x32x100xf32> to vector<32x100xf32>
    %cst_76 = arith.constant dense<0.000000e+00> : vector<1x100xf32>
    %299 = tpu.matmul %296, %298, %cst_76 {dimension_numbers = #tpu.dot_dimension_numbers<[1], [0], [0], [1], [0, 0, 1, 1], [], []>} : vector<1x32xf32>, vector<32x100xf32>, vector<1x100xf32> -> vector<1x100xf32>
    %300 = tpu.concatenate %295, %299 in 0 : vector<1x100xf32>, vector<1x100xf32> -> vector<2x100xf32>
    %cst_77 = arith.constant 0.176776692 : f32
    %301 = vector.broadcast %cst_77 : f32 to vector<2x100xf32>
    %302 = arith.mulf %300, %301 : vector<2x100xf32>
    %cst_78 = arith.constant dense<0xFF800000> : vector<2xf32>
    %303 = vector.multi_reduction <maximumf>, %302, %cst_78 [1] : vector<2x100xf32> to vector<2xf32>
    %304 = vector.shape_cast %303 : vector<2xf32> to vector<2x1xf32>
    %305 = vector.broadcast %304 : vector<2x1xf32> to vector<2x100xf32>
    %306 = arith.subf %302, %305 : vector<2x100xf32>
    %307 = math.exp %306 : vector<2x100xf32>
    %cst_79 = arith.constant dense<0.000000e+00> : vector<2xf32>
    %308 = vector.multi_reduction <add>, %307, %cst_79 [1] : vector<2x100xf32> to vector<2xf32>
    %309 = vector.shape_cast %308 : vector<2xf32> to vector<2x1xf32>
    %310 = tpu.reciprocal %309 {approx = true} : vector<2x1xf32> -> vector<2x1xf32>
    %311 = vector.broadcast %310 : vector<2x1xf32> to vector<2x100xf32>
    %312 = arith.mulf %307, %311 : vector<2x100xf32>
    %313 = vector.extract_strided_slice %312 {offsets = [0, 0], sizes = [1, 100], strides = [1, 1]} : vector<2x100xf32> to vector<1x100xf32>
    %314 = vector.extract_strided_slice %1 {offsets = [0, 0, 0], sizes = [1, 100, 32], strides = [1, 1, 1]} : vector<2x100x32xf32> to vector<1x100x32xf32>
    %315 = vector.shape_cast %314 : vector<1x100x32xf32> to vector<100x32xf32>
    %cst_80 = arith.constant dense<0.000000e+00> : vector<1x32xf32>
    %316 = tpu.matmul %313, %315, %cst_80 {dimension_numbers = #tpu.dot_dimension_numbers<[1], [0], [0], [1], [0, 0, 1, 1], [], []>} : vector<1x100xf32>, vector<100x32xf32>, vector<1x32xf32> -> vector<1x32xf32>
    %317 = vector.extract_strided_slice %312 {offsets = [1, 0], sizes = [1, 100], strides = [1, 1]} : vector<2x100xf32> to vector<1x100xf32>
    %318 = vector.extract_strided_slice %1 {offsets = [1, 0, 0], sizes = [1, 100, 32], strides = [1, 1, 1]} : vector<2x100x32xf32> to vector<1x100x32xf32>
    %319 = vector.shape_cast %318 : vector<1x100x32xf32> to vector<100x32xf32>
    %cst_81 = arith.constant dense<0.000000e+00> : vector<1x32xf32>
    %320 = tpu.matmul %317, %319, %cst_81 {dimension_numbers = #tpu.dot_dimension_numbers<[1], [0], [0], [1], [0, 0, 1, 1], [], []>} : vector<1x100xf32>, vector<100x32xf32>, vector<1x32xf32> -> vector<1x32xf32>
    %321 = tpu.concatenate %316, %320 in 0 : vector<1x32xf32>, vector<1x32xf32> -> vector<2x32xf32>
    %322 = arith.index_cast %c5_i32 : i32 to index
    %c0_82 = arith.constant 0 : index
    %c0_83 = arith.constant 0 : index
    %323 = vector.load %arg0[%322, %c0_82, %c0_83] : memref<8x2x16xf32, #tpu.memory_space<vmem>>, vector<1x2x16xf32>
    %324 = vector.shape_cast %323 : vector<1x2x16xf32> to vector<2x16xf32>
    %325 = tpu.concatenate %324, %287, %321 in 1 : vector<2x16xf32>, vector<2x32xf32>, vector<2x32xf32> -> vector<2x80xf32>
    %cst_84 = arith.constant dense<0.000000e+00> : vector<2x128xf32>
    %326 = tpu.matmul %325, %2, %cst_84 {dimension_numbers = #tpu.dot_dimension_numbers<[1], [0], [0], [1], [0, 0, 1, 1], [], []>} : vector<2x80xf32>, vector<80x128xf32>, vector<2x128xf32> -> vector<2x128xf32>
    %327 = vector.broadcast %3 : vector<1x128xf32> to vector<2x128xf32>
    %328 = arith.addf %326, %327 : vector<2x128xf32>
    %329 = vector.extract_strided_slice %328 {offsets = [0, 0], sizes = [2, 96], strides = [1, 1]} : vector<2x128xf32> to vector<2x96xf32>
    %330 = arith.negf %329 : vector<2x96xf32>
    %331 = math.exp %330 : vector<2x96xf32>
    %cst_85 = arith.constant 1.000000e+00 : f32
    %332 = vector.broadcast %cst_85 : f32 to vector<2x96xf32>
    %333 = arith.addf %332, %331 : vector<2x96xf32>
    %334 = arith.divf %332, %333 : vector<2x96xf32>
    %335 = vector.extract_strided_slice %328 {offsets = [0, 96], sizes = [2, 32], strides = [1, 1]} : vector<2x128xf32> to vector<2x32xf32>
    %336 = math.tanh %335 : vector<2x32xf32>
    %337 = vector.extract_strided_slice %334 {offsets = [0, 0], sizes = [2, 32], strides = [1, 1]} : vector<2x96xf32> to vector<2x32xf32>
    %338 = vector.extract_strided_slice %334 {offsets = [0, 32], sizes = [2, 32], strides = [1, 1]} : vector<2x96xf32> to vector<2x32xf32>
    %339 = vector.extract_strided_slice %334 {offsets = [0, 64], sizes = [2, 32], strides = [1, 1]} : vector<2x96xf32> to vector<2x32xf32>
    %340 = arith.mulf %338, %285 : vector<2x32xf32>
    %341 = arith.mulf %337, %336 : vector<2x32xf32>
    %342 = arith.addf %340, %341 : vector<2x32xf32>
    %343 = math.tanh %342 : vector<2x32xf32>
    %344 = arith.mulf %339, %343 : vector<2x32xf32>
    %345 = arith.index_cast %c5_i32 : i32 to index
    %c0_86 = arith.constant 0 : index
    %c0_87 = arith.constant 0 : index
    %346 = vector.load %arg5[%345, %c0_86, %c0_87] : memref<8x2x32xf32, #tpu.memory_space<vmem>>, vector<1x2x32xf32>
    %347 = vector.shape_cast %346 : vector<1x2x32xf32> to vector<2x32xf32>
    %348 = vector.shape_cast %344 : vector<2x32xf32> to vector<1x2x32xf32>
    tpu.vector_store %arg5[%345, %c0_86, %c0_87], %348 {strides = array<i32>} : memref<8x2x32xf32, #tpu.memory_space<vmem>>, vector<1x2x32xf32>,
    %c6_i32 = arith.constant 6 : i32
    %349 = vector.extract_strided_slice %344 {offsets = [0, 0], sizes = [1, 32], strides = [1, 1]} : vector<2x32xf32> to vector<1x32xf32>
    %350 = vector.extract_strided_slice %0 {offsets = [0, 0, 0], sizes = [1, 32, 100], strides = [1, 1, 1]} : vector<2x32x100xf32> to vector<1x32x100xf32>
    %351 = vector.shape_cast %350 : vector<1x32x100xf32> to vector<32x100xf32>
    %cst_88 = arith.constant dense<0.000000e+00> : vector<1x100xf32>
    %352 = tpu.matmul %349, %351, %cst_88 {dimension_numbers = #tpu.dot_dimension_numbers<[1], [0], [0], [1], [0, 0, 1, 1], [], []>} : vector<1x32xf32>, vector<32x100xf32>, vector<1x100xf32> -> vector<1x100xf32>
    %353 = vector.extract_strided_slice %344 {offsets = [1, 0], sizes = [1, 32], strides = [1, 1]} : vector<2x32xf32> to vector<1x32xf32>
    %354 = vector.extract_strided_slice %0 {offsets = [1, 0, 0], sizes = [1, 32, 100], strides = [1, 1, 1]} : vector<2x32x100xf32> to vector<1x32x100xf32>
    %355 = vector.shape_cast %354 : vector<1x32x100xf32> to vector<32x100xf32>
    %cst_89 = arith.constant dense<0.000000e+00> : vector<1x100xf32>
    %356 = tpu.matmul %353, %355, %cst_89 {dimension_numbers = #tpu.dot_dimension_numbers<[1], [0], [0], [1], [0, 0, 1, 1], [], []>} : vector<1x32xf32>, vector<32x100xf32>, vector<1x100xf32> -> vector<1x100xf32>
    %357 = tpu.concatenate %352, %356 in 0 : vector<1x100xf32>, vector<1x100xf32> -> vector<2x100xf32>
    %cst_90 = arith.constant 0.176776692 : f32
    %358 = vector.broadcast %cst_90 : f32 to vector<2x100xf32>
    %359 = arith.mulf %357, %358 : vector<2x100xf32>
    %cst_91 = arith.constant dense<0xFF800000> : vector<2xf32>
    %360 = vector.multi_reduction <maximumf>, %359, %cst_91 [1] : vector<2x100xf32> to vector<2xf32>
    %361 = vector.shape_cast %360 : vector<2xf32> to vector<2x1xf32>
    %362 = vector.broadcast %361 : vector<2x1xf32> to vector<2x100xf32>
    %363 = arith.subf %359, %362 : vector<2x100xf32>
    %364 = math.exp %363 : vector<2x100xf32>
    %cst_92 = arith.constant dense<0.000000e+00> : vector<2xf32>
    %365 = vector.multi_reduction <add>, %364, %cst_92 [1] : vector<2x100xf32> to vector<2xf32>
    %366 = vector.shape_cast %365 : vector<2xf32> to vector<2x1xf32>
    %367 = tpu.reciprocal %366 {approx = true} : vector<2x1xf32> -> vector<2x1xf32>
    %368 = vector.broadcast %367 : vector<2x1xf32> to vector<2x100xf32>
    %369 = arith.mulf %364, %368 : vector<2x100xf32>
    %370 = vector.extract_strided_slice %369 {offsets = [0, 0], sizes = [1, 100], strides = [1, 1]} : vector<2x100xf32> to vector<1x100xf32>
    %371 = vector.extract_strided_slice %1 {offsets = [0, 0, 0], sizes = [1, 100, 32], strides = [1, 1, 1]} : vector<2x100x32xf32> to vector<1x100x32xf32>
    %372 = vector.shape_cast %371 : vector<1x100x32xf32> to vector<100x32xf32>
    %cst_93 = arith.constant dense<0.000000e+00> : vector<1x32xf32>
    %373 = tpu.matmul %370, %372, %cst_93 {dimension_numbers = #tpu.dot_dimension_numbers<[1], [0], [0], [1], [0, 0, 1, 1], [], []>} : vector<1x100xf32>, vector<100x32xf32>, vector<1x32xf32> -> vector<1x32xf32>
    %374 = vector.extract_strided_slice %369 {offsets = [1, 0], sizes = [1, 100], strides = [1, 1]} : vector<2x100xf32> to vector<1x100xf32>
    %375 = vector.extract_strided_slice %1 {offsets = [1, 0, 0], sizes = [1, 100, 32], strides = [1, 1, 1]} : vector<2x100x32xf32> to vector<1x100x32xf32>
    %376 = vector.shape_cast %375 : vector<1x100x32xf32> to vector<100x32xf32>
    %cst_94 = arith.constant dense<0.000000e+00> : vector<1x32xf32>
    %377 = tpu.matmul %374, %376, %cst_94 {dimension_numbers = #tpu.dot_dimension_numbers<[1], [0], [0], [1], [0, 0, 1, 1], [], []>} : vector<1x100xf32>, vector<100x32xf32>, vector<1x32xf32> -> vector<1x32xf32>
    %378 = tpu.concatenate %373, %377 in 0 : vector<1x32xf32>, vector<1x32xf32> -> vector<2x32xf32>
    %379 = arith.index_cast %c6_i32 : i32 to index
    %c0_95 = arith.constant 0 : index
    %c0_96 = arith.constant 0 : index
    %380 = vector.load %arg0[%379, %c0_95, %c0_96] : memref<8x2x16xf32, #tpu.memory_space<vmem>>, vector<1x2x16xf32>
    %381 = vector.shape_cast %380 : vector<1x2x16xf32> to vector<2x16xf32>
    %382 = tpu.concatenate %381, %344, %378 in 1 : vector<2x16xf32>, vector<2x32xf32>, vector<2x32xf32> -> vector<2x80xf32>
    %cst_97 = arith.constant dense<0.000000e+00> : vector<2x128xf32>
    %383 = tpu.matmul %382, %2, %cst_97 {dimension_numbers = #tpu.dot_dimension_numbers<[1], [0], [0], [1], [0, 0, 1, 1], [], []>} : vector<2x80xf32>, vector<80x128xf32>, vector<2x128xf32> -> vector<2x128xf32>
    %384 = vector.broadcast %3 : vector<1x128xf32> to vector<2x128xf32>
    %385 = arith.addf %383, %384 : vector<2x128xf32>
    %386 = vector.extract_strided_slice %385 {offsets = [0, 0], sizes = [2, 96], strides = [1, 1]} : vector<2x128xf32> to vector<2x96xf32>
    %387 = arith.negf %386 : vector<2x96xf32>
    %388 = math.exp %387 : vector<2x96xf32>
    %cst_98 = arith.constant 1.000000e+00 : f32
    %389 = vector.broadcast %cst_98 : f32 to vector<2x96xf32>
    %390 = arith.addf %389, %388 : vector<2x96xf32>
    %391 = arith.divf %389, %390 : vector<2x96xf32>
    %392 = vector.extract_strided_slice %385 {offsets = [0, 96], sizes = [2, 32], strides = [1, 1]} : vector<2x128xf32> to vector<2x32xf32>
    %393 = math.tanh %392 : vector<2x32xf32>
    %394 = vector.extract_strided_slice %391 {offsets = [0, 0], sizes = [2, 32], strides = [1, 1]} : vector<2x96xf32> to vector<2x32xf32>
    %395 = vector.extract_strided_slice %391 {offsets = [0, 32], sizes = [2, 32], strides = [1, 1]} : vector<2x96xf32> to vector<2x32xf32>
    %396 = vector.extract_strided_slice %391 {offsets = [0, 64], sizes = [2, 32], strides = [1, 1]} : vector<2x96xf32> to vector<2x32xf32>
    %397 = arith.mulf %395, %342 : vector<2x32xf32>
    %398 = arith.mulf %394, %393 : vector<2x32xf32>
    %399 = arith.addf %397, %398 : vector<2x32xf32>
    %400 = math.tanh %399 : vector<2x32xf32>
    %401 = arith.mulf %396, %400 : vector<2x32xf32>
    %402 = arith.index_cast %c6_i32 : i32 to index
    %c0_99 = arith.constant 0 : index
    %c0_100 = arith.constant 0 : index
    %403 = vector.load %arg5[%402, %c0_99, %c0_100] : memref<8x2x32xf32, #tpu.memory_space<vmem>>, vector<1x2x32xf32>
    %404 = vector.shape_cast %403 : vector<1x2x32xf32> to vector<2x32xf32>
    %405 = vector.shape_cast %401 : vector<2x32xf32> to vector<1x2x32xf32>
    tpu.vector_store %arg5[%402, %c0_99, %c0_100], %405 {strides = array<i32>} : memref<8x2x32xf32, #tpu.memory_space<vmem>>, vector<1x2x32xf32>,
    %c7_i32 = arith.constant 7 : i32
    %406 = vector.extract_strided_slice %401 {offsets = [0, 0], sizes = [1, 32], strides = [1, 1]} : vector<2x32xf32> to vector<1x32xf32>
    %407 = vector.extract_strided_slice %0 {offsets = [0, 0, 0], sizes = [1, 32, 100], strides = [1, 1, 1]} : vector<2x32x100xf32> to vector<1x32x100xf32>
    %408 = vector.shape_cast %407 : vector<1x32x100xf32> to vector<32x100xf32>
    %cst_101 = arith.constant dense<0.000000e+00> : vector<1x100xf32>
    %409 = tpu.matmul %406, %408, %cst_101 {dimension_numbers = #tpu.dot_dimension_numbers<[1], [0], [0], [1], [0, 0, 1, 1], [], []>} : vector<1x32xf32>, vector<32x100xf32>, vector<1x100xf32> -> vector<1x100xf32>
    %410 = vector.extract_strided_slice %401 {offsets = [1, 0], sizes = [1, 32], strides = [1, 1]} : vector<2x32xf32> to vector<1x32xf32>
    %411 = vector.extract_strided_slice %0 {offsets = [1, 0, 0], sizes = [1, 32, 100], strides = [1, 1, 1]} : vector<2x32x100xf32> to vector<1x32x100xf32>
    %412 = vector.shape_cast %411 : vector<1x32x100xf32> to vector<32x100xf32>
    %cst_102 = arith.constant dense<0.000000e+00> : vector<1x100xf32>
    %413 = tpu.matmul %410, %412, %cst_102 {dimension_numbers = #tpu.dot_dimension_numbers<[1], [0], [0], [1], [0, 0, 1, 1], [], []>} : vector<1x32xf32>, vector<32x100xf32>, vector<1x100xf32> -> vector<1x100xf32>
    %414 = tpu.concatenate %409, %413 in 0 : vector<1x100xf32>, vector<1x100xf32> -> vector<2x100xf32>
    %cst_103 = arith.constant 0.176776692 : f32
    %415 = vector.broadcast %cst_103 : f32 to vector<2x100xf32>
    %416 = arith.mulf %414, %415 : vector<2x100xf32>
    %cst_104 = arith.constant dense<0xFF800000> : vector<2xf32>
    %417 = vector.multi_reduction <maximumf>, %416, %cst_104 [1] : vector<2x100xf32> to vector<2xf32>
    %418 = vector.shape_cast %417 : vector<2xf32> to vector<2x1xf32>
    %419 = vector.broadcast %418 : vector<2x1xf32> to vector<2x100xf32>
    %420 = arith.subf %416, %419 : vector<2x100xf32>
    %421 = math.exp %420 : vector<2x100xf32>
    %cst_105 = arith.constant dense<0.000000e+00> : vector<2xf32>
    %422 = vector.multi_reduction <add>, %421, %cst_105 [1] : vector<2x100xf32> to vector<2xf32>
    %423 = vector.shape_cast %422 : vector<2xf32> to vector<2x1xf32>
    %424 = tpu.reciprocal %423 {approx = true} : vector<2x1xf32> -> vector<2x1xf32>
    %425 = vector.broadcast %424 : vector<2x1xf32> to vector<2x100xf32>
    %426 = arith.mulf %421, %425 : vector<2x100xf32>
    %427 = vector.extract_strided_slice %426 {offsets = [0, 0], sizes = [1, 100], strides = [1, 1]} : vector<2x100xf32> to vector<1x100xf32>
    %428 = vector.extract_strided_slice %1 {offsets = [0, 0, 0], sizes = [1, 100, 32], strides = [1, 1, 1]} : vector<2x100x32xf32> to vector<1x100x32xf32>
    %429 = vector.shape_cast %428 : vector<1x100x32xf32> to vector<100x32xf32>
    %cst_106 = arith.constant dense<0.000000e+00> : vector<1x32xf32>
    %430 = tpu.matmul %427, %429, %cst_106 {dimension_numbers = #tpu.dot_dimension_numbers<[1], [0], [0], [1], [0, 0, 1, 1], [], []>} : vector<1x100xf32>, vector<100x32xf32>, vector<1x32xf32> -> vector<1x32xf32>
    %431 = vector.extract_strided_slice %426 {offsets = [1, 0], sizes = [1, 100], strides = [1, 1]} : vector<2x100xf32> to vector<1x100xf32>
    %432 = vector.extract_strided_slice %1 {offsets = [1, 0, 0], sizes = [1, 100, 32], strides = [1, 1, 1]} : vector<2x100x32xf32> to vector<1x100x32xf32>
    %433 = vector.shape_cast %432 : vector<1x100x32xf32> to vector<100x32xf32>
    %cst_107 = arith.constant dense<0.000000e+00> : vector<1x32xf32>
    %434 = tpu.matmul %431, %433, %cst_107 {dimension_numbers = #tpu.dot_dimension_numbers<[1], [0], [0], [1], [0, 0, 1, 1], [], []>} : vector<1x100xf32>, vector<100x32xf32>, vector<1x32xf32> -> vector<1x32xf32>
    %435 = tpu.concatenate %430, %434 in 0 : vector<1x32xf32>, vector<1x32xf32> -> vector<2x32xf32>
    %436 = arith.index_cast %c7_i32 : i32 to index
    %c0_108 = arith.constant 0 : index
    %c0_109 = arith.constant 0 : index
    %437 = vector.load %arg0[%436, %c0_108, %c0_109] : memref<8x2x16xf32, #tpu.memory_space<vmem>>, vector<1x2x16xf32>
    %438 = vector.shape_cast %437 : vector<1x2x16xf32> to vector<2x16xf32>
    %439 = tpu.concatenate %438, %401, %435 in 1 : vector<2x16xf32>, vector<2x32xf32>, vector<2x32xf32> -> vector<2x80xf32>
    %cst_110 = arith.constant dense<0.000000e+00> : vector<2x128xf32>
    %440 = tpu.matmul %439, %2, %cst_110 {dimension_numbers = #tpu.dot_dimension_numbers<[1], [0], [0], [1], [0, 0, 1, 1], [], []>} : vector<2x80xf32>, vector<80x128xf32>, vector<2x128xf32> -> vector<2x128xf32>
    %441 = vector.broadcast %3 : vector<1x128xf32> to vector<2x128xf32>
    %442 = arith.addf %440, %441 : vector<2x128xf32>
    %443 = vector.extract_strided_slice %442 {offsets = [0, 0], sizes = [2, 96], strides = [1, 1]} : vector<2x128xf32> to vector<2x96xf32>
    %444 = arith.negf %443 : vector<2x96xf32>
    %445 = math.exp %444 : vector<2x96xf32>
    %cst_111 = arith.constant 1.000000e+00 : f32
    %446 = vector.broadcast %cst_111 : f32 to vector<2x96xf32>
    %447 = arith.addf %446, %445 : vector<2x96xf32>
    %448 = arith.divf %446, %447 : vector<2x96xf32>
    %449 = vector.extract_strided_slice %442 {offsets = [0, 96], sizes = [2, 32], strides = [1, 1]} : vector<2x128xf32> to vector<2x32xf32>
    %450 = math.tanh %449 : vector<2x32xf32>
    %451 = vector.extract_strided_slice %448 {offsets = [0, 0], sizes = [2, 32], strides = [1, 1]} : vector<2x96xf32> to vector<2x32xf32>
    %452 = vector.extract_strided_slice %448 {offsets = [0, 32], sizes = [2, 32], strides = [1, 1]} : vector<2x96xf32> to vector<2x32xf32>
    %453 = vector.extract_strided_slice %448 {offsets = [0, 64], sizes = [2, 32], strides = [1, 1]} : vector<2x96xf32> to vector<2x32xf32>
    %454 = arith.mulf %452, %399 : vector<2x32xf32>
    %455 = arith.mulf %451, %450 : vector<2x32xf32>
    %456 = arith.addf %454, %455 : vector<2x32xf32>
    %457 = math.tanh %456 : vector<2x32xf32>
    %458 = arith.mulf %453, %457 : vector<2x32xf32>
    %459 = arith.index_cast %c7_i32 : i32 to index
    %c0_112 = arith.constant 0 : index
    %c0_113 = arith.constant 0 : index
    %460 = vector.load %arg5[%459, %c0_112, %c0_113] : memref<8x2x32xf32, #tpu.memory_space<vmem>>, vector<1x2x32xf32>
    %461 = vector.shape_cast %460 : vector<1x2x32xf32> to vector<2x32xf32>
    %462 = vector.shape_cast %458 : vector<2x32xf32> to vector<1x2x32xf32>
    tpu.vector_store %arg5[%459, %c0_112, %c0_113], %462 {strides = array<i32>} : memref<8x2x32xf32, #tpu.memory_space<vmem>>, vector<1x2x32xf32>,
    %c8_i32 = arith.constant 8 : i32
    return
  }
}

</mosaic_0001>

<llo_original>
// kernel: tpu_custom_call.1
$region0: #{tpu_custom_call.1}
  #allocation0 [shape = 'u32[]', space=smem, size = 0x4, offset = 0x4, fixed_abs, tag = 'smem constant byte address 0x4 - core index']
  #allocation1 [shape = 'u32[144,128]{1,0:T(1,128)}', space=vmem, size = 0x12000, scoped, tag = 'internal scratch']
  %s0 = inlined_call_operand.vmem [shape: f32[8,2,16], index: 0, kind: input, shape index: {}]
  %s1 = inlined_call_operand.vmem [shape: f32[2,32,100], index: 1, kind: input, shape index: {}]
  %s2 = inlined_call_operand.vmem [shape: f32[2,100,32], index: 2, kind: input, shape index: {}]
  %s3 = inlined_call_operand.vmem [shape: f32[80,128], index: 3, kind: input, shape index: {}]
  %s4 = inlined_call_operand.vmem [shape: f32[1,128], index: 4, kind: input, shape index: {}]
  %s5 = inlined_call_operand.hbm [shape: f32[8,2,32], index: 5, kind: output, shape index: {}]
  %s6 = sld [smem:[#allocation0]]
  $region30: #{tpu_custom_call.1} parent=0
    _
  %s8 = ssub.s32 1, %s6
  %s9 = scalar_select 0, %s8, %s6
  $region1: #{tpu_custom_call.1} parent=0
    #allocation2 [shape = 'u8[8192]{0}', space=vmem, size = 0x2000, scoped, tag = 'output window, operand 0, single buffered']
    #allocation3 [shape = 's32[1]{0}', space=sflag, size = 0x4, scoped, tag = 'scoped memory for tpu_custom_call.1']
    %10 = vsyncpa [#allocation3], 0
    // Predicated region
    $region2: #{tpu_custom_call.1} parent=1 // pred_check
      _
    $region3: #{tpu_custom_call.1} parent=1 // pred_check_branch
      %12 = sbr.rel (0) target = $region5
    $region4: #{tpu_custom_call.1} parent=1 // pred_region
      _
    $region5: #{tpu_custom_call.1} parent=1 // pred_fallthru
      _
    // Predicated region
    $region6: #{tpu_custom_call.1} parent=1 // pred_check
      _
    $region7: #{tpu_custom_call.1} parent=1 // pred_check_branch
      %14 = sbr.rel (0) target = $region9
    $region8: #{tpu_custom_call.1} parent=1 // pred_region
      _
    $region9: #{tpu_custom_call.1} parent=1 // pred_fallthru
      _
    // Predicated region
    $region10: #{tpu_custom_call.1} parent=1 // pred_check
      _
    $region11: #{tpu_custom_call.1} parent=1 // pred_check_branch
      %16 = sbr.rel (0) target = $region13
    $region12: #{tpu_custom_call.1} parent=1 // pred_region
      _
    $region13: #{tpu_custom_call.1} parent=1 // pred_fallthru
      _
    // Predicated region
    $region14: #{tpu_custom_call.1} parent=1 // pred_check
      _
    $region15: #{tpu_custom_call.1} parent=1 // pred_check_branch
      %18 = sbr.rel (0) target = $region17
    $region16: #{tpu_custom_call.1} parent=1 // pred_region
      _
    $region17: #{tpu_custom_call.1} parent=1 // pred_fallthru
      _
    // Predicated region
    $region18: #{tpu_custom_call.1} parent=1 // pred_check
      _
    $region19: #{tpu_custom_call.1} parent=1 // pred_check_branch
      %20 = sbr.rel (0) target = $region21
    $region20: #{tpu_custom_call.1} parent=1 // pred_region
      _
    $region21: #{tpu_custom_call.1} parent=1 // pred_fallthru
      _
    %v21 = vld [vmem:[%s1] sm:$0xff]
    %v22 = vld [vmem:[%s1 + $0x8] sm:$0xff]
    %v23 = vld [vmem:[%s1 + $0x10] sm:$0xff]
    %v24 = vld [vmem:[%s1 + $0x18] sm:$0xff]
    %v25 = vld [vmem:[%s1 + $0x20] sm:$0xff]
    %v26 = vld [vmem:[%s1 + $0x28] sm:$0xff]
    %v27 = vld [vmem:[%s1 + $0x30] sm:$0xff]
    %v28 = vld [vmem:[%s1 + $0x38] sm:$0xff]
    %v29 = vld [vmem:[%s2] sm:$0xff]
    %v30 = vld [vmem:[%s2 + $0x8] sm:$0xff]
    %v31 = vld [vmem:[%s2 + $0x10] sm:$0xff]
    %v32 = vld [vmem:[%s2 + $0x18] sm:$0xff]
    %v33 = vld [vmem:[%s2 + $0x20] sm:$0xff]
    %v34 = vld [vmem:[%s2 + $0x28] sm:$0xff]
    %v35 = vld [vmem:[%s2 + $0x30] sm:$0xff]
    %v36 = vld [vmem:[%s2 + $0x38] sm:$0xff]
    %v37 = vld [vmem:[%s2 + $0x40] sm:$0xff]
    %v38 = vld [vmem:[%s2 + $0x48] sm:$0xff]
    %v39 = vld [vmem:[%s2 + $0x50] sm:$0xff]
    %v40 = vld [vmem:[%s2 + $0x58] sm:$0xff]
    %v41 = vld [vmem:[%s2 + $0x60] sm:$0xf]
    %v42 = vld [vmem:[%s2 + $0x68] sm:$0xff]
    %v43 = vld [vmem:[%s2 + $0x70] sm:$0xff]
    %v44 = vld [vmem:[%s2 + $0x78] sm:$0xff]
    %v45 = vld [vmem:[%s2 + $0x80] sm:$0xff]
    %v46 = vld [vmem:[%s2 + $0x88] sm:$0xff]
    %v47 = vld [vmem:[%s2 + $0x90] sm:$0xff]
    %v48 = vld [vmem:[%s2 + $0x98] sm:$0xff]
    %v49 = vld [vmem:[%s2 + $0xa0] sm:$0xff]
    %v50 = vld [vmem:[%s2 + $0xa8] sm:$0xff]
    %v51 = vld [vmem:[%s2 + $0xb0] sm:$0xff]
    %v52 = vld [vmem:[%s2 + $0xb8] sm:$0xff]
    %v53 = vld [vmem:[%s2 + $0xc0] sm:$0xff]
    %v54 = vld [vmem:[%s2 + $0xc8] sm:$0xf]
    %v55 = vld [vmem:[%s3] sm:$0xff]
    %v56 = vld [vmem:[%s3 + $0x8] sm:$0xff]
    %v57 = vld [vmem:[%s3 + $0x10] sm:$0xff]
    %v58 = vld [vmem:[%s3 + $0x18] sm:$0xff]
    %v59 = vld [vmem:[%s3 + $0x20] sm:$0xff]
    %v60 = vld [vmem:[%s3 + $0x28] sm:$0xff]
    %v61 = vld [vmem:[%s3 + $0x30] sm:$0xff]
    %v62 = vld [vmem:[%s3 + $0x38] sm:$0xff]
    %v63 = vld [vmem:[%s3 + $0x40] sm:$0xff]
    %v64 = vld [vmem:[%s3 + $0x48] sm:$0xff]
    %v65 = vld [vmem:[%s4] sm:$0x1]
    %vm66 = vcmask 818176
    %v67 = vsel %vm66, %v21, 0.0
    %68 = vadd.xlane.f32.xlu0 %v67
    %v69 = vpop.xlane.xlu0 %68
    %v70 = vsel %vm66, %v22, 0.0
    %71 = vadd.xlane.f32.xlu0 %v70
    %v72 = vpop.xlane.xlu0 %71
    %v73 = vsel %vm66, %v23, 0.0
    %74 = vadd.xlane.f32.xlu0 %v73
    %v75 = vpop.xlane.xlu0 %74
    %v76 = vsel %vm66, %v24, 0.0
    %77 = vadd.xlane.f32.xlu0 %v76
    %v78 = vpop.xlane.xlu0 %77
    %v79 = vsel %vm66, %v25, 0.0
    %80 = vadd.xlane.f32.xlu0 %v79
    %v81 = vpop.xlane.xlu0 %80
    %v82 = vsel %vm66, %v26, 0.0
    %83 = vadd.xlane.f32.xlu0 %v82
    %v84 = vpop.xlane.xlu0 %83
    %v85 = vsel %vm66, %v27, 0.0
    %86 = vadd.xlane.f32.xlu0 %v85
    %v87 = vpop.xlane.xlu0 %86
    %v88 = vsel %vm66, %v28, 0.0
    %89 = vadd.xlane.f32.xlu0 %v88
    %v90 = vpop.xlane.xlu0 %89
    %v91 = vrcp.pop 100.0
    %v92 = vmul.f32 %v69, %v91
    %v93 = vmul.f32 %v72, %v91
    %v94 = vmul.f32 %v75, %v91
    %v95 = vmul.f32 %v78, %v91
    %v96 = vmul.f32 %v81, %v91
    %v97 = vmul.f32 %v84, %v91
    %v98 = vmul.f32 %v87, %v91
    %v99 = vmul.f32 %v90, %v91
    %v104 = vlaneseq
    %v105 = vand.u32 %v104, 127
    %v106 = vlaneseq
    %v107 = vshrl.u32 %v106, 7
    %v108 = vsub.s32 %v105, %v107
    %v109 = vrot.slane %v92, %v108
    %v110 = vadd.s32 %v105, 4294967288
    %v111 = vlaneseq
    %v112 = vshrl.u32 %v111, 7
    %v113 = vsub.s32 %v110, %v112
    %v114 = vrot.slane %v93, %v113
    %vm115 = vcmask 130112
    %v116 = vsel %vm115, %v114, %v109
    %v117 = vadd.s32 %v105, 4294967280
    %v118 = vlaneseq
    %v119 = vshrl.u32 %v118, 7
    %v120 = vsub.s32 %v117, %v119
    %v121 = vrot.slane %v94, %v120
    %vm122 = vcmask 195712
    %v123 = vsel %vm122, %v121, %v116
    %v124 = vadd.s32 %v105, 4294967272
    %v125 = vlaneseq
    %v126 = vshrl.u32 %v125, 7
    %v127 = vsub.s32 %v124, %v126
    %v128 = vrot.slane %v95, %v127
    %vm129 = vcmask 261312
    %v130 = vsel %vm129, %v128, %v123
    %vm131 = vcmask 261120
    %v132 = vsel %vm131, %v130, 0
    %134 = vmatprep.subr.mxu0 0.0
    %135 = vmatpush1.msra.mxu0 %v21
    %136 = vmatprep.subr.mxu0 0.0
    %137 = vmatpush1.msra.mxu0 %v22
    %138 = vmatprep.subr.mxu0 0.0
    %139 = vmatpush1.msra.mxu0 %v23
    %140 = vmatprep.subr.mxu0 0.0
    %141 = vmatpush1.msra.mxu0 %v24
    %142 = vmatprep.subr.mxu0 0.0
    %143 = vmatpush1.msra.mxu0 0.0
    %144 = vmatprep.subr.mxu0 0.0
    %145 = vmatpush1.msra.mxu0 0.0
    %146 = vmatprep.subr.mxu0 0.0
    %147 = vmatpush1.msra.mxu0 0.0
    %148 = vmatprep.subr.mxu0 0.0
    %149 = vmatpush1.msra.mxu0 0.0
    %150 = vmatprep.subr.mxu0 0.0
    %151 = vmatpush1.msra.mxu0 0.0
    %152 = vmatprep.subr.mxu0 0.0
    %153 = vmatpush1.msra.mxu0 0.0
    %154 = vmatprep.subr.mxu0 0.0
    %155 = vmatpush1.msra.mxu0 0.0
    %156 = vmatprep.subr.mxu0 0.0
    %157 = vmatpush1.msra.mxu0 0.0
    %158 = vmatprep.subr.mxu0 0.0
    %159 = vmatpush1.msra.mxu0 0.0
    %160 = vmatprep.subr.mxu0 0.0
    %161 = vmatpush1.msra.mxu0 0.0
    %162 = vmatprep.subr.mxu0 0.0
    %163 = vmatpush1.msra.mxu0 0.0
    %164 = vmatprep.subr.mxu0 0.0
    %165 = vmatpush1.msra.mxu0 0.0
    %166 = vmatprep.subr.mxu0 0.0
    %167 = vmatpush1.msra.mxu0 0.0
    %168 = vmatprep.subr.mxu0 0.0
    %169 = vmatpush1.msra.mxu0 0.0
    %170 = vmatprep.subr.mxu0 0.0
    %171 = vmatpush1.msra.mxu0 0.0
    %172 = vmatprep.subr.mxu0 0.0
    %173 = vmatpush1.msra.mxu0 0.0
    %174 = vmatprep.subr.mxu0 0.0
    %175 = vmatpush1.msra.mxu0 0.0
    %176 = vmatprep.subr.mxu0 0.0
    %177 = vmatpush1.msra.mxu0 0.0
    %178 = vmatprep.subr.mxu0 0.0
    %179 = vmatpush1.msra.mxu0 0.0
    %180 = vmatprep.subr.mxu0 0.0
    %181 = vmatpush1.msra.mxu0 0.0
    %182 = vmatprep.subr.mxu0 0.0
    %183 = vmatpush1.msra.mxu0 0.0
    %184 = vmatprep.subr.mxu0 0.0
    %185 = vmatpush1.msra.mxu0 0.0
    %186 = vmatprep.subr.mxu0 0.0
    %187 = vmatpush1.msra.mxu0 0.0
    %188 = vmatprep.subr.mxu0 0.0
    %189 = vmatpush1.msra.mxu0 0.0
    %190 = vmatprep.subr.mxu0 0.0
    %191 = vmatpush1.msra.mxu0 0.0
    %192 = vmatprep.subr.mxu0 0.0
    %193 = vmatpush1.msra.mxu0 0.0
    %194 = vmatprep.subr.mxu0 0.0
    %195 = vmatpush1.msra.mxu0 0.0
    %196 = vmatprep.subr.mxu0 0.0
    %197 = vmatpush1.msra.mxu0 0.0
    %198 = vmatprep.mubr.f32.mxu0 0.0
    %199 = vmatmul.mubr.f32.gmra.mrb[0].mxu0 %v132
    %v200 = vpop.f32.mrb[0].mxu0
    %v201 = vadd.f32 0.0, %v200
    %v202 = vpop.f32.mrb[0].mxu0
    %203 = vdwg.mxu0
    %v208 = vlaneseq
    %v209 = vshrl.u32 %v208, 7
    %v210 = vsub.s32 %v105, %v209
    %v211 = vrot.slane %v96, %v210
    %v212 = vlaneseq
    %v213 = vshrl.u32 %v212, 7
    %v214 = vsub.s32 %v110, %v213
    %v215 = vrot.slane %v97, %v214
    %v216 = vsel %vm115, %v215, %v211
    %v217 = vlaneseq
    %v218 = vshrl.u32 %v217, 7
    %v219 = vsub.s32 %v117, %v218
    %v220 = vrot.slane %v98, %v219
    %v221 = vsel %vm122, %v220, %v216
    %v222 = vlaneseq
    %v223 = vshrl.u32 %v222, 7
    %v224 = vsub.s32 %v124, %v223
    %v225 = vrot.slane %v99, %v224
    %v226 = vsel %vm129, %v225, %v221
    %v227 = vsel %vm131, %v226, 0
    %229 = vmatprep.subr.mxu0 0.0
    %230 = vmatpush1.msra.mxu0 %v25
    %231 = vmatprep.subr.mxu0 0.0
    %232 = vmatpush1.msra.mxu0 %v26
    %233 = vmatprep.subr.mxu0 0.0
    %234 = vmatpush1.msra.mxu0 %v27
    %235 = vmatprep.subr.mxu0 0.0
    %236 = vmatpush1.msra.mxu0 %v28
    %237 = vmatprep.subr.mxu0 0.0
    %238 = vmatpush1.msra.mxu0 0.0
    %239 = vmatprep.subr.mxu0 0.0
    %240 = vmatpush1.msra.mxu0 0.0
    %241 = vmatprep.subr.mxu0 0.0
    %242 = vmatpush1.msra.mxu0 0.0
    %243 = vmatprep.subr.mxu0 0.0
    %244 = vmatpush1.msra.mxu0 0.0
    %245 = vmatprep.subr.mxu0 0.0
    %246 = vmatpush1.msra.mxu0 0.0
    %247 = vmatprep.subr.mxu0 0.0
    %248 = vmatpush1.msra.mxu0 0.0
    %249 = vmatprep.subr.mxu0 0.0
    %250 = vmatpush1.msra.mxu0 0.0
    %251 = vmatprep.subr.mxu0 0.0
    %252 = vmatpush1.msra.mxu0 0.0
    %253 = vmatprep.subr.mxu0 0.0
    %254 = vmatpush1.msra.mxu0 0.0
    %255 = vmatprep.subr.mxu0 0.0
    %256 = vmatpush1.msra.mxu0 0.0
    %257 = vmatprep.subr.mxu0 0.0
    %258 = vmatpush1.msra.mxu0 0.0
    %259 = vmatprep.subr.mxu0 0.0
    %260 = vmatpush1.msra.mxu0 0.0
    %261 = vmatprep.subr.mxu0 0.0
    %262 = vmatpush1.msra.mxu0 0.0
    %263 = vmatprep.subr.mxu0 0.0
    %264 = vmatpush1.msra.mxu0 0.0
    %265 = vmatprep.subr.mxu0 0.0
    %266 = vmatpush1.msra.mxu0 0.0
    %267 = vmatprep.subr.mxu0 0.0
    %268 = vmatpush1.msra.mxu0 0.0
    %269 = vmatprep.subr.mxu0 0.0
    %270 = vmatpush1.msra.mxu0 0.0
    %271 = vmatprep.subr.mxu0 0.0
    %272 = vmatpush1.msra.mxu0 0.0
    %273 = vmatprep.subr.mxu0 0.0
    %274 = vmatpush1.msra.mxu0 0.0
    %275 = vmatprep.subr.mxu0 0.0
    %276 = vmatpush1.msra.mxu0 0.0
    %277 = vmatprep.subr.mxu0 0.0
    %278 = vmatpush1.msra.mxu0 0.0
    %279 = vmatprep.subr.mxu0 0.0
    %280 = vmatpush1.msra.mxu0 0.0
    %281 = vmatprep.subr.mxu0 0.0
    %282 = vmatpush1.msra.mxu0 0.0
    %283 = vmatprep.subr.mxu0 0.0
    %284 = vmatpush1.msra.mxu0 0.0
    %285 = vmatprep.subr.mxu0 0.0
    %286 = vmatpush1.msra.mxu0 0.0
    %287 = vmatprep.subr.mxu0 0.0
    %288 = vmatpush1.msra.mxu0 0.0
    %289 = vmatprep.subr.mxu0 0.0
    %290 = vmatpush1.msra.mxu0 0.0
    %291 = vmatprep.subr.mxu0 0.0
    %292 = vmatpush1.msra.mxu0 0.0
    %293 = vmatprep.mubr.f32.mxu0 0.0
    %294 = vmatmul.mubr.f32.gmra.mrb[0].mxu0 %v227
    %v295 = vpop.f32.mrb[0].mxu0
    %v296 = vadd.f32 0.0, %v295
    %v297 = vpop.f32.mrb[0].mxu0
    %298 = vdwg.mxu0
    %v300 = vrot.slane %v296, 7
    %vm302 = vcmask 1040384
    %v303 = vsel %vm302, %v201, %v300
    %v304 = vmul.f32 %v303, 0.17677669
    %vm305 = vcmask 812032
    %v306 = vsel %vm305, %v304, -inf
    %307 = vmax.xlane.f32.xlu0 %v306
    %v308 = vpop.xlane.xlu0 %307
    %v309 = vsub.f32 %v304, %v308
    %v310 = vmul.f32 %v309, 1.442695
    %v311 = vpow.pop %v310
    %v312 = vsel %vm305, %v311, 0.0
    %313 = vadd.xlane.f32.xlu0 %v312
    %v314 = vpop.xlane.xlu0 %313
    %v315 = vrcp.pop %v314
    %v316 = vmul.f32 %v311, %v315
    %v318 = vsel %vm66, %v316, 0
    %vm320 = vcmask 1043456
    %v322 = vsel %vm320, %v41, 0
    %324 = vmatprep.subr.mxu0 0.0
    %325 = vmatpush1.msra.mxu0 %v29
    %326 = vmatprep.subr.mxu0 0.0
    %327 = vmatpush1.msra.mxu0 %v30
    %328 = vmatprep.subr.mxu0 0.0
    %329 = vmatpush1.msra.mxu0 %v31
    %330 = vmatprep.subr.mxu0 0.0
    %331 = vmatpush1.msra.mxu0 %v32
    %332 = vmatprep.subr.mxu0 0.0
    %333 = vmatpush1.msra.mxu0 %v33
    %334 = vmatprep.subr.mxu0 0.0
    %335 = vmatpush1.msra.mxu0 %v34
    %336 = vmatprep.subr.mxu0 0.0
    %337 = vmatpush1.msra.mxu0 %v35
    %338 = vmatprep.subr.mxu0 0.0
    %339 = vmatpush1.msra.mxu0 %v36
    %340 = vmatprep.subr.mxu0 0.0
    %341 = vmatpush1.msra.mxu0 %v37
    %342 = vmatprep.subr.mxu0 0.0
    %343 = vmatpush1.msra.mxu0 %v38
    %344 = vmatprep.subr.mxu0 0.0
    %345 = vmatpush1.msra.mxu0 %v39
    %346 = vmatprep.subr.mxu0 0.0
    %347 = vmatpush1.msra.mxu0 %v40
    %348 = vmatprep.subr.mxu0 0.0
    %349 = vmatpush1.msra.mxu0 %v322
    %350 = vmatprep.subr.mxu0 0.0
    %351 = vmatpush1.msra.mxu0 0.0
    %352 = vmatprep.subr.mxu0 0.0
    %353 = vmatpush1.msra.mxu0 0.0
    %354 = vmatprep.subr.mxu0 0.0
    %355 = vmatpush1.msra.mxu0 0.0
    %356 = vmatprep.subr.mxu0 0.0
    %357 = vmatpush1.msra.mxu0 0.0
    %358 = vmatprep.subr.mxu0 0.0
    %359 = vmatpush1.msra.mxu0 0.0
    %360 = vmatprep.subr.mxu0 0.0
    %361 = vmatpush1.msra.mxu0 0.0
    %362 = vmatprep.subr.mxu0 0.0
    %363 = vmatpush1.msra.mxu0 0.0
    %364 = vmatprep.subr.mxu0 0.0
    %365 = vmatpush1.msra.mxu0 0.0
    %366 = vmatprep.subr.mxu0 0.0
    %367 = vmatpush1.msra.mxu0 0.0
    %368 = vmatprep.subr.mxu0 0.0
    %369 = vmatpush1.msra.mxu0 0.0
    %370 = vmatprep.subr.mxu0 0.0
    %371 = vmatpush1.msra.mxu0 0.0
    %372 = vmatprep.subr.mxu0 0.0
    %373 = vmatpush1.msra.mxu0 0.0
    %374 = vmatprep.subr.mxu0 0.0
    %375 = vmatpush1.msra.mxu0 0.0
    %376 = vmatprep.subr.mxu0 0.0
    %377 = vmatpush1.msra.mxu0 0.0
    %378 = vmatprep.subr.mxu0 0.0
    %379 = vmatpush1.msra.mxu0 0.0
    %380 = vmatprep.subr.mxu0 0.0
    %381 = vmatpush1.msra.mxu0 0.0
    %382 = vmatprep.subr.mxu0 0.0
    %383 = vmatpush1.msra.mxu0 0.0
    %384 = vmatprep.subr.mxu0 0.0
    %385 = vmatpush1.msra.mxu0 0.0
    %386 = vmatprep.subr.mxu0 0.0
    %387 = vmatpush1.msra.mxu0 0.0
    %388 = vmatprep.mubr.f32.mxu0 0.0
    %389 = vmatmul.mubr.f32.gmra.mrb[0].mxu0 %v318
    %v390 = vpop.f32.mrb[0].mxu0
    %v391 = vadd.f32 0.0, %v390
    %v392 = vpop.f32.mrb[0].mxu0
    %393 = vdwg.mxu0
    %v394 = vrot.slane %v316, 1
    %v395 = vsel %vm66, %v394, 0
    %v398 = vsel %vm320, %v54, 0
    %400 = vmatprep.subr.mxu0 0.0
    %401 = vmatpush1.msra.mxu0 %v42
    %402 = vmatprep.subr.mxu0 0.0
    %403 = vmatpush1.msra.mxu0 %v43
    %404 = vmatprep.subr.mxu0 0.0
    %405 = vmatpush1.msra.mxu0 %v44
    %406 = vmatprep.subr.mxu0 0.0
    %407 = vmatpush1.msra.mxu0 %v45
    %408 = vmatprep.subr.mxu0 0.0
    %409 = vmatpush1.msra.mxu0 %v46
    %410 = vmatprep.subr.mxu0 0.0
    %411 = vmatpush1.msra.mxu0 %v47
    %412 = vmatprep.subr.mxu0 0.0
    %413 = vmatpush1.msra.mxu0 %v48
    %414 = vmatprep.subr.mxu0 0.0
    %415 = vmatpush1.msra.mxu0 %v49
    %416 = vmatprep.subr.mxu0 0.0
    %417 = vmatpush1.msra.mxu0 %v50
    %418 = vmatprep.subr.mxu0 0.0
    %419 = vmatpush1.msra.mxu0 %v51
    %420 = vmatprep.subr.mxu0 0.0
    %421 = vmatpush1.msra.mxu0 %v52
    %422 = vmatprep.subr.mxu0 0.0
    %423 = vmatpush1.msra.mxu0 %v53
    %424 = vmatprep.subr.mxu0 0.0
    %425 = vmatpush1.msra.mxu0 %v398
    %426 = vmatprep.subr.mxu0 0.0
    %427 = vmatpush1.msra.mxu0 0.0
    %428 = vmatprep.subr.mxu0 0.0
    %429 = vmatpush1.msra.mxu0 0.0
    %430 = vmatprep.subr.mxu0 0.0
    %431 = vmatpush1.msra.mxu0 0.0
    %432 = vmatprep.subr.mxu0 0.0
    %433 = vmatpush1.msra.mxu0 0.0
    %434 = vmatprep.subr.mxu0 0.0
    %435 = vmatpush1.msra.mxu0 0.0
    %436 = vmatprep.subr.mxu0 0.0
    %437 = vmatpush1.msra.mxu0 0.0
    %438 = vmatprep.subr.mxu0 0.0
    %439 = vmatpush1.msra.mxu0 0.0
    %440 = vmatprep.subr.mxu0 0.0
    %441 = vmatpush1.msra.mxu0 0.0
    %442 = vmatprep.subr.mxu0 0.0
    %443 = vmatpush1.msra.mxu0 0.0
    %444 = vmatprep.subr.mxu0 0.0
    %445 = vmatpush1.msra.mxu0 0.0
    %446 = vmatprep.subr.mxu0 0.0
    %447 = vmatpush1.msra.mxu0 0.0
    %448 = vmatprep.subr.mxu0 0.0
    %449 = vmatpush1.msra.mxu0 0.0
    %450 = vmatprep.subr.mxu0 0.0
    %451 = vmatpush1.msra.mxu0 0.0
    %452 = vmatprep.subr.mxu0 0.0
    %453 = vmatpush1.msra.mxu0 0.0
    %454 = vmatprep.subr.mxu0 0.0
    %455 = vmatpush1.msra.mxu0 0.0
    %456 = vmatprep.subr.mxu0 0.0
    %457 = vmatpush1.msra.mxu0 0.0
    %458 = vmatprep.subr.mxu0 0.0
    %459 = vmatpush1.msra.mxu0 0.0
    %460 = vmatprep.subr.mxu0 0.0
    %461 = vmatpush1.msra.mxu0 0.0
    %462 = vmatprep.subr.mxu0 0.0
    %463 = vmatpush1.msra.mxu0 0.0
    %464 = vmatprep.mubr.f32.mxu0 0.0
    %465 = vmatmul.mubr.f32.gmra.mrb[0].mxu0 %v395
    %v466 = vpop.f32.mrb[0].mxu0
    %v467 = vadd.f32 0.0, %v466
    %v468 = vpop.f32.mrb[0].mxu0
    %469 = vdwg.mxu0
    %v471 = vrot.slane %v467, 7
    %v473 = vsel %vm302, %v391, %v471
    %v474 = vld [vmem:[%s0] sm:$0x3]
    %v475 = vlaneseq
    %v476 = vshrl.u32 %v475, 7
    %v477 = vsub.s32 %v117, %v476
    %v478 = vrot.slane %v92, %v477
    %v479 = vlaneseq
    %v480 = vshrl.u32 %v479, 7
    %v481 = vsub.s32 %v124, %v480
    %v482 = vrot.slane %v93, %v481
    %v483 = vsel %vm129, %v482, %v478
    %v484 = vadd.s32 %v105, 4294967264
    %v485 = vlaneseq
    %v486 = vshrl.u32 %v485, 7
    %v487 = vsub.s32 %v484, %v486
    %v488 = vrot.slane %v94, %v487
    %vm489 = vcmask 326912
    %v490 = vsel %vm489, %v488, %v483
    %v491 = vadd.s32 %v105, 4294967256
    %v492 = vlaneseq
    %v493 = vshrl.u32 %v492, 7
    %v494 = vsub.s32 %v491, %v493
    %v495 = vrot.slane %v95, %v494
    %vm496 = vcmask 392512
    %v497 = vsel %vm496, %v495, %v490
    %v498 = vlaneseq
    %v499 = vshrl.u32 %v498, 7
    %v500 = vsub.s32 %v117, %v499
    %v501 = vrot.slane %v96, %v500
    %v502 = vlaneseq
    %v503 = vshrl.u32 %v502, 7
    %v504 = vsub.s32 %v124, %v503
    %v505 = vrot.slane %v97, %v504
    %v506 = vsel %vm129, %v505, %v501
    %v507 = vlaneseq
    %v508 = vshrl.u32 %v507, 7
    %v509 = vsub.s32 %v484, %v508
    %v510 = vrot.slane %v98, %v509
    %v511 = vsel %vm489, %v510, %v506
    %v512 = vlaneseq
    %v513 = vshrl.u32 %v512, 7
    %v514 = vsub.s32 %v491, %v513
    %v515 = vrot.slane %v99, %v514
    %v516 = vsel %vm496, %v515, %v511
    %vm517 = vcmask 1041409
    %v518 = vsel %vm517, %v516, %v497
    %521 = vrot.lane.b32.xlu0 %v473, 48
    %v522 = vpop.permute.xlu0 %521
    %vm524 = vcmask 130048
    %v525 = vsel %vm524, %v474, %v518
    %vm526 = vcmask 392192
    %v527 = vsel %vm526, %v525, %v522
    %v529 = vlaneseq
    %v530 = vshrl.u32 %v529, 7
    %v531 = vsub.s32 0, %v530
    %v532 = vrot.slane %v65, %v531
    %vm534 = vcmask 654336
    %v536 = vsel %vm534, %v527, 0
    %538 = vmatprep.subr.mxu0 0.0
    %539 = vmatpush1.msra.mxu0 %v55
    %540 = vmatprep.subr.mxu0 0.0
    %541 = vmatpush1.msra.mxu0 %v56
    %542 = vmatprep.subr.mxu0 0.0
    %543 = vmatpush1.msra.mxu0 %v57
    %544 = vmatprep.subr.mxu0 0.0
    %545 = vmatpush1.msra.mxu0 %v58
    %546 = vmatprep.subr.mxu0 0.0
    %547 = vmatpush1.msra.mxu0 %v59
    %548 = vmatprep.subr.mxu0 0.0
    %549 = vmatpush1.msra.mxu0 %v60
    %550 = vmatprep.subr.mxu0 0.0
    %551 = vmatpush1.msra.mxu0 %v61
    %552 = vmatprep.subr.mxu0 0.0
    %553 = vmatpush1.msra.mxu0 %v62
    %554 = vmatprep.subr.mxu0 0.0
    %555 = vmatpush1.msra.mxu0 %v63
    %556 = vmatprep.subr.mxu0 0.0
    %557 = vmatpush1.msra.mxu0 %v64
    %558 = vmatprep.subr.mxu0 0.0
    %559 = vmatpush1.msra.mxu0 0.0
    %560 = vmatprep.subr.mxu0 0.0
    %561 = vmatpush1.msra.mxu0 0.0
    %562 = vmatprep.subr.mxu0 0.0
    %563 = vmatpush1.msra.mxu0 0.0
    %564 = vmatprep.subr.mxu0 0.0
    %565 = vmatpush1.msra.mxu0 0.0
    %566 = vmatprep.subr.mxu0 0.0
    %567 = vmatpush1.msra.mxu0 0.0
    %568 = vmatprep.subr.mxu0 0.0
    %569 = vmatpush1.msra.mxu0 0.0
    %570 = vmatprep.subr.mxu0 0.0
    %571 = vmatpush1.msra.mxu0 0.0
    %572 = vmatprep.subr.mxu0 0.0
    %573 = vmatpush1.msra.mxu0 0.0
    %574 = vmatprep.subr.mxu0 0.0
    %575 = vmatpush1.msra.mxu0 0.0
    %576 = vmatprep.subr.mxu0 0.0
    %577 = vmatpush1.msra.mxu0 0.0
    %578 = vmatprep.subr.mxu0 0.0
    %579 = vmatpush1.msra.mxu0 0.0
    %580 = vmatprep.subr.mxu0 0.0
    %581 = vmatpush1.msra.mxu0 0.0
    %582 = vmatprep.subr.mxu0 0.0
    %583 = vmatpush1.msra.mxu0 0.0
    %584 = vmatprep.subr.mxu0 0.0
    %585 = vmatpush1.msra.mxu0 0.0
    %586 = vmatprep.subr.mxu0 0.0
    %587 = vmatpush1.msra.mxu0 0.0
    %588 = vmatprep.subr.mxu0 0.0
    %589 = vmatpush1.msra.mxu0 0.0
    %590 = vmatprep.subr.mxu0 0.0
    %591 = vmatpush1.msra.mxu0 0.0
    %592 = vmatprep.subr.mxu0 0.0
    %593 = vmatpush1.msra.mxu0 0.0
    %594 = vmatprep.subr.mxu0 0.0
    %595 = vmatpush1.msra.mxu0 0.0
    %596 = vmatprep.subr.mxu0 0.0
    %597 = vmatpush1.msra.mxu0 0.0
    %598 = vmatprep.subr.mxu0 0.0
    %599 = vmatpush1.msra.mxu0 0.0
    %600 = vmatprep.subr.mxu0 0.0
    %601 = vmatpush1.msra.mxu0 0.0
    %602 = vmatprep.mubr.f32.mxu0 0.0
    %603 = vmatmul.mubr.f32.gmra.mrb[0].mxu0 %v536
    %v604 = vpop.f32.mrb[0].mxu0
    %v605 = vadd.f32 %v532, %v604
    %v606 = vpop.f32.mrb[0].mxu0
    %607 = vdwg.mxu0
    %v608 = vxor.u32 %v605, 2147483648
    %v609 = vmul.f32 %v608, 1.442695
    %v610 = vpow.pop %v609
    %v611 = vadd.f32 %v610, 1.0
    %v612 = vrcp.pop %v611
    %v613 = vmul.f32 1.0, %v612
    %v614 = vtanh.pop %v605
    %v615 = vlaneseq
    %v616 = vshrl.u32 %v615, 7
    %v617 = vsub.s32 %v484, %v616
    %v618 = vrot.slane %v92, %v617
    %v619 = vlaneseq
    %v620 = vshrl.u32 %v619, 7
    %v621 = vsub.s32 %v491, %v620
    %v622 = vrot.slane %v93, %v621
    %v623 = vsel %vm496, %v622, %v618
    %v624 = vadd.s32 %v105, 4294967248
    %v625 = vlaneseq
    %v626 = vshrl.u32 %v625, 7
    %v627 = vsub.s32 %v624, %v626
    %v628 = vrot.slane %v94, %v627
    %vm629 = vcmask 458112
    %v630 = vsel %vm629, %v628, %v623
    %v631 = vadd.s32 %v105, 4294967240
    %v632 = vlaneseq
    %v633 = vshrl.u32 %v632, 7
    %v634 = vsub.s32 %v631, %v633
    %v635 = vrot.slane %v95, %v634
    %vm636 = vcmask 523712
    %v637 = vsel %vm636, %v635, %v630
    %v638 = vlaneseq
    %v639 = vshrl.u32 %v638, 7
    %v640 = vsub.s32 %v484, %v639
    %v641 = vrot.slane %v96, %v640
    %v642 = vlaneseq
    %v643 = vshrl.u32 %v642, 7
    %v644 = vsub.s32 %v491, %v643
    %v645 = vrot.slane %v97, %v644
    %v646 = vsel %vm496, %v645, %v641
    %v647 = vlaneseq
    %v648 = vshrl.u32 %v647, 7
    %v649 = vsub.s32 %v624, %v648
    %v650 = vrot.slane %v98, %v649
    %v651 = vsel %vm629, %v650, %v646
    %v652 = vlaneseq
    %v653 = vshrl.u32 %v652, 7
    %v654 = vsub.s32 %v631, %v653
    %v655 = vrot.slane %v99, %v654
    %v656 = vsel %vm636, %v655, %v651
    %v657 = vsel %vm517, %v656, %v637
    %v659 = vmul.f32 %v613, %v657
    %661 = vrot.lane.b32.xlu0 %v614, 32
    %v662 = vpop.permute.xlu0 %661
    %v664 = vmul.f32 %v613, %v662
    %666 = vrot.lane.b32.xlu0 %v664, 32
    %v667 = vpop.permute.xlu0 %666
    %v669 = vadd.f32 %v659, %v667
    %v670 = vtanh.pop %v669
    %672 = vrot.lane.b32.xlu0 %v670, 32
    %v673 = vpop.permute.xlu0 %672
    %v675 = vmul.f32 %v613, %v673
    %677 = vrot.lane.b32.xlu0 %v675, 64
    %v678 = vpop.permute.xlu0 %677
    %vm680 = vcmask 254976
    %681 = vst.msk [vmem:[#allocation2] sm:$0x3] %vm680, %v678
    %v682 = vsel %vm131, %v678, 0
    %684 = vmatprep.subr.mxu0 0.0
    %685 = vmatpush1.msra.mxu0 %v21
    %686 = vmatprep.subr.mxu0 0.0
    %687 = vmatpush1.msra.mxu0 %v22
    %688 = vmatprep.subr.mxu0 0.0
    %689 = vmatpush1.msra.mxu0 %v23
    %690 = vmatprep.subr.mxu0 0.0
    %691 = vmatpush1.msra.mxu0 %v24
    %692 = vmatprep.subr.mxu0 0.0
    %693 = vmatpush1.msra.mxu0 0.0
    %694 = vmatprep.subr.mxu0 0.0
    %695 = vmatpush1.msra.mxu0 0.0
    %696 = vmatprep.subr.mxu0 0.0
    %697 = vmatpush1.msra.mxu0 0.0
    %698 = vmatprep.subr.mxu0 0.0
    %699 = vmatpush1.msra.mxu0 0.0
    %700 = vmatprep.subr.mxu0 0.0
    %701 = vmatpush1.msra.mxu0 0.0
    %702 = vmatprep.subr.mxu0 0.0
    %703 = vmatpush1.msra.mxu0 0.0
    %704 = vmatprep.subr.mxu0 0.0
    %705 = vmatpush1.msra.mxu0 0.0
    %706 = vmatprep.subr.mxu0 0.0
    %707 = vmatpush1.msra.mxu0 0.0
    %708 = vmatprep.subr.mxu0 0.0
    %709 = vmatpush1.msra.mxu0 0.0
    %710 = vmatprep.subr.mxu0 0.0
    %711 = vmatpush1.msra.mxu0 0.0
    %712 = vmatprep.subr.mxu0 0.0
    %713 = vmatpush1.msra.mxu0 0.0
    %714 = vmatprep.subr.mxu0 0.0
    %715 = vmatpush1.msra.mxu0 0.0
    %716 = vmatprep.subr.mxu0 0.0
    %717 = vmatpush1.msra.mxu0 0.0
    %718 = vmatprep.subr.mxu0 0.0
    %719 = vmatpush1.msra.mxu0 0.0
    %720 = vmatprep.subr.mxu0 0.0
    %721 = vmatpush1.msra.mxu0 0.0
    %722 = vmatprep.subr.mxu0 0.0
    %723 = vmatpush1.msra.mxu0 0.0
    %724 = vmatprep.subr.mxu0 0.0
    %725 = vmatpush1.msra.mxu0 0.0
    %726 = vmatprep.subr.mxu0 0.0
    %727 = vmatpush1.msra.mxu0 0.0
    %728 = vmatprep.subr.mxu0 0.0
    %729 = vmatpush1.msra.mxu0 0.0
    %730 = vmatprep.subr.mxu0 0.0
    %731 = vmatpush1.msra.mxu0 0.0
    %732 = vmatprep.subr.mxu0 0.0
    %733 = vmatpush1.msra.mxu0 0.0
    %734 = vmatprep.subr.mxu0 0.0
    %735 = vmatpush1.msra.mxu0 0.0
    %736 = vmatprep.subr.mxu0 0.0
    %737 = vmatpush1.msra.mxu0 0.0
    %738 = vmatprep.subr.mxu0 0.0
    %739 = vmatpush1.msra.mxu0 0.0
    %740 = vmatprep.subr.mxu0 0.0
    %741 = vmatpush1.msra.mxu0 0.0
    %742 = vmatprep.subr.mxu0 0.0
    %743 = vmatpush1.msra.mxu0 0.0
    %744 = vmatprep.subr.mxu0 0.0
    %745 = vmatpush1.msra.mxu0 0.0
    %746 = vmatprep.subr.mxu0 0.0
    %747 = vmatpush1.msra.mxu0 0.0
    %748 = vmatprep.mubr.f32.mxu0 0.0
    %749 = vmatmul.mubr.f32.gmra.mrb[0].mxu0 %v682
    %v750 = vpop.f32.mrb[0].mxu0
    %v751 = vadd.f32 0.0, %v750
    %v752 = vpop.f32.mrb[0].mxu0
    %753 = vdwg.mxu0
    %v754 = vrot.slane %v675, 1
    %755 = vrot.lane.b32.xlu0 %v754, 64
    %v756 = vpop.permute.xlu0 %755
    %v757 = vsel %vm131, %v756, 0
    %759 = vmatprep.subr.mxu0 0.0
    %760 = vmatpush1.msra.mxu0 %v25
    %761 = vmatprep.subr.mxu0 0.0
    %762 = vmatpush1.msra.mxu0 %v26
    %763 = vmatprep.subr.mxu0 0.0
    %764 = vmatpush1.msra.mxu0 %v27
    %765 = vmatprep.subr.mxu0 0.0
    %766 = vmatpush1.msra.mxu0 %v28
    %767 = vmatprep.subr.mxu0 0.0
    %768 = vmatpush1.msra.mxu0 0.0
    %769 = vmatprep.subr.mxu0 0.0
    %770 = vmatpush1.msra.mxu0 0.0
    %771 = vmatprep.subr.mxu0 0.0
    %772 = vmatpush1.msra.mxu0 0.0
    %773 = vmatprep.subr.mxu0 0.0
    %774 = vmatpush1.msra.mxu0 0.0
    %775 = vmatprep.subr.mxu0 0.0
    %776 = vmatpush1.msra.mxu0 0.0
    %777 = vmatprep.subr.mxu0 0.0
    %778 = vmatpush1.msra.mxu0 0.0
    %779 = vmatprep.subr.mxu0 0.0
    %780 = vmatpush1.msra.mxu0 0.0
    %781 = vmatprep.subr.mxu0 0.0
    %782 = vmatpush1.msra.mxu0 0.0
    %783 = vmatprep.subr.mxu0 0.0
    %784 = vmatpush1.msra.mxu0 0.0
    %785 = vmatprep.subr.mxu0 0.0
    %786 = vmatpush1.msra.mxu0 0.0
    %787 = vmatprep.subr.mxu0 0.0
    %788 = vmatpush1.msra.mxu0 0.0
    %789 = vmatprep.subr.mxu0 0.0
    %790 = vmatpush1.msra.mxu0 0.0
    %791 = vmatprep.subr.mxu0 0.0
    %792 = vmatpush1.msra.mxu0 0.0
    %793 = vmatprep.subr.mxu0 0.0
    %794 = vmatpush1.msra.mxu0 0.0
    %795 = vmatprep.subr.mxu0 0.0
    %796 = vmatpush1.msra.mxu0 0.0
    %797 = vmatprep.subr.mxu0 0.0
    %798 = vmatpush1.msra.mxu0 0.0
    %799 = vmatprep.subr.mxu0 0.0
    %800 = vmatpush1.msra.mxu0 0.0
    %801 = vmatprep.subr.mxu0 0.0
    %802 = vmatpush1.msra.mxu0 0.0
    %803 = vmatprep.subr.mxu0 0.0
    %804 = vmatpush1.msra.mxu0 0.0
    %805 = vmatprep.subr.mxu0 0.0
    %806 = vmatpush1.msra.mxu0 0.0
    %807 = vmatprep.subr.mxu0 0.0
    %808 = vmatpush1.msra.mxu0 0.0
    %809 = vmatprep.subr.mxu0 0.0
    %810 = vmatpush1.msra.mxu0 0.0
    %811 = vmatprep.subr.mxu0 0.0
    %812 = vmatpush1.msra.mxu0 0.0
    %813 = vmatprep.subr.mxu0 0.0
    %814 = vmatpush1.msra.mxu0 0.0
    %815 = vmatprep.subr.mxu0 0.0
    %816 = vmatpush1.msra.mxu0 0.0
    %817 = vmatprep.subr.mxu0 0.0
    %818 = vmatpush1.msra.mxu0 0.0
    %819 = vmatprep.subr.mxu0 0.0
    %820 = vmatpush1.msra.mxu0 0.0
    %821 = vmatprep.subr.mxu0 0.0
    %822 = vmatpush1.msra.mxu0 0.0
    %823 = vmatprep.mubr.f32.mxu0 0.0
    %824 = vmatmul.mubr.f32.gmra.mrb[0].mxu0 %v757
    %v825 = vpop.f32.mrb[0].mxu0
    %v826 = vadd.f32 0.0, %v825
    %v827 = vpop.f32.mrb[0].mxu0
    %828 = vdwg.mxu0
    %v830 = vrot.slane %v826, 7
    %v832 = vsel %vm302, %v751, %v830
    %v833 = vmul.f32 %v832, 0.17677669
    %v834 = vsel %vm305, %v833, -inf
    %835 = vmax.xlane.f32.xlu0 %v834
    %v836 = vpop.xlane.xlu0 %835
    %v837 = vsub.f32 %v833, %v836
    %v838 = vmul.f32 %v837, 1.442695
    %v839 = vpow.pop %v838
    %v840 = vsel %vm305, %v839, 0.0
    %841 = vadd.xlane.f32.xlu0 %v840
    %v842 = vpop.xlane.xlu0 %841
    %v843 = vrcp.pop %v842
    %v844 = vmul.f32 %v839, %v843
    %v846 = vsel %vm66, %v844, 0
    %848 = vmatprep.subr.mxu0 0.0
    %849 = vmatpush1.msra.mxu0 %v29
    %850 = vmatprep.subr.mxu0 0.0
    %851 = vmatpush1.msra.mxu0 %v30
    %852 = vmatprep.subr.mxu0 0.0
    %853 = vmatpush1.msra.mxu0 %v31
    %854 = vmatprep.subr.mxu0 0.0
    %855 = vmatpush1.msra.mxu0 %v32
    %856 = vmatprep.subr.mxu0 0.0
    %857 = vmatpush1.msra.mxu0 %v33
    %858 = vmatprep.subr.mxu0 0.0
    %859 = vmatpush1.msra.mxu0 %v34
    %860 = vmatprep.subr.mxu0 0.0
    %861 = vmatpush1.msra.mxu0 %v35
    %862 = vmatprep.subr.mxu0 0.0
    %863 = vmatpush1.msra.mxu0 %v36
    %864 = vmatprep.subr.mxu0 0.0
    %865 = vmatpush1.msra.mxu0 %v37
    %866 = vmatprep.subr.mxu0 0.0
    %867 = vmatpush1.msra.mxu0 %v38
    %868 = vmatprep.subr.mxu0 0.0
    %869 = vmatpush1.msra.mxu0 %v39
    %870 = vmatprep.subr.mxu0 0.0
    %871 = vmatpush1.msra.mxu0 %v40
    %872 = vmatprep.subr.mxu0 0.0
    %873 = vmatpush1.msra.mxu0 %v322
    %874 = vmatprep.subr.mxu0 0.0
    %875 = vmatpush1.msra.mxu0 0.0
    %876 = vmatprep.subr.mxu0 0.0
    %877 = vmatpush1.msra.mxu0 0.0
    %878 = vmatprep.subr.mxu0 0.0
    %879 = vmatpush1.msra.mxu0 0.0
    %880 = vmatprep.subr.mxu0 0.0
    %881 = vmatpush1.msra.mxu0 0.0
    %882 = vmatprep.subr.mxu0 0.0
    %883 = vmatpush1.msra.mxu0 0.0
    %884 = vmatprep.subr.mxu0 0.0
    %885 = vmatpush1.msra.mxu0 0.0
    %886 = vmatprep.subr.mxu0 0.0
    %887 = vmatpush1.msra.mxu0 0.0
    %888 = vmatprep.subr.mxu0 0.0
    %889 = vmatpush1.msra.mxu0 0.0
    %890 = vmatprep.subr.mxu0 0.0
    %891 = vmatpush1.msra.mxu0 0.0
    %892 = vmatprep.subr.mxu0 0.0
    %893 = vmatpush1.msra.mxu0 0.0
    %894 = vmatprep.subr.mxu0 0.0
    %895 = vmatpush1.msra.mxu0 0.0
    %896 = vmatprep.subr.mxu0 0.0
    %897 = vmatpush1.msra.mxu0 0.0
    %898 = vmatprep.subr.mxu0 0.0
    %899 = vmatpush1.msra.mxu0 0.0
    %900 = vmatprep.subr.mxu0 0.0
    %901 = vmatpush1.msra.mxu0 0.0
    %902 = vmatprep.subr.mxu0 0.0
    %903 = vmatpush1.msra.mxu0 0.0
    %904 = vmatprep.subr.mxu0 0.0
    %905 = vmatpush1.msra.mxu0 0.0
    %906 = vmatprep.subr.mxu0 0.0
    %907 = vmatpush1.msra.mxu0 0.0
    %908 = vmatprep.subr.mxu0 0.0
    %909 = vmatpush1.msra.mxu0 0.0
    %910 = vmatprep.subr.mxu0 0.0
    %911 = vmatpush1.msra.mxu0 0.0
    %912 = vmatprep.mubr.f32.mxu0 0.0
    %913 = vmatmul.mubr.f32.gmra.mrb[0].mxu0 %v846
    %v914 = vpop.f32.mrb[0].mxu0
    %v915 = vadd.f32 0.0, %v914
    %v916 = vpop.f32.mrb[0].mxu0
    %917 = vdwg.mxu0
    %v918 = vrot.slane %v844, 1
    %v919 = vsel %vm66, %v918, 0
    %921 = vmatprep.subr.mxu0 0.0
    %922 = vmatpush1.msra.mxu0 %v42
    %923 = vmatprep.subr.mxu0 0.0
    %924 = vmatpush1.msra.mxu0 %v43
    %925 = vmatprep.subr.mxu0 0.0
    %926 = vmatpush1.msra.mxu0 %v44
    %927 = vmatprep.subr.mxu0 0.0
    %928 = vmatpush1.msra.mxu0 %v45
    %929 = vmatprep.subr.mxu0 0.0
    %930 = vmatpush1.msra.mxu0 %v46
    %931 = vmatprep.subr.mxu0 0.0
    %932 = vmatpush1.msra.mxu0 %v47
    %933 = vmatprep.subr.mxu0 0.0
    %934 = vmatpush1.msra.mxu0 %v48
    %935 = vmatprep.subr.mxu0 0.0
    %936 = vmatpush1.msra.mxu0 %v49
    %937 = vmatprep.subr.mxu0 0.0
    %938 = vmatpush1.msra.mxu0 %v50
    %939 = vmatprep.subr.mxu0 0.0
    %940 = vmatpush1.msra.mxu0 %v51
    %941 = vmatprep.subr.mxu0 0.0
    %942 = vmatpush1.msra.mxu0 %v52
    %943 = vmatprep.subr.mxu0 0.0
    %944 = vmatpush1.msra.mxu0 %v53
    %945 = vmatprep.subr.mxu0 0.0
    %946 = vmatpush1.msra.mxu0 %v398
    %947 = vmatprep.subr.mxu0 0.0
    %948 = vmatpush1.msra.mxu0 0.0
    %949 = vmatprep.subr.mxu0 0.0
    %950 = vmatpush1.msra.mxu0 0.0
    %951 = vmatprep.subr.mxu0 0.0
    %952 = vmatpush1.msra.mxu0 0.0
    %953 = vmatprep.subr.mxu0 0.0
    %954 = vmatpush1.msra.mxu0 0.0
    %955 = vmatprep.subr.mxu0 0.0
    %956 = vmatpush1.msra.mxu0 0.0
    %957 = vmatprep.subr.mxu0 0.0
    %958 = vmatpush1.msra.mxu0 0.0
    %959 = vmatprep.subr.mxu0 0.0
    %960 = vmatpush1.msra.mxu0 0.0
    %961 = vmatprep.subr.mxu0 0.0
    %962 = vmatpush1.msra.mxu0 0.0
    %963 = vmatprep.subr.mxu0 0.0
    %964 = vmatpush1.msra.mxu0 0.0
    %965 = vmatprep.subr.mxu0 0.0
    %966 = vmatpush1.msra.mxu0 0.0
    %967 = vmatprep.subr.mxu0 0.0
    %968 = vmatpush1.msra.mxu0 0.0
    %969 = vmatprep.subr.mxu0 0.0
    %970 = vmatpush1.msra.mxu0 0.0
    %971 = vmatprep.subr.mxu0 0.0
    %972 = vmatpush1.msra.mxu0 0.0
    %973 = vmatprep.subr.mxu0 0.0
    %974 = vmatpush1.msra.mxu0 0.0
    %975 = vmatprep.subr.mxu0 0.0
    %976 = vmatpush1.msra.mxu0 0.0
    %977 = vmatprep.subr.mxu0 0.0
    %978 = vmatpush1.msra.mxu0 0.0
    %979 = vmatprep.subr.mxu0 0.0
    %980 = vmatpush1.msra.mxu0 0.0
    %981 = vmatprep.subr.mxu0 0.0
    %982 = vmatpush1.msra.mxu0 0.0
    %983 = vmatprep.subr.mxu0 0.0
    %984 = vmatpush1.msra.mxu0 0.0
    %985 = vmatprep.mubr.f32.mxu0 0.0
    %986 = vmatmul.mubr.f32.gmra.mrb[0].mxu0 %v919
    %v987 = vpop.f32.mrb[0].mxu0
    %v988 = vadd.f32 0.0, %v987
    %v989 = vpop.f32.mrb[0].mxu0
    %990 = vdwg.mxu0
    %v992 = vrot.slane %v988, 7
    %v994 = vsel %vm302, %v915, %v992
    %s995 = scalar_lea.vmem %s0, 2
    %v996 = vld [vmem:[%s995] sm:$0x3]
    %997 = vrot.lane.b32.xlu0 %v675, 80
    %v998 = vpop.permute.xlu0 %997
    %1001 = vrot.lane.b32.xlu0 %v994, 48
    %v1002 = vpop.permute.xlu0 %1001
    %v1004 = vsel %vm524, %v996, %v998
    %v1005 = vsel %vm526, %v1004, %v1002
    %v1007 = vsel %vm534, %v1005, 0
    %1009 = vmatprep.subr.mxu0 0.0
    %1010 = vmatpush1.msra.mxu0 %v55
    %1011 = vmatprep.subr.mxu0 0.0
    %1012 = vmatpush1.msra.mxu0 %v56
    %1013 = vmatprep.subr.mxu0 0.0
    %1014 = vmatpush1.msra.mxu0 %v57
    %1015 = vmatprep.subr.mxu0 0.0
    %1016 = vmatpush1.msra.mxu0 %v58
    %1017 = vmatprep.subr.mxu0 0.0
    %1018 = vmatpush1.msra.mxu0 %v59
    %1019 = vmatprep.subr.mxu0 0.0
    %1020 = vmatpush1.msra.mxu0 %v60
    %1021 = vmatprep.subr.mxu0 0.0
    %1022 = vmatpush1.msra.mxu0 %v61
    %1023 = vmatprep.subr.mxu0 0.0
    %1024 = vmatpush1.msra.mxu0 %v62
    %1025 = vmatprep.subr.mxu0 0.0
    %1026 = vmatpush1.msra.mxu0 %v63
    %1027 = vmatprep.subr.mxu0 0.0
    %1028 = vmatpush1.msra.mxu0 %v64
    %1029 = vmatprep.subr.mxu0 0.0
    %1030 = vmatpush1.msra.mxu0 0.0
    %1031 = vmatprep.subr.mxu0 0.0
    %1032 = vmatpush1.msra.mxu0 0.0
    %1033 = vmatprep.subr.mxu0 0.0
    %1034 = vmatpush1.msra.mxu0 0.0
    %1035 = vmatprep.subr.mxu0 0.0
    %1036 = vmatpush1.msra.mxu0 0.0
    %1037 = vmatprep.subr.mxu0 0.0
    %1038 = vmatpush1.msra.mxu0 0.0
    %1039 = vmatprep.subr.mxu0 0.0
    %1040 = vmatpush1.msra.mxu0 0.0
    %1041 = vmatprep.subr.mxu0 0.0
    %1042 = vmatpush1.msra.mxu0 0.0
    %1043 = vmatprep.subr.mxu0 0.0
    %1044 = vmatpush1.msra.mxu0 0.0
    %1045 = vmatprep.subr.mxu0 0.0
    %1046 = vmatpush1.msra.mxu0 0.0
    %1047 = vmatprep.subr.mxu0 0.0
    %1048 = vmatpush1.msra.mxu0 0.0
    %1049 = vmatprep.subr.mxu0 0.0
    %1050 = vmatpush1.msra.mxu0 0.0
    %1051 = vmatprep.subr.mxu0 0.0
    %1052 = vmatpush1.msra.mxu0 0.0
    %1053 = vmatprep.subr.mxu0 0.0
    %1054 = vmatpush1.msra.mxu0 0.0
    %1055 = vmatprep.subr.mxu0 0.0
    %1056 = vmatpush1.msra.mxu0 0.0
    %1057 = vmatprep.subr.mxu0 0.0
    %1058 = vmatpush1.msra.mxu0 0.0
    %1059 = vmatprep.subr.mxu0 0.0
    %1060 = vmatpush1.msra.mxu0 0.0
    %1061 = vmatprep.subr.mxu0 0.0
    %1062 = vmatpush1.msra.mxu0 0.0
    %1063 = vmatprep.subr.mxu0 0.0
    %1064 = vmatpush1.msra.mxu0 0.0
    %1065 = vmatprep.subr.mxu0 0.0
    %1066 = vmatpush1.msra.mxu0 0.0
    %1067 = vmatprep.subr.mxu0 0.0
    %1068 = vmatpush1.msra.mxu0 0.0
    %1069 = vmatprep.subr.mxu0 0.0
    %1070 = vmatpush1.msra.mxu0 0.0
    %1071 = vmatprep.subr.mxu0 0.0
    %1072 = vmatpush1.msra.mxu0 0.0
    %1073 = vmatprep.mubr.f32.mxu0 0.0
    %1074 = vmatmul.mubr.f32.gmra.mrb[0].mxu0 %v1007
    %v1075 = vpop.f32.mrb[0].mxu0
    %v1076 = vadd.f32 %v532, %v1075
    %v1077 = vpop.f32.mrb[0].mxu0
    %1078 = vdwg.mxu0
    %v1079 = vxor.u32 %v1076, 2147483648
    %v1080 = vmul.f32 %v1079, 1.442695
    %v1081 = vpow.pop %v1080
    %v1082 = vadd.f32 %v1081, 1.0
    %v1083 = vrcp.pop %v1082
    %v1084 = vmul.f32 1.0, %v1083
    %v1085 = vtanh.pop %v1076
    %v1086 = vmul.f32 %v1084, %v669
    %1088 = vrot.lane.b32.xlu0 %v1085, 32
    %v1089 = vpop.permute.xlu0 %1088
    %v1091 = vmul.f32 %v1084, %v1089
    %1093 = vrot.lane.b32.xlu0 %v1091, 32
    %v1094 = vpop.permute.xlu0 %1093
    %v1096 = vadd.f32 %v1086, %v1094
    %v1097 = vtanh.pop %v1096
    %1099 = vrot.lane.b32.xlu0 %v1097, 32
    %v1100 = vpop.permute.xlu0 %1099
    %v1102 = vmul.f32 %v1084, %v1100
    %1104 = vrot.lane.b32.xlu0 %v1102, 64
    %v1105 = vpop.permute.xlu0 %1104
    %s1107 = scalar_lea.vmem [#allocation2], 2
    %1108 = vst.msk [vmem:[%s1107] sm:$0x3] %vm680, %v1105
    %v1109 = vsel %vm131, %v1105, 0
    %1111 = vmatprep.subr.mxu0 0.0
    %1112 = vmatpush1.msra.mxu0 %v21
    %1113 = vmatprep.subr.mxu0 0.0
    %1114 = vmatpush1.msra.mxu0 %v22
    %1115 = vmatprep.subr.mxu0 0.0
    %1116 = vmatpush1.msra.mxu0 %v23
    %1117 = vmatprep.subr.mxu0 0.0
    %1118 = vmatpush1.msra.mxu0 %v24
    %1119 = vmatprep.subr.mxu0 0.0
    %1120 = vmatpush1.msra.mxu0 0.0
    %1121 = vmatprep.subr.mxu0 0.0
    %1122 = vmatpush1.msra.mxu0 0.0
    %1123 = vmatprep.subr.mxu0 0.0
    %1124 = vmatpush1.msra.mxu0 0.0
    %1125 = vmatprep.subr.mxu0 0.0
    %1126 = vmatpush1.msra.mxu0 0.0
    %1127 = vmatprep.subr.mxu0 0.0
    %1128 = vmatpush1.msra.mxu0 0.0
    %1129 = vmatprep.subr.mxu0 0.0
    %1130 = vmatpush1.msra.mxu0 0.0
    %1131 = vmatprep.subr.mxu0 0.0
    %1132 = vmatpush1.msra.mxu0 0.0
    %1133 = vmatprep.subr.mxu0 0.0
    %1134 = vmatpush1.msra.mxu0 0.0
    %1135 = vmatprep.subr.mxu0 0.0
    %1136 = vmatpush1.msra.mxu0 0.0
    %1137 = vmatprep.subr.mxu0 0.0
    %1138 = vmatpush1.msra.mxu0 0.0
    %1139 = vmatprep.subr.mxu0 0.0
    %1140 = vmatpush1.msra.mxu0 0.0
    %1141 = vmatprep.subr.mxu0 0.0
    %1142 = vmatpush1.msra.mxu0 0.0
    %1143 = vmatprep.subr.mxu0 0.0
    %1144 = vmatpush1.msra.mxu0 0.0
    %1145 = vmatprep.subr.mxu0 0.0
    %1146 = vmatpush1.msra.mxu0 0.0
    %1147 = vmatprep.subr.mxu0 0.0
    %1148 = vmatpush1.msra.mxu0 0.0
    %1149 = vmatprep.subr.mxu0 0.0
    %1150 = vmatpush1.msra.mxu0 0.0
    %1151 = vmatprep.subr.mxu0 0.0
    %1152 = vmatpush1.msra.mxu0 0.0
    %1153 = vmatprep.subr.mxu0 0.0
    %1154 = vmatpush1.msra.mxu0 0.0
    %1155 = vmatprep.subr.mxu0 0.0
    %1156 = vmatpush1.msra.mxu0 0.0
    %1157 = vmatprep.subr.mxu0 0.0
    %1158 = vmatpush1.msra.mxu0 0.0
    %1159 = vmatprep.subr.mxu0 0.0
    %1160 = vmatpush1.msra.mxu0 0.0
    %1161 = vmatprep.subr.mxu0 0.0
    %1162 = vmatpush1.msra.mxu0 0.0
    %1163 = vmatprep.subr.mxu0 0.0
    %1164 = vmatpush1.msra.mxu0 0.0
    %1165 = vmatprep.subr.mxu0 0.0
    %1166 = vmatpush1.msra.mxu0 0.0
    %1167 = vmatprep.subr.mxu0 0.0
    %1168 = vmatpush1.msra.mxu0 0.0
    %1169 = vmatprep.subr.mxu0 0.0
    %1170 = vmatpush1.msra.mxu0 0.0
    %1171 = vmatprep.subr.mxu0 0.0
    %1172 = vmatpush1.msra.mxu0 0.0
    %1173 = vmatprep.subr.mxu0 0.0
    %1174 = vmatpush1.msra.mxu0 0.0
    %1175 = vmatprep.mubr.f32.mxu0 0.0
    %1176 = vmatmul.mubr.f32.gmra.mrb[0].mxu0 %v1109
    %v1177 = vpop.f32.mrb[0].mxu0
    %v1178 = vadd.f32 0.0, %v1177
    %v1179 = vpop.f32.mrb[0].mxu0
    %1180 = vdwg.mxu0
    %v1181 = vrot.slane %v1102, 1
    %1182 = vrot.lane.b32.xlu0 %v1181, 64
    %v1183 = vpop.permute.xlu0 %1182
    %v1184 = vsel %vm131, %v1183, 0
    %1186 = vmatprep.subr.mxu0 0.0
    %1187 = vmatpush1.msra.mxu0 %v25
    %1188 = vmatprep.subr.mxu0 0.0
    %1189 = vmatpush1.msra.mxu0 %v26
    %1190 = vmatprep.subr.mxu0 0.0
    %1191 = vmatpush1.msra.mxu0 %v27
    %1192 = vmatprep.subr.mxu0 0.0
    %1193 = vmatpush1.msra.mxu0 %v28
    %1194 = vmatprep.subr.mxu0 0.0
    %1195 = vmatpush1.msra.mxu0 0.0
    %1196 = vmatprep.subr.mxu0 0.0
    %1197 = vmatpush1.msra.mxu0 0.0
    %1198 = vmatprep.subr.mxu0 0.0
    %1199 = vmatpush1.msra.mxu0 0.0
    %1200 = vmatprep.subr.mxu0 0.0
    %1201 = vmatpush1.msra.mxu0 0.0
    %1202 = vmatprep.subr.mxu0 0.0
    %1203 = vmatpush1.msra.mxu0 0.0
    %1204 = vmatprep.subr.mxu0 0.0
    %1205 = vmatpush1.msra.mxu0 0.0
    %1206 = vmatprep.subr.mxu0 0.0
    %1207 = vmatpush1.msra.mxu0 0.0
    %1208 = vmatprep.subr.mxu0 0.0
    %1209 = vmatpush1.msra.mxu0 0.0
    %1210 = vmatprep.subr.mxu0 0.0
    %1211 = vmatpush1.msra.mxu0 0.0
    %1212 = vmatprep.subr.mxu0 0.0
    %1213 = vmatpush1.msra.mxu0 0.0
    %1214 = vmatprep.subr.mxu0 0.0
    %1215 = vmatpush1.msra.mxu0 0.0
    %1216 = vmatprep.subr.mxu0 0.0
    %1217 = vmatpush1.msra.mxu0 0.0
    %1218 = vmatprep.subr.mxu0 0.0
    %1219 = vmatpush1.msra.mxu0 0.0
    %1220 = vmatprep.subr.mxu0 0.0
    %1221 = vmatpush1.msra.mxu0 0.0
    %1222 = vmatprep.subr.mxu0 0.0
    %1223 = vmatpush1.msra.mxu0 0.0
    %1224 = vmatprep.subr.mxu0 0.0
    %1225 = vmatpush1.msra.mxu0 0.0
    %1226 = vmatprep.subr.mxu0 0.0
    %1227 = vmatpush1.msra.mxu0 0.0
    %1228 = vmatprep.subr.mxu0 0.0
    %1229 = vmatpush1.msra.mxu0 0.0
    %1230 = vmatprep.subr.mxu0 0.0
    %1231 = vmatpush1.msra.mxu0 0.0
    %1232 = vmatprep.subr.mxu0 0.0
    %1233 = vmatpush1.msra.mxu0 0.0
    %1234 = vmatprep.subr.mxu0 0.0
    %1235 = vmatpush1.msra.mxu0 0.0
    %1236 = vmatprep.subr.mxu0 0.0
    %1237 = vmatpush1.msra.mxu0 0.0
    %1238 = vmatprep.subr.mxu0 0.0
    %1239 = vmatpush1.msra.mxu0 0.0
    %1240 = vmatprep.subr.mxu0 0.0
    %1241 = vmatpush1.msra.mxu0 0.0
    %1242 = vmatprep.subr.mxu0 0.0
    %1243 = vmatpush1.msra.mxu0 0.0
    %1244 = vmatprep.subr.mxu0 0.0
    %1245 = vmatpush1.msra.mxu0 0.0
    %1246 = vmatprep.subr.mxu0 0.0
    %1247 = vmatpush1.msra.mxu0 0.0
    %1248 = vmatprep.subr.mxu0 0.0
    %1249 = vmatpush1.msra.mxu0 0.0
    %1250 = vmatprep.mubr.f32.mxu0 0.0
    %1251 = vmatmul.mubr.f32.gmra.mrb[0].mxu0 %v1184
    %v1252 = vpop.f32.mrb[0].mxu0
    %v1253 = vadd.f32 0.0, %v1252
    %v1254 = vpop.f32.mrb[0].mxu0
    %1255 = vdwg.mxu0
    %v1257 = vrot.slane %v1253, 7
    %v1259 = vsel %vm302, %v1178, %v1257
    %v1260 = vmul.f32 %v1259, 0.17677669
    %v1261 = vsel %vm305, %v1260, -inf
    %1262 = vmax.xlane.f32.xlu0 %v1261
    %v1263 = vpop.xlane.xlu0 %1262
    %v1264 = vsub.f32 %v1260, %v1263
    %v1265 = vmul.f32 %v1264, 1.442695
    %v1266 = vpow.pop %v1265
    %v1267 = vsel %vm305, %v1266, 0.0
    %1268 = vadd.xlane.f32.xlu0 %v1267
    %v1269 = vpop.xlane.xlu0 %1268
    %v1270 = vrcp.pop %v1269
    %v1271 = vmul.f32 %v1266, %v1270
    %v1273 = vsel %vm66, %v1271, 0
    %1275 = vmatprep.subr.mxu0 0.0
    %1276 = vmatpush1.msra.mxu0 %v29
    %1277 = vmatprep.subr.mxu0 0.0
    %1278 = vmatpush1.msra.mxu0 %v30
    %1279 = vmatprep.subr.mxu0 0.0
    %1280 = vmatpush1.msra.mxu0 %v31
    %1281 = vmatprep.subr.mxu0 0.0
    %1282 = vmatpush1.msra.mxu0 %v32
    %1283 = vmatprep.subr.mxu0 0.0
    %1284 = vmatpush1.msra.mxu0 %v33
    %1285 = vmatprep.subr.mxu0 0.0
    %1286 = vmatpush1.msra.mxu0 %v34
    %1287 = vmatprep.subr.mxu0 0.0
    %1288 = vmatpush1.msra.mxu0 %v35
    %1289 = vmatprep.subr.mxu0 0.0
    %1290 = vmatpush1.msra.mxu0 %v36
    %1291 = vmatprep.subr.mxu0 0.0
    %1292 = vmatpush1.msra.mxu0 %v37
    %1293 = vmatprep.subr.mxu0 0.0
    %1294 = vmatpush1.msra.mxu0 %v38
    %1295 = vmatprep.subr.mxu0 0.0
    %1296 = vmatpush1.msra.mxu0 %v39
    %1297 = vmatprep.subr.mxu0 0.0
    %1298 = vmatpush1.msra.mxu0 %v40
    %1299 = vmatprep.subr.mxu0 0.0
    %1300 = vmatpush1.msra.mxu0 %v322
    %1301 = vmatprep.subr.mxu0 0.0
    %1302 = vmatpush1.msra.mxu0 0.0
    %1303 = vmatprep.subr.mxu0 0.0
    %1304 = vmatpush1.msra.mxu0 0.0
    %1305 = vmatprep.subr.mxu0 0.0
    %1306 = vmatpush1.msra.mxu0 0.0
    %1307 = vmatprep.subr.mxu0 0.0
    %1308 = vmatpush1.msra.mxu0 0.0
    %1309 = vmatprep.subr.mxu0 0.0
    %1310 = vmatpush1.msra.mxu0 0.0
    %1311 = vmatprep.subr.mxu0 0.0
    %1312 = vmatpush1.msra.mxu0 0.0
    %1313 = vmatprep.subr.mxu0 0.0
    %1314 = vmatpush1.msra.mxu0 0.0
    %1315 = vmatprep.subr.mxu0 0.0
    %1316 = vmatpush1.msra.mxu0 0.0
    %1317 = vmatprep.subr.mxu0 0.0
    %1318 = vmatpush1.msra.mxu0 0.0
    %1319 = vmatprep.subr.mxu0 0.0
    %1320 = vmatpush1.msra.mxu0 0.0
    %1321 = vmatprep.subr.mxu0 0.0
    %1322 = vmatpush1.msra.mxu0 0.0
    %1323 = vmatprep.subr.mxu0 0.0
    %1324 = vmatpush1.msra.mxu0 0.0
    %1325 = vmatprep.subr.mxu0 0.0
    %1326 = vmatpush1.msra.mxu0 0.0
    %1327 = vmatprep.subr.mxu0 0.0
    %1328 = vmatpush1.msra.mxu0 0.0
    %1329 = vmatprep.subr.mxu0 0.0
    %1330 = vmatpush1.msra.mxu0 0.0
    %1331 = vmatprep.subr.mxu0 0.0
    %1332 = vmatpush1.msra.mxu0 0.0
    %1333 = vmatprep.subr.mxu0 0.0
    %1334 = vmatpush1.msra.mxu0 0.0
    %1335 = vmatprep.subr.mxu0 0.0
    %1336 = vmatpush1.msra.mxu0 0.0
    %1337 = vmatprep.subr.mxu0 0.0
    %1338 = vmatpush1.msra.mxu0 0.0
    %1339 = vmatprep.mubr.f32.mxu0 0.0
    %1340 = vmatmul.mubr.f32.gmra.mrb[0].mxu0 %v1273
    %v1341 = vpop.f32.mrb[0].mxu0
    %v1342 = vadd.f32 0.0, %v1341
    %v1343 = vpop.f32.mrb[0].mxu0
    %1344 = vdwg.mxu0
    %v1345 = vrot.slane %v1271, 1
    %v1346 = vsel %vm66, %v1345, 0
    %1348 = vmatprep.subr.mxu0 0.0
    %1349 = vmatpush1.msra.mxu0 %v42
    %1350 = vmatprep.subr.mxu0 0.0
    %1351 = vmatpush1.msra.mxu0 %v43
    %1352 = vmatprep.subr.mxu0 0.0
    %1353 = vmatpush1.msra.mxu0 %v44
    %1354 = vmatprep.subr.mxu0 0.0
    %1355 = vmatpush1.msra.mxu0 %v45
    %1356 = vmatprep.subr.mxu0 0.0
    %1357 = vmatpush1.msra.mxu0 %v46
    %1358 = vmatprep.subr.mxu0 0.0
    %1359 = vmatpush1.msra.mxu0 %v47
    %1360 = vmatprep.subr.mxu0 0.0
    %1361 = vmatpush1.msra.mxu0 %v48
    %1362 = vmatprep.subr.mxu0 0.0
    %1363 = vmatpush1.msra.mxu0 %v49
    %1364 = vmatprep.subr.mxu0 0.0
    %1365 = vmatpush1.msra.mxu0 %v50
    %1366 = vmatprep.subr.mxu0 0.0
    %1367 = vmatpush1.msra.mxu0 %v51
    %1368 = vmatprep.subr.mxu0 0.0
    %1369 = vmatpush1.msra.mxu0 %v52
    %1370 = vmatprep.subr.mxu0 0.0
    %1371 = vmatpush1.msra.mxu0 %v53
    %1372 = vmatprep.subr.mxu0 0.0
    %1373 = vmatpush1.msra.mxu0 %v398
    %1374 = vmatprep.subr.mxu0 0.0
    %1375 = vmatpush1.msra.mxu0 0.0
    %1376 = vmatprep.subr.mxu0 0.0
    %1377 = vmatpush1.msra.mxu0 0.0
    %1378 = vmatprep.subr.mxu0 0.0
    %1379 = vmatpush1.msra.mxu0 0.0
    %1380 = vmatprep.subr.mxu0 0.0
    %1381 = vmatpush1.msra.mxu0 0.0
    %1382 = vmatprep.subr.mxu0 0.0
    %1383 = vmatpush1.msra.mxu0 0.0
    %1384 = vmatprep.subr.mxu0 0.0
    %1385 = vmatpush1.msra.mxu0 0.0
    %1386 = vmatprep.subr.mxu0 0.0
    %1387 = vmatpush1.msra.mxu0 0.0
    %1388 = vmatprep.subr.mxu0 0.0
    %1389 = vmatpush1.msra.mxu0 0.0
    %1390 = vmatprep.subr.mxu0 0.0
    %1391 = vmatpush1.msra.mxu0 0.0
    %1392 = vmatprep.subr.mxu0 0.0
    %1393 = vmatpush1.msra.mxu0 0.0
    %1394 = vmatprep.subr.mxu0 0.0
    %1395 = vmatpush1.msra.mxu0 0.0
    %1396 = vmatprep.subr.mxu0 0.0
    %1397 = vmatpush1.msra.mxu0 0.0
    %1398 = vmatprep.subr.mxu0 0.0
    %1399 = vmatpush1.msra.mxu0 0.0
    %1400 = vmatprep.subr.mxu0 0.0
    %1401 = vmatpush1.msra.mxu0 0.0
    %1402 = vmatprep.subr.mxu0 0.0
    %1403 = vmatpush1.msra.mxu0 0.0
    %1404 = vmatprep.subr.mxu0 0.0
    %1405 = vmatpush1.msra.mxu0 0.0
    %1406 = vmatprep.subr.mxu0 0.0
    %1407 = vmatpush1.msra.mxu0 0.0
    %1408 = vmatprep.subr.mxu0 0.0
    %1409 = vmatpush1.msra.mxu0 0.0
    %1410 = vmatprep.subr.mxu0 0.0
    %1411 = vmatpush1.msra.mxu0 0.0
    %1412 = vmatprep.mubr.f32.mxu0 0.0
    %1413 = vmatmul.mubr.f32.gmra.mrb[0].mxu0 %v1346
    %v1414 = vpop.f32.mrb[0].mxu0
    %v1415 = vadd.f32 0.0, %v1414
    %v1416 = vpop.f32.mrb[0].mxu0
    %1417 = vdwg.mxu0
    %v1419 = vrot.slane %v1415, 7
    %v1421 = vsel %vm302, %v1342, %v1419
    %s1422 = scalar_lea.vmem %s0, 4
    %v1423 = vld [vmem:[%s1422] sm:$0x3]
    %1424 = vrot.lane.b32.xlu0 %v1102, 80
    %v1425 = vpop.permute.xlu0 %1424
    %1428 = vrot.lane.b32.xlu0 %v1421, 48
    %v1429 = vpop.permute.xlu0 %1428
    %v1431 = vsel %vm524, %v1423, %v1425
    %v1432 = vsel %vm526, %v1431, %v1429
    %v1434 = vsel %vm534, %v1432, 0
    %1436 = vmatprep.subr.mxu0 0.0
    %1437 = vmatpush1.msra.mxu0 %v55
    %1438 = vmatprep.subr.mxu0 0.0
    %1439 = vmatpush1.msra.mxu0 %v56
    %1440 = vmatprep.subr.mxu0 0.0
    %1441 = vmatpush1.msra.mxu0 %v57
    %1442 = vmatprep.subr.mxu0 0.0
    %1443 = vmatpush1.msra.mxu0 %v58
    %1444 = vmatprep.subr.mxu0 0.0
    %1445 = vmatpush1.msra.mxu0 %v59
    %1446 = vmatprep.subr.mxu0 0.0
    %1447 = vmatpush1.msra.mxu0 %v60
    %1448 = vmatprep.subr.mxu0 0.0
    %1449 = vmatpush1.msra.mxu0 %v61
    %1450 = vmatprep.subr.mxu0 0.0
    %1451 = vmatpush1.msra.mxu0 %v62
    %1452 = vmatprep.subr.mxu0 0.0
    %1453 = vmatpush1.msra.mxu0 %v63
    %1454 = vmatprep.subr.mxu0 0.0
    %1455 = vmatpush1.msra.mxu0 %v64
    %1456 = vmatprep.subr.mxu0 0.0
    %1457 = vmatpush1.msra.mxu0 0.0
    %1458 = vmatprep.subr.mxu0 0.0
    %1459 = vmatpush1.msra.mxu0 0.0
    %1460 = vmatprep.subr.mxu0 0.0
    %1461 = vmatpush1.msra.mxu0 0.0
    %1462 = vmatprep.subr.mxu0 0.0
    %1463 = vmatpush1.msra.mxu0 0.0
    %1464 = vmatprep.subr.mxu0 0.0
    %1465 = vmatpush1.msra.mxu0 0.0
    %1466 = vmatprep.subr.mxu0 0.0
    %1467 = vmatpush1.msra.mxu0 0.0
    %1468 = vmatprep.subr.mxu0 0.0
    %1469 = vmatpush1.msra.mxu0 0.0
    %1470 = vmatprep.subr.mxu0 0.0
    %1471 = vmatpush1.msra.mxu0 0.0
    %1472 = vmatprep.subr.mxu0 0.0
    %1473 = vmatpush1.msra.mxu0 0.0
    %1474 = vmatprep.subr.mxu0 0.0
    %1475 = vmatpush1.msra.mxu0 0.0
    %1476 = vmatprep.subr.mxu0 0.0
    %1477 = vmatpush1.msra.mxu0 0.0
    %1478 = vmatprep.subr.mxu0 0.0
    %1479 = vmatpush1.msra.mxu0 0.0
    %1480 = vmatprep.subr.mxu0 0.0
    %1481 = vmatpush1.msra.mxu0 0.0
    %1482 = vmatprep.subr.mxu0 0.0
    %1483 = vmatpush1.msra.mxu0 0.0
    %1484 = vmatprep.subr.mxu0 0.0
    %1485 = vmatpush1.msra.mxu0 0.0
    %1486 = vmatprep.subr.mxu0 0.0
    %1487 = vmatpush1.msra.mxu0 0.0
    %1488 = vmatprep.subr.mxu0 0.0
    %1489 = vmatpush1.msra.mxu0 0.0
    %1490 = vmatprep.subr.mxu0 0.0
    %1491 = vmatpush1.msra.mxu0 0.0
    %1492 = vmatprep.subr.mxu0 0.0
    %1493 = vmatpush1.msra.mxu0 0.0
    %1494 = vmatprep.subr.mxu0 0.0
    %1495 = vmatpush1.msra.mxu0 0.0
    %1496 = vmatprep.subr.mxu0 0.0
    %1497 = vmatpush1.msra.mxu0 0.0
    %1498 = vmatprep.subr.mxu0 0.0
    %1499 = vmatpush1.msra.mxu0 0.0
    %1500 = vmatprep.mubr.f32.mxu0 0.0
    %1501 = vmatmul.mubr.f32.gmra.mrb[0].mxu0 %v1434
    %v1502 = vpop.f32.mrb[0].mxu0
    %v1503 = vadd.f32 %v532, %v1502
    %v1504 = vpop.f32.mrb[0].mxu0
    %1505 = vdwg.mxu0
    %v1506 = vxor.u32 %v1503, 2147483648
    %v1507 = vmul.f32 %v1506, 1.442695
    %v1508 = vpow.pop %v1507
    %v1509 = vadd.f32 %v1508, 1.0
    %v1510 = vrcp.pop %v1509
    %v1511 = vmul.f32 1.0, %v1510
    %v1512 = vtanh.pop %v1503
    %v1513 = vmul.f32 %v1511, %v1096
    %1515 = vrot.lane.b32.xlu0 %v1512, 32
    %v1516 = vpop.permute.xlu0 %1515
    %v1518 = vmul.f32 %v1511, %v1516
    %1520 = vrot.lane.b32.xlu0 %v1518, 32
    %v1521 = vpop.permute.xlu0 %1520
    %v1523 = vadd.f32 %v1513, %v1521
    %v1524 = vtanh.pop %v1523
    %1526 = vrot.lane.b32.xlu0 %v1524, 32
    %v1527 = vpop.permute.xlu0 %1526
    %v1529 = vmul.f32 %v1511, %v1527
    %1531 = vrot.lane.b32.xlu0 %v1529, 64
    %v1532 = vpop.permute.xlu0 %1531
    %s1534 = scalar_lea.vmem [#allocation2], 4
    %1535 = vst.msk [vmem:[%s1534] sm:$0x3] %vm680, %v1532
    %v1536 = vsel %vm131, %v1532, 0
    %1538 = vmatprep.subr.mxu0 0.0
    %1539 = vmatpush1.msra.mxu0 %v21
    %1540 = vmatprep.subr.mxu0 0.0
    %1541 = vmatpush1.msra.mxu0 %v22
    %1542 = vmatprep.subr.mxu0 0.0
    %1543 = vmatpush1.msra.mxu0 %v23
    %1544 = vmatprep.subr.mxu0 0.0
    %1545 = vmatpush1.msra.mxu0 %v24
    %1546 = vmatprep.subr.mxu0 0.0
    %1547 = vmatpush1.msra.mxu0 0.0
    %1548 = vmatprep.subr.mxu0 0.0
    %1549 = vmatpush1.msra.mxu0 0.0
    %1550 = vmatprep.subr.mxu0 0.0
    %1551 = vmatpush1.msra.mxu0 0.0
    %1552 = vmatprep.subr.mxu0 0.0
    %1553 = vmatpush1.msra.mxu0 0.0
    %1554 = vmatprep.subr.mxu0 0.0
    %1555 = vmatpush1.msra.mxu0 0.0
    %1556 = vmatprep.subr.mxu0 0.0
    %1557 = vmatpush1.msra.mxu0 0.0
    %1558 = vmatprep.subr.mxu0 0.0
    %1559 = vmatpush1.msra.mxu0 0.0
    %1560 = vmatprep.subr.mxu0 0.0
    %1561 = vmatpush1.msra.mxu0 0.0
    %1562 = vmatprep.subr.mxu0 0.0
    %1563 = vmatpush1.msra.mxu0 0.0
    %1564 = vmatprep.subr.mxu0 0.0
    %1565 = vmatpush1.msra.mxu0 0.0
    %1566 = vmatprep.subr.mxu0 0.0
    %1567 = vmatpush1.msra.mxu0 0.0
    %1568 = vmatprep.subr.mxu0 0.0
    %1569 = vmatpush1.msra.mxu0 0.0
    %1570 = vmatprep.subr.mxu0 0.0
    %1571 = vmatpush1.msra.mxu0 0.0
    %1572 = vmatprep.subr.mxu0 0.0
    %1573 = vmatpush1.msra.mxu0 0.0
    %1574 = vmatprep.subr.mxu0 0.0
    %1575 = vmatpush1.msra.mxu0 0.0
    %1576 = vmatprep.subr.mxu0 0.0
    %1577 = vmatpush1.msra.mxu0 0.0
    %1578 = vmatprep.subr.mxu0 0.0
    %1579 = vmatpush1.msra.mxu0 0.0
    %1580 = vmatprep.subr.mxu0 0.0
    %1581 = vmatpush1.msra.mxu0 0.0
    %1582 = vmatprep.subr.mxu0 0.0
    %1583 = vmatpush1.msra.mxu0 0.0
    %1584 = vmatprep.subr.mxu0 0.0
    %1585 = vmatpush1.msra.mxu0 0.0
    %1586 = vmatprep.subr.mxu0 0.0
    %1587 = vmatpush1.msra.mxu0 0.0
    %1588 = vmatprep.subr.mxu0 0.0
    %1589 = vmatpush1.msra.mxu0 0.0
    %1590 = vmatprep.subr.mxu0 0.0
    %1591 = vmatpush1.msra.mxu0 0.0
    %1592 = vmatprep.subr.mxu0 0.0
    %1593 = vmatpush1.msra.mxu0 0.0
    %1594 = vmatprep.subr.mxu0 0.0
    %1595 = vmatpush1.msra.mxu0 0.0
    %1596 = vmatprep.subr.mxu0 0.0
    %1597 = vmatpush1.msra.mxu0 0.0
    %1598 = vmatprep.subr.mxu0 0.0
    %1599 = vmatpush1.msra.mxu0 0.0
    %1600 = vmatprep.subr.mxu0 0.0
    %1601 = vmatpush1.msra.mxu0 0.0
    %1602 = vmatprep.mubr.f32.mxu0 0.0
    %1603 = vmatmul.mubr.f32.gmra.mrb[0].mxu0 %v1536
    %v1604 = vpop.f32.mrb[0].mxu0
    %v1605 = vadd.f32 0.0, %v1604
    %v1606 = vpop.f32.mrb[0].mxu0
    %1607 = vdwg.mxu0
    %v1608 = vrot.slane %v1529, 1
    %1609 = vrot.lane.b32.xlu0 %v1608, 64
    %v1610 = vpop.permute.xlu0 %1609
    %v1611 = vsel %vm131, %v1610, 0
    %1613 = vmatprep.subr.mxu0 0.0
    %1614 = vmatpush1.msra.mxu0 %v25
    %1615 = vmatprep.subr.mxu0 0.0
    %1616 = vmatpush1.msra.mxu0 %v26
    %1617 = vmatprep.subr.mxu0 0.0
    %1618 = vmatpush1.msra.mxu0 %v27
    %1619 = vmatprep.subr.mxu0 0.0
    %1620 = vmatpush1.msra.mxu0 %v28
    %1621 = vmatprep.subr.mxu0 0.0
    %1622 = vmatpush1.msra.mxu0 0.0
    %1623 = vmatprep.subr.mxu0 0.0
    %1624 = vmatpush1.msra.mxu0 0.0
    %1625 = vmatprep.subr.mxu0 0.0
    %1626 = vmatpush1.msra.mxu0 0.0
    %1627 = vmatprep.subr.mxu0 0.0
    %1628 = vmatpush1.msra.mxu0 0.0
    %1629 = vmatprep.subr.mxu0 0.0
    %1630 = vmatpush1.msra.mxu0 0.0
    %1631 = vmatprep.subr.mxu0 0.0
    %1632 = vmatpush1.msra.mxu0 0.0
    %1633 = vmatprep.subr.mxu0 0.0
    %1634 = vmatpush1.msra.mxu0 0.0
    %1635 = vmatprep.subr.mxu0 0.0
    %1636 = vmatpush1.msra.mxu0 0.0
    %1637 = vmatprep.subr.mxu0 0.0
    %1638 = vmatpush1.msra.mxu0 0.0
    %1639 = vmatprep.subr.mxu0 0.0
    %1640 = vmatpush1.msra.mxu0 0.0
    %1641 = vmatprep.subr.mxu0 0.0
    %1642 = vmatpush1.msra.mxu0 0.0
    %1643 = vmatprep.subr.mxu0 0.0
    %1644 = vmatpush1.msra.mxu0 0.0
    %1645 = vmatprep.subr.mxu0 0.0
    %1646 = vmatpush1.msra.mxu0 0.0
    %1647 = vmatprep.subr.mxu0 0.0
    %1648 = vmatpush1.msra.mxu0 0.0
    %1649 = vmatprep.subr.mxu0 0.0
    %1650 = vmatpush1.msra.mxu0 0.0
    %1651 = vmatprep.subr.mxu0 0.0
    %1652 = vmatpush1.msra.mxu0 0.0
    %1653 = vmatprep.subr.mxu0 0.0
    %1654 = vmatpush1.msra.mxu0 0.0
    %1655 = vmatprep.subr.mxu0 0.0
    %1656 = vmatpush1.msra.mxu0 0.0
    %1657 = vmatprep.subr.mxu0 0.0
    %1658 = vmatpush1.msra.mxu0 0.0
    %1659 = vmatprep.subr.mxu0 0.0
    %1660 = vmatpush1.msra.mxu0 0.0
    %1661 = vmatprep.subr.mxu0 0.0
    %1662 = vmatpush1.msra.mxu0 0.0
    %1663 = vmatprep.subr.mxu0 0.0
    %1664 = vmatpush1.msra.mxu0 0.0
    %1665 = vmatprep.subr.mxu0 0.0
    %1666 = vmatpush1.msra.mxu0 0.0
    %1667 = vmatprep.subr.mxu0 0.0
    %1668 = vmatpush1.msra.mxu0 0.0
    %1669 = vmatprep.subr.mxu0 0.0
    %1670 = vmatpush1.msra.mxu0 0.0
    %1671 = vmatprep.subr.mxu0 0.0
    %1672 = vmatpush1.msra.mxu0 0.0
    %1673 = vmatprep.subr.mxu0 0.0
    %1674 = vmatpush1.msra.mxu0 0.0
    %1675 = vmatprep.subr.mxu0 0.0
    %1676 = vmatpush1.msra.mxu0 0.0
    %1677 = vmatprep.mubr.f32.mxu0 0.0
    %1678 = vmatmul.mubr.f32.gmra.mrb[0].mxu0 %v1611
    %v1679 = vpop.f32.mrb[0].mxu0
    %v1680 = vadd.f32 0.0, %v1679
    %v1681 = vpop.f32.mrb[0].mxu0
    %1682 = vdwg.mxu0
    %v1684 = vrot.slane %v1680, 7
    %v1686 = vsel %vm302, %v1605, %v1684
    %v1687 = vmul.f32 %v1686, 0.17677669
    %v1688 = vsel %vm305, %v1687, -inf
    %1689 = vmax.xlane.f32.xlu0 %v1688
    %v1690 = vpop.xlane.xlu0 %1689
    %v1691 = vsub.f32 %v1687, %v1690
    %v1692 = vmul.f32 %v1691, 1.442695
    %v1693 = vpow.pop %v1692
    %v1694 = vsel %vm305, %v1693, 0.0
    %1695 = vadd.xlane.f32.xlu0 %v1694
    %v1696 = vpop.xlane.xlu0 %1695
    %v1697 = vrcp.pop %v1696
    %v1698 = vmul.f32 %v1693, %v1697
    %v1700 = vsel %vm66, %v1698, 0
    %1702 = vmatprep.subr.mxu0 0.0
    %1703 = vmatpush1.msra.mxu0 %v29
    %1704 = vmatprep.subr.mxu0 0.0
    %1705 = vmatpush1.msra.mxu0 %v30
    %1706 = vmatprep.subr.mxu0 0.0
    %1707 = vmatpush1.msra.mxu0 %v31
    %1708 = vmatprep.subr.mxu0 0.0
    %1709 = vmatpush1.msra.mxu0 %v32
    %1710 = vmatprep.subr.mxu0 0.0
    %1711 = vmatpush1.msra.mxu0 %v33
    %1712 = vmatprep.subr.mxu0 0.0
    %1713 = vmatpush1.msra.mxu0 %v34
    %1714 = vmatprep.subr.mxu0 0.0
    %1715 = vmatpush1.msra.mxu0 %v35
    %1716 = vmatprep.subr.mxu0 0.0
    %1717 = vmatpush1.msra.mxu0 %v36
    %1718 = vmatprep.subr.mxu0 0.0
    %1719 = vmatpush1.msra.mxu0 %v37
    %1720 = vmatprep.subr.mxu0 0.0
    %1721 = vmatpush1.msra.mxu0 %v38
    %1722 = vmatprep.subr.mxu0 0.0
    %1723 = vmatpush1.msra.mxu0 %v39
    %1724 = vmatprep.subr.mxu0 0.0
    %1725 = vmatpush1.msra.mxu0 %v40
    %1726 = vmatprep.subr.mxu0 0.0
    %1727 = vmatpush1.msra.mxu0 %v322
    %1728 = vmatprep.subr.mxu0 0.0
    %1729 = vmatpush1.msra.mxu0 0.0
    %1730 = vmatprep.subr.mxu0 0.0
    %1731 = vmatpush1.msra.mxu0 0.0
    %1732 = vmatprep.subr.mxu0 0.0
    %1733 = vmatpush1.msra.mxu0 0.0
    %1734 = vmatprep.subr.mxu0 0.0
    %1735 = vmatpush1.msra.mxu0 0.0
    %1736 = vmatprep.subr.mxu0 0.0
    %1737 = vmatpush1.msra.mxu0 0.0
    %1738 = vmatprep.subr.mxu0 0.0
    %1739 = vmatpush1.msra.mxu0 0.0
    %1740 = vmatprep.subr.mxu0 0.0
    %1741 = vmatpush1.msra.mxu0 0.0
    %1742 = vmatprep.subr.mxu0 0.0
    %1743 = vmatpush1.msra.mxu0 0.0
    %1744 = vmatprep.subr.mxu0 0.0
    %1745 = vmatpush1.msra.mxu0 0.0
    %1746 = vmatprep.subr.mxu0 0.0
    %1747 = vmatpush1.msra.mxu0 0.0
    %1748 = vmatprep.subr.mxu0 0.0
    %1749 = vmatpush1.msra.mxu0 0.0
    %1750 = vmatprep.subr.mxu0 0.0
    %1751 = vmatpush1.msra.mxu0 0.0
    %1752 = vmatprep.subr.mxu0 0.0
    %1753 = vmatpush1.msra.mxu0 0.0
    %1754 = vmatprep.subr.mxu0 0.0
    %1755 = vmatpush1.msra.mxu0 0.0
    %1756 = vmatprep.subr.mxu0 0.0
    %1757 = vmatpush1.msra.mxu0 0.0
    %1758 = vmatprep.subr.mxu0 0.0
    %1759 = vmatpush1.msra.mxu0 0.0
    %1760 = vmatprep.subr.mxu0 0.0
    %1761 = vmatpush1.msra.mxu0 0.0
    %1762 = vmatprep.subr.mxu0 0.0
    %1763 = vmatpush1.msra.mxu0 0.0
    %1764 = vmatprep.subr.mxu0 0.0
    %1765 = vmatpush1.msra.mxu0 0.0
    %1766 = vmatprep.mubr.f32.mxu0 0.0
    %1767 = vmatmul.mubr.f32.gmra.mrb[0].mxu0 %v1700
    %v1768 = vpop.f32.mrb[0].mxu0
    %v1769 = vadd.f32 0.0, %v1768
    %v1770 = vpop.f32.mrb[0].mxu0
    %1771 = vdwg.mxu0
    %v1772 = vrot.slane %v1698, 1
    %v1773 = vsel %vm66, %v1772, 0
    %1775 = vmatprep.subr.mxu0 0.0
    %1776 = vmatpush1.msra.mxu0 %v42
    %1777 = vmatprep.subr.mxu0 0.0
    %1778 = vmatpush1.msra.mxu0 %v43
    %1779 = vmatprep.subr.mxu0 0.0
    %1780 = vmatpush1.msra.mxu0 %v44
    %1781 = vmatprep.subr.mxu0 0.0
    %1782 = vmatpush1.msra.mxu0 %v45
    %1783 = vmatprep.subr.mxu0 0.0
    %1784 = vmatpush1.msra.mxu0 %v46
    %1785 = vmatprep.subr.mxu0 0.0
    %1786 = vmatpush1.msra.mxu0 %v47
    %1787 = vmatprep.subr.mxu0 0.0
    %1788 = vmatpush1.msra.mxu0 %v48
    %1789 = vmatprep.subr.mxu0 0.0
    %1790 = vmatpush1.msra.mxu0 %v49
    %1791 = vmatprep.subr.mxu0 0.0
    %1792 = vmatpush1.msra.mxu0 %v50
    %1793 = vmatprep.subr.mxu0 0.0
    %1794 = vmatpush1.msra.mxu0 %v51
    %1795 = vmatprep.subr.mxu0 0.0
    %1796 = vmatpush1.msra.mxu0 %v52
    %1797 = vmatprep.subr.mxu0 0.0
    %1798 = vmatpush1.msra.mxu0 %v53
    %1799 = vmatprep.subr.mxu0 0.0
    %1800 = vmatpush1.msra.mxu0 %v398
    %1801 = vmatprep.subr.mxu0 0.0
    %1802 = vmatpush1.msra.mxu0 0.0
    %1803 = vmatprep.subr.mxu0 0.0
    %1804 = vmatpush1.msra.mxu0 0.0
    %1805 = vmatprep.subr.mxu0 0.0
    %1806 = vmatpush1.msra.mxu0 0.0
    %1807 = vmatprep.subr.mxu0 0.0
    %1808 = vmatpush1.msra.mxu0 0.0
    %1809 = vmatprep.subr.mxu0 0.0
    %1810 = vmatpush1.msra.mxu0 0.0
    %1811 = vmatprep.subr.mxu0 0.0
    %1812 = vmatpush1.msra.mxu0 0.0
    %1813 = vmatprep.subr.mxu0 0.0
    %1814 = vmatpush1.msra.mxu0 0.0
    %1815 = vmatprep.subr.mxu0 0.0
    %1816 = vmatpush1.msra.mxu0 0.0
    %1817 = vmatprep.subr.mxu0 0.0
    %1818 = vmatpush1.msra.mxu0 0.0
    %1819 = vmatprep.subr.mxu0 0.0
    %1820 = vmatpush1.msra.mxu0 0.0
    %1821 = vmatprep.subr.mxu0 0.0
    %1822 = vmatpush1.msra.mxu0 0.0
    %1823 = vmatprep.subr.mxu0 0.0
    %1824 = vmatpush1.msra.mxu0 0.0
    %1825 = vmatprep.subr.mxu0 0.0
    %1826 = vmatpush1.msra.mxu0 0.0
    %1827 = vmatprep.subr.mxu0 0.0
    %1828 = vmatpush1.msra.mxu0 0.0
    %1829 = vmatprep.subr.mxu0 0.0
    %1830 = vmatpush1.msra.mxu0 0.0
    %1831 = vmatprep.subr.mxu0 0.0
    %1832 = vmatpush1.msra.mxu0 0.0
    %1833 = vmatprep.subr.mxu0 0.0
    %1834 = vmatpush1.msra.mxu0 0.0
    %1835 = vmatprep.subr.mxu0 0.0
    %1836 = vmatpush1.msra.mxu0 0.0
    %1837 = vmatprep.subr.mxu0 0.0
    %1838 = vmatpush1.msra.mxu0 0.0
    %1839 = vmatprep.mubr.f32.mxu0 0.0
    %1840 = vmatmul.mubr.f32.gmra.mrb[0].mxu0 %v1773
    %v1841 = vpop.f32.mrb[0].mxu0
    %v1842 = vadd.f32 0.0, %v1841
    %v1843 = vpop.f32.mrb[0].mxu0
    %1844 = vdwg.mxu0
    %v1846 = vrot.slane %v1842, 7
    %v1848 = vsel %vm302, %v1769, %v1846
    %s1849 = scalar_lea.vmem %s0, 6
    %v1850 = vld [vmem:[%s1849] sm:$0x3]
    %1851 = vrot.lane.b32.xlu0 %v1529, 80
    %v1852 = vpop.permute.xlu0 %1851
    %1855 = vrot.lane.b32.xlu0 %v1848, 48
    %v1856 = vpop.permute.xlu0 %1855
    %v1858 = vsel %vm524, %v1850, %v1852
    %v1859 = vsel %vm526, %v1858, %v1856
    %v1861 = vsel %vm534, %v1859, 0
    %1863 = vmatprep.subr.mxu0 0.0
    %1864 = vmatpush1.msra.mxu0 %v55
    %1865 = vmatprep.subr.mxu0 0.0
    %1866 = vmatpush1.msra.mxu0 %v56
    %1867 = vmatprep.subr.mxu0 0.0
    %1868 = vmatpush1.msra.mxu0 %v57
    %1869 = vmatprep.subr.mxu0 0.0
    %1870 = vmatpush1.msra.mxu0 %v58
    %1871 = vmatprep.subr.mxu0 0.0
    %1872 = vmatpush1.msra.mxu0 %v59
    %1873 = vmatprep.subr.mxu0 0.0
    %1874 = vmatpush1.msra.mxu0 %v60
    %1875 = vmatprep.subr.mxu0 0.0
    %1876 = vmatpush1.msra.mxu0 %v61
    %1877 = vmatprep.subr.mxu0 0.0
    %1878 = vmatpush1.msra.mxu0 %v62
    %1879 = vmatprep.subr.mxu0 0.0
    %1880 = vmatpush1.msra.mxu0 %v63
    %1881 = vmatprep.subr.mxu0 0.0
    %1882 = vmatpush1.msra.mxu0 %v64
    %1883 = vmatprep.subr.mxu0 0.0
    %1884 = vmatpush1.msra.mxu0 0.0
    %1885 = vmatprep.subr.mxu0 0.0
    %1886 = vmatpush1.msra.mxu0 0.0
    %1887 = vmatprep.subr.mxu0 0.0
    %1888 = vmatpush1.msra.mxu0 0.0
    %1889 = vmatprep.subr.mxu0 0.0
    %1890 = vmatpush1.msra.mxu0 0.0
    %1891 = vmatprep.subr.mxu0 0.0
    %1892 = vmatpush1.msra.mxu0 0.0
    %1893 = vmatprep.subr.mxu0 0.0
    %1894 = vmatpush1.msra.mxu0 0.0
    %1895 = vmatprep.subr.mxu0 0.0
    %1896 = vmatpush1.msra.mxu0 0.0
    %1897 = vmatprep.subr.mxu0 0.0
    %1898 = vmatpush1.msra.mxu0 0.0
    %1899 = vmatprep.subr.mxu0 0.0
    %1900 = vmatpush1.msra.mxu0 0.0
    %1901 = vmatprep.subr.mxu0 0.0
    %1902 = vmatpush1.msra.mxu0 0.0
    %1903 = vmatprep.subr.mxu0 0.0
    %1904 = vmatpush1.msra.mxu0 0.0
    %1905 = vmatprep.subr.mxu0 0.0
    %1906 = vmatpush1.msra.mxu0 0.0
    %1907 = vmatprep.subr.mxu0 0.0
    %1908 = vmatpush1.msra.mxu0 0.0
    %1909 = vmatprep.subr.mxu0 0.0
    %1910 = vmatpush1.msra.mxu0 0.0
    %1911 = vmatprep.subr.mxu0 0.0
    %1912 = vmatpush1.msra.mxu0 0.0
    %1913 = vmatprep.subr.mxu0 0.0
    %1914 = vmatpush1.msra.mxu0 0.0
    %1915 = vmatprep.subr.mxu0 0.0
    %1916 = vmatpush1.msra.mxu0 0.0
    %1917 = vmatprep.subr.mxu0 0.0
    %1918 = vmatpush1.msra.mxu0 0.0
    %1919 = vmatprep.subr.mxu0 0.0
    %1920 = vmatpush1.msra.mxu0 0.0
    %1921 = vmatprep.subr.mxu0 0.0
    %1922 = vmatpush1.msra.mxu0 0.0
    %1923 = vmatprep.subr.mxu0 0.0
    %1924 = vmatpush1.msra.mxu0 0.0
    %1925 = vmatprep.subr.mxu0 0.0
    %1926 = vmatpush1.msra.mxu0 0.0
    %1927 = vmatprep.mubr.f32.mxu0 0.0
    %1928 = vmatmul.mubr.f32.gmra.mrb[0].mxu0 %v1861
    %v1929 = vpop.f32.mrb[0].mxu0
    %v1930 = vadd.f32 %v532, %v1929
    %v1931 = vpop.f32.mrb[0].mxu0
    %1932 = vdwg.mxu0
    %v1933 = vxor.u32 %v1930, 2147483648
    %v1934 = vmul.f32 %v1933, 1.442695
    %v1935 = vpow.pop %v1934
    %v1936 = vadd.f32 %v1935, 1.0
    %v1937 = vrcp.pop %v1936
    %v1938 = vmul.f32 1.0, %v1937
    %v1939 = vtanh.pop %v1930
    %v1940 = vmul.f32 %v1938, %v1523
    %1942 = vrot.lane.b32.xlu0 %v1939, 32
    %v1943 = vpop.permute.xlu0 %1942
    %v1945 = vmul.f32 %v1938, %v1943
    %1947 = vrot.lane.b32.xlu0 %v1945, 32
    %v1948 = vpop.permute.xlu0 %1947
    %v1950 = vadd.f32 %v1940, %v1948
    %v1951 = vtanh.pop %v1950
    %1953 = vrot.lane.b32.xlu0 %v1951, 32
    %v1954 = vpop.permute.xlu0 %1953
    %v1956 = vmul.f32 %v1938, %v1954
    %1958 = vrot.lane.b32.xlu0 %v1956, 64
    %v1959 = vpop.permute.xlu0 %1958
    %s1961 = scalar_lea.vmem [#allocation2], 6
    %1962 = vst.msk [vmem:[%s1961] sm:$0x3] %vm680, %v1959
    %v1963 = vsel %vm131, %v1959, 0
    %1965 = vmatprep.subr.mxu0 0.0
    %1966 = vmatpush1.msra.mxu0 %v21
    %1967 = vmatprep.subr.mxu0 0.0
    %1968 = vmatpush1.msra.mxu0 %v22
    %1969 = vmatprep.subr.mxu0 0.0
    %1970 = vmatpush1.msra.mxu0 %v23
    %1971 = vmatprep.subr.mxu0 0.0
    %1972 = vmatpush1.msra.mxu0 %v24
    %1973 = vmatprep.subr.mxu0 0.0
    %1974 = vmatpush1.msra.mxu0 0.0
    %1975 = vmatprep.subr.mxu0 0.0
    %1976 = vmatpush1.msra.mxu0 0.0
    %1977 = vmatprep.subr.mxu0 0.0
    %1978 = vmatpush1.msra.mxu0 0.0
    %1979 = vmatprep.subr.mxu0 0.0
    %1980 = vmatpush1.msra.mxu0 0.0
    %1981 = vmatprep.subr.mxu0 0.0
    %1982 = vmatpush1.msra.mxu0 0.0
    %1983 = vmatprep.subr.mxu0 0.0
    %1984 = vmatpush1.msra.mxu0 0.0
    %1985 = vmatprep.subr.mxu0 0.0
    %1986 = vmatpush1.msra.mxu0 0.0
    %1987 = vmatprep.subr.mxu0 0.0
    %1988 = vmatpush1.msra.mxu0 0.0
    %1989 = vmatprep.subr.mxu0 0.0
    %1990 = vmatpush1.msra.mxu0 0.0
    %1991 = vmatprep.subr.mxu0 0.0
    %1992 = vmatpush1.msra.mxu0 0.0
    %1993 = vmatprep.subr.mxu0 0.0
    %1994 = vmatpush1.msra.mxu0 0.0
    %1995 = vmatprep.subr.mxu0 0.0
    %1996 = vmatpush1.msra.mxu0 0.0
    %1997 = vmatprep.subr.mxu0 0.0
    %1998 = vmatpush1.msra.mxu0 0.0
    %1999 = vmatprep.subr.mxu0 0.0
    %2000 = vmatpush1.msra.mxu0 0.0
    %2001 = vmatprep.subr.mxu0 0.0
    %2002 = vmatpush1.msra.mxu0 0.0
    %2003 = vmatprep.subr.mxu0 0.0
    %2004 = vmatpush1.msra.mxu0 0.0
    %2005 = vmatprep.subr.mxu0 0.0
    %2006 = vmatpush1.msra.mxu0 0.0
    %2007 = vmatprep.subr.mxu0 0.0
    %2008 = vmatpush1.msra.mxu0 0.0
    %2009 = vmatprep.subr.mxu0 0.0
    %2010 = vmatpush1.msra.mxu0 0.0
    %2011 = vmatprep.subr.mxu0 0.0
    %2012 = vmatpush1.msra.mxu0 0.0
    %2013 = vmatprep.subr.mxu0 0.0
    %2014 = vmatpush1.msra.mxu0 0.0
    %2015 = vmatprep.subr.mxu0 0.0
    %2016 = vmatpush1.msra.mxu0 0.0
    %2017 = vmatprep.subr.mxu0 0.0
    %2018 = vmatpush1.msra.mxu0 0.0
    %2019 = vmatprep.subr.mxu0 0.0
    %2020 = vmatpush1.msra.mxu0 0.0
    %2021 = vmatprep.subr.mxu0 0.0
    %2022 = vmatpush1.msra.mxu0 0.0
    %2023 = vmatprep.subr.mxu0 0.0
    %2024 = vmatpush1.msra.mxu0 0.0
    %2025 = vmatprep.subr.mxu0 0.0
    %2026 = vmatpush1.msra.mxu0 0.0
    %2027 = vmatprep.subr.mxu0 0.0
    %2028 = vmatpush1.msra.mxu0 0.0
    %2029 = vmatprep.mubr.f32.mxu0 0.0
    %2030 = vmatmul.mubr.f32.gmra.mrb[0].mxu0 %v1963
    %v2031 = vpop.f32.mrb[0].mxu0
    %v2032 = vadd.f32 0.0, %v2031
    %v2033 = vpop.f32.mrb[0].mxu0
    %2034 = vdwg.mxu0
    %v2035 = vrot.slane %v1956, 1
    %2036 = vrot.lane.b32.xlu0 %v2035, 64
    %v2037 = vpop.permute.xlu0 %2036
    %v2038 = vsel %vm131, %v2037, 0
    %2040 = vmatprep.subr.mxu0 0.0
    %2041 = vmatpush1.msra.mxu0 %v25
    %2042 = vmatprep.subr.mxu0 0.0
    %2043 = vmatpush1.msra.mxu0 %v26
    %2044 = vmatprep.subr.mxu0 0.0
    %2045 = vmatpush1.msra.mxu0 %v27
    %2046 = vmatprep.subr.mxu0 0.0
    %2047 = vmatpush1.msra.mxu0 %v28
    %2048 = vmatprep.subr.mxu0 0.0
    %2049 = vmatpush1.msra.mxu0 0.0
    %2050 = vmatprep.subr.mxu0 0.0
    %2051 = vmatpush1.msra.mxu0 0.0
    %2052 = vmatprep.subr.mxu0 0.0
    %2053 = vmatpush1.msra.mxu0 0.0
    %2054 = vmatprep.subr.mxu0 0.0
    %2055 = vmatpush1.msra.mxu0 0.0
    %2056 = vmatprep.subr.mxu0 0.0
    %2057 = vmatpush1.msra.mxu0 0.0
    %2058 = vmatprep.subr.mxu0 0.0
    %2059 = vmatpush1.msra.mxu0 0.0
    %2060 = vmatprep.subr.mxu0 0.0
    %2061 = vmatpush1.msra.mxu0 0.0
    %2062 = vmatprep.subr.mxu0 0.0
    %2063 = vmatpush1.msra.mxu0 0.0
    %2064 = vmatprep.subr.mxu0 0.0
    %2065 = vmatpush1.msra.mxu0 0.0
    %2066 = vmatprep.subr.mxu0 0.0
    %2067 = vmatpush1.msra.mxu0 0.0
    %2068 = vmatprep.subr.mxu0 0.0
    %2069 = vmatpush1.msra.mxu0 0.0
    %2070 = vmatprep.subr.mxu0 0.0
    %2071 = vmatpush1.msra.mxu0 0.0
    %2072 = vmatprep.subr.mxu0 0.0
    %2073 = vmatpush1.msra.mxu0 0.0
    %2074 = vmatprep.subr.mxu0 0.0
    %2075 = vmatpush1.msra.mxu0 0.0
    %2076 = vmatprep.subr.mxu0 0.0
    %2077 = vmatpush1.msra.mxu0 0.0
    %2078 = vmatprep.subr.mxu0 0.0
    %2079 = vmatpush1.msra.mxu0 0.0
    %2080 = vmatprep.subr.mxu0 0.0
    %2081 = vmatpush1.msra.mxu0 0.0
    %2082 = vmatprep.subr.mxu0 0.0
    %2083 = vmatpush1.msra.mxu0 0.0
    %2084 = vmatprep.subr.mxu0 0.0
    %2085 = vmatpush1.msra.mxu0 0.0
    %2086 = vmatprep.subr.mxu0 0.0
    %2087 = vmatpush1.msra.mxu0 0.0
    %2088 = vmatprep.subr.mxu0 0.0
    %2089 = vmatpush1.msra.mxu0 0.0
    %2090 = vmatprep.subr.mxu0 0.0
    %2091 = vmatpush1.msra.mxu0 0.0
    %2092 = vmatprep.subr.mxu0 0.0
    %2093 = vmatpush1.msra.mxu0 0.0
    %2094 = vmatprep.subr.mxu0 0.0
    %2095 = vmatpush1.msra.mxu0 0.0
    %2096 = vmatprep.subr.mxu0 0.0
    %2097 = vmatpush1.msra.mxu0 0.0
    %2098 = vmatprep.subr.mxu0 0.0
    %2099 = vmatpush1.msra.mxu0 0.0
    %2100 = vmatprep.subr.mxu0 0.0
    %2101 = vmatpush1.msra.mxu0 0.0
    %2102 = vmatprep.subr.mxu0 0.0
    %2103 = vmatpush1.msra.mxu0 0.0
    %2104 = vmatprep.mubr.f32.mxu0 0.0
    %2105 = vmatmul.mubr.f32.gmra.mrb[0].mxu0 %v2038
    %v2106 = vpop.f32.mrb[0].mxu0
    %v2107 = vadd.f32 0.0, %v2106
    %v2108 = vpop.f32.mrb[0].mxu0
    %2109 = vdwg.mxu0
    %v2111 = vrot.slane %v2107, 7
    %v2113 = vsel %vm302, %v2032, %v2111
    %v2114 = vmul.f32 %v2113, 0.17677669
    %v2115 = vsel %vm305, %v2114, -inf
    %2116 = vmax.xlane.f32.xlu0 %v2115
    %v2117 = vpop.xlane.xlu0 %2116
    %v2118 = vsub.f32 %v2114, %v2117
    %v2119 = vmul.f32 %v2118, 1.442695
    %v2120 = vpow.pop %v2119
    %v2121 = vsel %vm305, %v2120, 0.0
    %2122 = vadd.xlane.f32.xlu0 %v2121
    %v2123 = vpop.xlane.xlu0 %2122
    %v2124 = vrcp.pop %v2123
    %v2125 = vmul.f32 %v2120, %v2124
    %v2127 = vsel %vm66, %v2125, 0
    %2129 = vmatprep.subr.mxu0 0.0
    %2130 = vmatpush1.msra.mxu0 %v29
    %2131 = vmatprep.subr.mxu0 0.0
    %2132 = vmatpush1.msra.mxu0 %v30
    %2133 = vmatprep.subr.mxu0 0.0
    %2134 = vmatpush1.msra.mxu0 %v31
    %2135 = vmatprep.subr.mxu0 0.0
    %2136 = vmatpush1.msra.mxu0 %v32
    %2137 = vmatprep.subr.mxu0 0.0
    %2138 = vmatpush1.msra.mxu0 %v33
    %2139 = vmatprep.subr.mxu0 0.0
    %2140 = vmatpush1.msra.mxu0 %v34
    %2141 = vmatprep.subr.mxu0 0.0
    %2142 = vmatpush1.msra.mxu0 %v35
    %2143 = vmatprep.subr.mxu0 0.0
    %2144 = vmatpush1.msra.mxu0 %v36
    %2145 = vmatprep.subr.mxu0 0.0
    %2146 = vmatpush1.msra.mxu0 %v37
    %2147 = vmatprep.subr.mxu0 0.0
    %2148 = vmatpush1.msra.mxu0 %v38
    %2149 = vmatprep.subr.mxu0 0.0
    %2150 = vmatpush1.msra.mxu0 %v39
    %2151 = vmatprep.subr.mxu0 0.0
    %2152 = vmatpush1.msra.mxu0 %v40
    %2153 = vmatprep.subr.mxu0 0.0
    %2154 = vmatpush1.msra.mxu0 %v322
    %2155 = vmatprep.subr.mxu0 0.0
    %2156 = vmatpush1.msra.mxu0 0.0
    %2157 = vmatprep.subr.mxu0 0.0
    %2158 = vmatpush1.msra.mxu0 0.0
    %2159 = vmatprep.subr.mxu0 0.0
    %2160 = vmatpush1.msra.mxu0 0.0
    %2161 = vmatprep.subr.mxu0 0.0
    %2162 = vmatpush1.msra.mxu0 0.0
    %2163 = vmatprep.subr.mxu0 0.0
    %2164 = vmatpush1.msra.mxu0 0.0
    %2165 = vmatprep.subr.mxu0 0.0
    %2166 = vmatpush1.msra.mxu0 0.0
    %2167 = vmatprep.subr.mxu0 0.0
    %2168 = vmatpush1.msra.mxu0 0.0
    %2169 = vmatprep.subr.mxu0 0.0
    %2170 = vmatpush1.msra.mxu0 0.0
    %2171 = vmatprep.subr.mxu0 0.0
    %2172 = vmatpush1.msra.mxu0 0.0
    %2173 = vmatprep.subr.mxu0 0.0
    %2174 = vmatpush1.msra.mxu0 0.0
    %2175 = vmatprep.subr.mxu0 0.0
    %2176 = vmatpush1.msra.mxu0 0.0
    %2177 = vmatprep.subr.mxu0 0.0
    %2178 = vmatpush1.msra.mxu0 0.0
    %2179 = vmatprep.subr.mxu0 0.0
    %2180 = vmatpush1.msra.mxu0 0.0
    %2181 = vmatprep.subr.mxu0 0.0
    %2182 = vmatpush1.msra.mxu0 0.0
    %2183 = vmatprep.subr.mxu0 0.0
    %2184 = vmatpush1.msra.mxu0 0.0
    %2185 = vmatprep.subr.mxu0 0.0
    %2186 = vmatpush1.msra.mxu0 0.0
    %2187 = vmatprep.subr.mxu0 0.0
    %2188 = vmatpush1.msra.mxu0 0.0
    %2189 = vmatprep.subr.mxu0 0.0
    %2190 = vmatpush1.msra.mxu0 0.0
    %2191 = vmatprep.subr.mxu0 0.0
    %2192 = vmatpush1.msra.mxu0 0.0
    %2193 = vmatprep.mubr.f32.mxu0 0.0
    %2194 = vmatmul.mubr.f32.gmra.mrb[0].mxu0 %v2127
    %v2195 = vpop.f32.mrb[0].mxu0
    %v2196 = vadd.f32 0.0, %v2195
    %v2197 = vpop.f32.mrb[0].mxu0
    %2198 = vdwg.mxu0
    %v2199 = vrot.slane %v2125, 1
    %v2200 = vsel %vm66, %v2199, 0
    %2202 = vmatprep.subr.mxu0 0.0
    %2203 = vmatpush1.msra.mxu0 %v42
    %2204 = vmatprep.subr.mxu0 0.0
    %2205 = vmatpush1.msra.mxu0 %v43
    %2206 = vmatprep.subr.mxu0 0.0
    %2207 = vmatpush1.msra.mxu0 %v44
    %2208 = vmatprep.subr.mxu0 0.0
    %2209 = vmatpush1.msra.mxu0 %v45
    %2210 = vmatprep.subr.mxu0 0.0
    %2211 = vmatpush1.msra.mxu0 %v46
    %2212 = vmatprep.subr.mxu0 0.0
    %2213 = vmatpush1.msra.mxu0 %v47
    %2214 = vmatprep.subr.mxu0 0.0
    %2215 = vmatpush1.msra.mxu0 %v48
    %2216 = vmatprep.subr.mxu0 0.0
    %2217 = vmatpush1.msra.mxu0 %v49
    %2218 = vmatprep.subr.mxu0 0.0
    %2219 = vmatpush1.msra.mxu0 %v50
    %2220 = vmatprep.subr.mxu0 0.0
    %2221 = vmatpush1.msra.mxu0 %v51
    %2222 = vmatprep.subr.mxu0 0.0
    %2223 = vmatpush1.msra.mxu0 %v52
    %2224 = vmatprep.subr.mxu0 0.0
    %2225 = vmatpush1.msra.mxu0 %v53
    %2226 = vmatprep.subr.mxu0 0.0
    %2227 = vmatpush1.msra.mxu0 %v398
    %2228 = vmatprep.subr.mxu0 0.0
    %2229 = vmatpush1.msra.mxu0 0.0
    %2230 = vmatprep.subr.mxu0 0.0
    %2231 = vmatpush1.msra.mxu0 0.0
    %2232 = vmatprep.subr.mxu0 0.0
    %2233 = vmatpush1.msra.mxu0 0.0
    %2234 = vmatprep.subr.mxu0 0.0
    %2235 = vmatpush1.msra.mxu0 0.0
    %2236 = vmatprep.subr.mxu0 0.0
    %2237 = vmatpush1.msra.mxu0 0.0
    %2238 = vmatprep.subr.mxu0 0.0
    %2239 = vmatpush1.msra.mxu0 0.0
    %2240 = vmatprep.subr.mxu0 0.0
    %2241 = vmatpush1.msra.mxu0 0.0
    %2242 = vmatprep.subr.mxu0 0.0
    %2243 = vmatpush1.msra.mxu0 0.0
    %2244 = vmatprep.subr.mxu0 0.0
    %2245 = vmatpush1.msra.mxu0 0.0
    %2246 = vmatprep.subr.mxu0 0.0
    %2247 = vmatpush1.msra.mxu0 0.0
    %2248 = vmatprep.subr.mxu0 0.0
    %2249 = vmatpush1.msra.mxu0 0.0
    %2250 = vmatprep.subr.mxu0 0.0
    %2251 = vmatpush1.msra.mxu0 0.0
    %2252 = vmatprep.subr.mxu0 0.0
    %2253 = vmatpush1.msra.mxu0 0.0
    %2254 = vmatprep.subr.mxu0 0.0
    %2255 = vmatpush1.msra.mxu0 0.0
    %2256 = vmatprep.subr.mxu0 0.0
    %2257 = vmatpush1.msra.mxu0 0.0
    %2258 = vmatprep.subr.mxu0 0.0
    %2259 = vmatpush1.msra.mxu0 0.0
    %2260 = vmatprep.subr.mxu0 0.0
    %2261 = vmatpush1.msra.mxu0 0.0
    %2262 = vmatprep.subr.mxu0 0.0
    %2263 = vmatpush1.msra.mxu0 0.0
    %2264 = vmatprep.subr.mxu0 0.0
    %2265 = vmatpush1.msra.mxu0 0.0
    %2266 = vmatprep.mubr.f32.mxu0 0.0
    %2267 = vmatmul.mubr.f32.gmra.mrb[0].mxu0 %v2200
    %v2268 = vpop.f32.mrb[0].mxu0
    %v2269 = vadd.f32 0.0, %v2268
    %v2270 = vpop.f32.mrb[0].mxu0
    %2271 = vdwg.mxu0
    %v2273 = vrot.slane %v2269, 7
    %v2275 = vsel %vm302, %v2196, %v2273
    %s2276 = scalar_lea.vmem %s0, 8
    %v2277 = vld [vmem:[%s2276] sm:$0x3]
    %2278 = vrot.lane.b32.xlu0 %v1956, 80
    %v2279 = vpop.permute.xlu0 %2278
    %2282 = vrot.lane.b32.xlu0 %v2275, 48
    %v2283 = vpop.permute.xlu0 %2282
    %v2285 = vsel %vm524, %v2277, %v2279
    %v2286 = vsel %vm526, %v2285, %v2283
    %v2288 = vsel %vm534, %v2286, 0
    %2290 = vmatprep.subr.mxu0 0.0
    %2291 = vmatpush1.msra.mxu0 %v55
    %2292 = vmatprep.subr.mxu0 0.0
    %2293 = vmatpush1.msra.mxu0 %v56
    %2294 = vmatprep.subr.mxu0 0.0
    %2295 = vmatpush1.msra.mxu0 %v57
    %2296 = vmatprep.subr.mxu0 0.0
    %2297 = vmatpush1.msra.mxu0 %v58
    %2298 = vmatprep.subr.mxu0 0.0
    %2299 = vmatpush1.msra.mxu0 %v59
    %2300 = vmatprep.subr.mxu0 0.0
    %2301 = vmatpush1.msra.mxu0 %v60
    %2302 = vmatprep.subr.mxu0 0.0
    %2303 = vmatpush1.msra.mxu0 %v61
    %2304 = vmatprep.subr.mxu0 0.0
    %2305 = vmatpush1.msra.mxu0 %v62
    %2306 = vmatprep.subr.mxu0 0.0
    %2307 = vmatpush1.msra.mxu0 %v63
    %2308 = vmatprep.subr.mxu0 0.0
    %2309 = vmatpush1.msra.mxu0 %v64
    %2310 = vmatprep.subr.mxu0 0.0
    %2311 = vmatpush1.msra.mxu0 0.0
    %2312 = vmatprep.subr.mxu0 0.0
    %2313 = vmatpush1.msra.mxu0 0.0
    %2314 = vmatprep.subr.mxu0 0.0
    %2315 = vmatpush1.msra.mxu0 0.0
    %2316 = vmatprep.subr.mxu0 0.0
    %2317 = vmatpush1.msra.mxu0 0.0
    %2318 = vmatprep.subr.mxu0 0.0
    %2319 = vmatpush1.msra.mxu0 0.0
    %2320 = vmatprep.subr.mxu0 0.0
    %2321 = vmatpush1.msra.mxu0 0.0
    %2322 = vmatprep.subr.mxu0 0.0
    %2323 = vmatpush1.msra.mxu0 0.0
    %2324 = vmatprep.subr.mxu0 0.0
    %2325 = vmatpush1.msra.mxu0 0.0
    %2326 = vmatprep.subr.mxu0 0.0
    %2327 = vmatpush1.msra.mxu0 0.0
    %2328 = vmatprep.subr.mxu0 0.0
    %2329 = vmatpush1.msra.mxu0 0.0
    %2330 = vmatprep.subr.mxu0 0.0
    %2331 = vmatpush1.msra.mxu0 0.0
    %2332 = vmatprep.subr.mxu0 0.0
    %2333 = vmatpush1.msra.mxu0 0.0
    %2334 = vmatprep.subr.mxu0 0.0
    %2335 = vmatpush1.msra.mxu0 0.0
    %2336 = vmatprep.subr.mxu0 0.0
    %2337 = vmatpush1.msra.mxu0 0.0
    %2338 = vmatprep.subr.mxu0 0.0
    %2339 = vmatpush1.msra.mxu0 0.0
    %2340 = vmatprep.subr.mxu0 0.0
    %2341 = vmatpush1.msra.mxu0 0.0
    %2342 = vmatprep.subr.mxu0 0.0
    %2343 = vmatpush1.msra.mxu0 0.0
    %2344 = vmatprep.subr.mxu0 0.0
    %2345 = vmatpush1.msra.mxu0 0.0
    %2346 = vmatprep.subr.mxu0 0.0
    %2347 = vmatpush1.msra.mxu0 0.0
    %2348 = vmatprep.subr.mxu0 0.0
    %2349 = vmatpush1.msra.mxu0 0.0
    %2350 = vmatprep.subr.mxu0 0.0
    %2351 = vmatpush1.msra.mxu0 0.0
    %2352 = vmatprep.subr.mxu0 0.0
    %2353 = vmatpush1.msra.mxu0 0.0
    %2354 = vmatprep.mubr.f32.mxu0 0.0
    %2355 = vmatmul.mubr.f32.gmra.mrb[0].mxu0 %v2288
    %v2356 = vpop.f32.mrb[0].mxu0
    %v2357 = vadd.f32 %v532, %v2356
    %v2358 = vpop.f32.mrb[0].mxu0
    %2359 = vdwg.mxu0
    %v2360 = vxor.u32 %v2357, 2147483648
    %v2361 = vmul.f32 %v2360, 1.442695
    %v2362 = vpow.pop %v2361
    %v2363 = vadd.f32 %v2362, 1.0
    %v2364 = vrcp.pop %v2363
    %v2365 = vmul.f32 1.0, %v2364
    %v2366 = vtanh.pop %v2357
    %v2367 = vmul.f32 %v2365, %v1950
    %2369 = vrot.lane.b32.xlu0 %v2366, 32
    %v2370 = vpop.permute.xlu0 %2369
    %v2372 = vmul.f32 %v2365, %v2370
    %2374 = vrot.lane.b32.xlu0 %v2372, 32
    %v2375 = vpop.permute.xlu0 %2374
    %v2377 = vadd.f32 %v2367, %v2375
    %v2378 = vtanh.pop %v2377
    %2380 = vrot.lane.b32.xlu0 %v2378, 32
    %v2381 = vpop.permute.xlu0 %2380
    %v2383 = vmul.f32 %v2365, %v2381
    %2385 = vrot.lane.b32.xlu0 %v2383, 64
    %v2386 = vpop.permute.xlu0 %2385
    %s2388 = scalar_lea.vmem [#allocation2], 8
    %2389 = vst.msk [vmem:[%s2388] sm:$0x3] %vm680, %v2386
    %v2390 = vsel %vm131, %v2386, 0
    %2392 = vmatprep.subr.mxu0 0.0
    %2393 = vmatpush1.msra.mxu0 %v21
    %2394 = vmatprep.subr.mxu0 0.0
    %2395 = vmatpush1.msra.mxu0 %v22
    %2396 = vmatprep.subr.mxu0 0.0
    %2397 = vmatpush1.msra.mxu0 %v23
    %2398 = vmatprep.subr.mxu0 0.0
    %2399 = vmatpush1.msra.mxu0 %v24
    %2400 = vmatprep.subr.mxu0 0.0
    %2401 = vmatpush1.msra.mxu0 0.0
    %2402 = vmatprep.subr.mxu0 0.0
    %2403 = vmatpush1.msra.mxu0 0.0
    %2404 = vmatprep.subr.mxu0 0.0
    %2405 = vmatpush1.msra.mxu0 0.0
    %2406 = vmatprep.subr.mxu0 0.0
    %2407 = vmatpush1.msra.mxu0 0.0
    %2408 = vmatprep.subr.mxu0 0.0
    %2409 = vmatpush1.msra.mxu0 0.0
    %2410 = vmatprep.subr.mxu0 0.0
    %2411 = vmatpush1.msra.mxu0 0.0
    %2412 = vmatprep.subr.mxu0 0.0
    %2413 = vmatpush1.msra.mxu0 0.0
    %2414 = vmatprep.subr.mxu0 0.0
    %2415 = vmatpush1.msra.mxu0 0.0
    %2416 = vmatprep.subr.mxu0 0.0
    %2417 = vmatpush1.msra.mxu0 0.0
    %2418 = vmatprep.subr.mxu0 0.0
    %2419 = vmatpush1.msra.mxu0 0.0
    %2420 = vmatprep.subr.mxu0 0.0
    %2421 = vmatpush1.msra.mxu0 0.0
    %2422 = vmatprep.subr.mxu0 0.0
    %2423 = vmatpush1.msra.mxu0 0.0
    %2424 = vmatprep.subr.mxu0 0.0
    %2425 = vmatpush1.msra.mxu0 0.0
    %2426 = vmatprep.subr.mxu0 0.0
    %2427 = vmatpush1.msra.mxu0 0.0
    %2428 = vmatprep.subr.mxu0 0.0
    %2429 = vmatpush1.msra.mxu0 0.0
    %2430 = vmatprep.subr.mxu0 0.0
    %2431 = vmatpush1.msra.mxu0 0.0
    %2432 = vmatprep.subr.mxu0 0.0
    %2433 = vmatpush1.msra.mxu0 0.0
    %2434 = vmatprep.subr.mxu0 0.0
    %2435 = vmatpush1.msra.mxu0 0.0
    %2436 = vmatprep.subr.mxu0 0.0
    %2437 = vmatpush1.msra.mxu0 0.0
    %2438 = vmatprep.subr.mxu0 0.0
    %2439 = vmatpush1.msra.mxu0 0.0
    %2440 = vmatprep.subr.mxu0 0.0
    %2441 = vmatpush1.msra.mxu0 0.0
    %2442 = vmatprep.subr.mxu0 0.0
    %2443 = vmatpush1.msra.mxu0 0.0
    %2444 = vmatprep.subr.mxu0 0.0
    %2445 = vmatpush1.msra.mxu0 0.0
    %2446 = vmatprep.subr.mxu0 0.0
    %2447 = vmatpush1.msra.mxu0 0.0
    %2448 = vmatprep.subr.mxu0 0.0
    %2449 = vmatpush1.msra.mxu0 0.0
    %2450 = vmatprep.subr.mxu0 0.0
    %2451 = vmatpush1.msra.mxu0 0.0
    %2452 = vmatprep.subr.mxu0 0.0
    %2453 = vmatpush1.msra.mxu0 0.0
    %2454 = vmatprep.subr.mxu0 0.0
    %2455 = vmatpush1.msra.mxu0 0.0
    %2456 = vmatprep.mubr.f32.mxu0 0.0
    %2457 = vmatmul.mubr.f32.gmra.mrb[0].mxu0 %v2390
    %v2458 = vpop.f32.mrb[0].mxu0
    %v2459 = vadd.f32 0.0, %v2458
    %v2460 = vpop.f32.mrb[0].mxu0
    %2461 = vdwg.mxu0
    %v2462 = vrot.slane %v2383, 1
    %2463 = vrot.lane.b32.xlu0 %v2462, 64
    %v2464 = vpop.permute.xlu0 %2463
    %v2465 = vsel %vm131, %v2464, 0
    %2467 = vmatprep.subr.mxu0 0.0
    %2468 = vmatpush1.msra.mxu0 %v25
    %2469 = vmatprep.subr.mxu0 0.0
    %2470 = vmatpush1.msra.mxu0 %v26
    %2471 = vmatprep.subr.mxu0 0.0
    %2472 = vmatpush1.msra.mxu0 %v27
    %2473 = vmatprep.subr.mxu0 0.0
    %2474 = vmatpush1.msra.mxu0 %v28
    %2475 = vmatprep.subr.mxu0 0.0
    %2476 = vmatpush1.msra.mxu0 0.0
    %2477 = vmatprep.subr.mxu0 0.0
    %2478 = vmatpush1.msra.mxu0 0.0
    %2479 = vmatprep.subr.mxu0 0.0
    %2480 = vmatpush1.msra.mxu0 0.0
    %2481 = vmatprep.subr.mxu0 0.0
    %2482 = vmatpush1.msra.mxu0 0.0
    %2483 = vmatprep.subr.mxu0 0.0
    %2484 = vmatpush1.msra.mxu0 0.0
    %2485 = vmatprep.subr.mxu0 0.0
    %2486 = vmatpush1.msra.mxu0 0.0
    %2487 = vmatprep.subr.mxu0 0.0
    %2488 = vmatpush1.msra.mxu0 0.0
    %2489 = vmatprep.subr.mxu0 0.0
    %2490 = vmatpush1.msra.mxu0 0.0
    %2491 = vmatprep.subr.mxu0 0.0
    %2492 = vmatpush1.msra.mxu0 0.0
    %2493 = vmatprep.subr.mxu0 0.0
    %2494 = vmatpush1.msra.mxu0 0.0
    %2495 = vmatprep.subr.mxu0 0.0
    %2496 = vmatpush1.msra.mxu0 0.0
    %2497 = vmatprep.subr.mxu0 0.0
    %2498 = vmatpush1.msra.mxu0 0.0
    %2499 = vmatprep.subr.mxu0 0.0
    %2500 = vmatpush1.msra.mxu0 0.0
    %2501 = vmatprep.subr.mxu0 0.0
    %2502 = vmatpush1.msra.mxu0 0.0
    %2503 = vmatprep.subr.mxu0 0.0
    %2504 = vmatpush1.msra.mxu0 0.0
    %2505 = vmatprep.subr.mxu0 0.0
    %2506 = vmatpush1.msra.mxu0 0.0
    %2507 = vmatprep.subr.mxu0 0.0
    %2508 = vmatpush1.msra.mxu0 0.0
    %2509 = vmatprep.subr.mxu0 0.0
    %2510 = vmatpush1.msra.mxu0 0.0
    %2511 = vmatprep.subr.mxu0 0.0
    %2512 = vmatpush1.msra.mxu0 0.0
    %2513 = vmatprep.subr.mxu0 0.0
    %2514 = vmatpush1.msra.mxu0 0.0
    %2515 = vmatprep.subr.mxu0 0.0
    %2516 = vmatpush1.msra.mxu0 0.0
    %2517 = vmatprep.subr.mxu0 0.0
    %2518 = vmatpush1.msra.mxu0 0.0
    %2519 = vmatprep.subr.mxu0 0.0
    %2520 = vmatpush1.msra.mxu0 0.0
    %2521 = vmatprep.subr.mxu0 0.0
    %2522 = vmatpush1.msra.mxu0 0.0
    %2523 = vmatprep.subr.mxu0 0.0
    %2524 = vmatpush1.msra.mxu0 0.0
    %2525 = vmatprep.subr.mxu0 0.0
    %2526 = vmatpush1.msra.mxu0 0.0
    %2527 = vmatprep.subr.mxu0 0.0
    %2528 = vmatpush1.msra.mxu0 0.0
    %2529 = vmatprep.subr.mxu0 0.0
    %2530 = vmatpush1.msra.mxu0 0.0
    %2531 = vmatprep.mubr.f32.mxu0 0.0
    %2532 = vmatmul.mubr.f32.gmra.mrb[0].mxu0 %v2465
    %v2533 = vpop.f32.mrb[0].mxu0
    %v2534 = vadd.f32 0.0, %v2533
    %v2535 = vpop.f32.mrb[0].mxu0
    %2536 = vdwg.mxu0
    %v2538 = vrot.slane %v2534, 7
    %v2540 = vsel %vm302, %v2459, %v2538
    %v2541 = vmul.f32 %v2540, 0.17677669
    %v2542 = vsel %vm305, %v2541, -inf
    %2543 = vmax.xlane.f32.xlu0 %v2542
    %v2544 = vpop.xlane.xlu0 %2543
    %v2545 = vsub.f32 %v2541, %v2544
    %v2546 = vmul.f32 %v2545, 1.442695
    %v2547 = vpow.pop %v2546
    %v2548 = vsel %vm305, %v2547, 0.0
    %2549 = vadd.xlane.f32.xlu0 %v2548
    %v2550 = vpop.xlane.xlu0 %2549
    %v2551 = vrcp.pop %v2550
    %v2552 = vmul.f32 %v2547, %v2551
    %v2554 = vsel %vm66, %v2552, 0
    %2556 = vmatprep.subr.mxu0 0.0
    %2557 = vmatpush1.msra.mxu0 %v29
    %2558 = vmatprep.subr.mxu0 0.0
    %2559 = vmatpush1.msra.mxu0 %v30
    %2560 = vmatprep.subr.mxu0 0.0
    %2561 = vmatpush1.msra.mxu0 %v31
    %2562 = vmatprep.subr.mxu0 0.0
    %2563 = vmatpush1.msra.mxu0 %v32
    %2564 = vmatprep.subr.mxu0 0.0
    %2565 = vmatpush1.msra.mxu0 %v33
    %2566 = vmatprep.subr.mxu0 0.0
    %2567 = vmatpush1.msra.mxu0 %v34
    %2568 = vmatprep.subr.mxu0 0.0
    %2569 = vmatpush1.msra.mxu0 %v35
    %2570 = vmatprep.subr.mxu0 0.0
    %2571 = vmatpush1.msra.mxu0 %v36
    %2572 = vmatprep.subr.mxu0 0.0
    %2573 = vmatpush1.msra.mxu0 %v37
    %2574 = vmatprep.subr.mxu0 0.0
    %2575 = vmatpush1.msra.mxu0 %v38
    %2576 = vmatprep.subr.mxu0 0.0
    %2577 = vmatpush1.msra.mxu0 %v39
    %2578 = vmatprep.subr.mxu0 0.0
    %2579 = vmatpush1.msra.mxu0 %v40
    %2580 = vmatprep.subr.mxu0 0.0
    %2581 = vmatpush1.msra.mxu0 %v322
    %2582 = vmatprep.subr.mxu0 0.0
    %2583 = vmatpush1.msra.mxu0 0.0
    %2584 = vmatprep.subr.mxu0 0.0
    %2585 = vmatpush1.msra.mxu0 0.0
    %2586 = vmatprep.subr.mxu0 0.0
    %2587 = vmatpush1.msra.mxu0 0.0
    %2588 = vmatprep.subr.mxu0 0.0
    %2589 = vmatpush1.msra.mxu0 0.0
    %2590 = vmatprep.subr.mxu0 0.0
    %2591 = vmatpush1.msra.mxu0 0.0
    %2592 = vmatprep.subr.mxu0 0.0
    %2593 = vmatpush1.msra.mxu0 0.0
    %2594 = vmatprep.subr.mxu0 0.0
    %2595 = vmatpush1.msra.mxu0 0.0
    %2596 = vmatprep.subr.mxu0 0.0
    %2597 = vmatpush1.msra.mxu0 0.0
    %2598 = vmatprep.subr.mxu0 0.0
    %2599 = vmatpush1.msra.mxu0 0.0
    %2600 = vmatprep.subr.mxu0 0.0
    %2601 = vmatpush1.msra.mxu0 0.0
    %2602 = vmatprep.subr.mxu0 0.0
    %2603 = vmatpush1.msra.mxu0 0.0
    %2604 = vmatprep.subr.mxu0 0.0
    %2605 = vmatpush1.msra.mxu0 0.0
    %2606 = vmatprep.subr.mxu0 0.0
    %2607 = vmatpush1.msra.mxu0 0.0
    %2608 = vmatprep.subr.mxu0 0.0
    %2609 = vmatpush1.msra.mxu0 0.0
    %2610 = vmatprep.subr.mxu0 0.0
    %2611 = vmatpush1.msra.mxu0 0.0
    %2612 = vmatprep.subr.mxu0 0.0
    %2613 = vmatpush1.msra.mxu0 0.0
    %2614 = vmatprep.subr.mxu0 0.0
    %2615 = vmatpush1.msra.mxu0 0.0
    %2616 = vmatprep.subr.mxu0 0.0
    %2617 = vmatpush1.msra.mxu0 0.0
    %2618 = vmatprep.subr.mxu0 0.0
    %2619 = vmatpush1.msra.mxu0 0.0
    %2620 = vmatprep.mubr.f32.mxu0 0.0
    %2621 = vmatmul.mubr.f32.gmra.mrb[0].mxu0 %v2554
    %v2622 = vpop.f32.mrb[0].mxu0
    %v2623 = vadd.f32 0.0, %v2622
    %v2624 = vpop.f32.mrb[0].mxu0
    %2625 = vdwg.mxu0
    %v2626 = vrot.slane %v2552, 1
    %v2627 = vsel %vm66, %v2626, 0
    %2629 = vmatprep.subr.mxu0 0.0
    %2630 = vmatpush1.msra.mxu0 %v42
    %2631 = vmatprep.subr.mxu0 0.0
    %2632 = vmatpush1.msra.mxu0 %v43
    %2633 = vmatprep.subr.mxu0 0.0
    %2634 = vmatpush1.msra.mxu0 %v44
    %2635 = vmatprep.subr.mxu0 0.0
    %2636 = vmatpush1.msra.mxu0 %v45
    %2637 = vmatprep.subr.mxu0 0.0
    %2638 = vmatpush1.msra.mxu0 %v46
    %2639 = vmatprep.subr.mxu0 0.0
    %2640 = vmatpush1.msra.mxu0 %v47
    %2641 = vmatprep.subr.mxu0 0.0
    %2642 = vmatpush1.msra.mxu0 %v48
    %2643 = vmatprep.subr.mxu0 0.0
    %2644 = vmatpush1.msra.mxu0 %v49
    %2645 = vmatprep.subr.mxu0 0.0
    %2646 = vmatpush1.msra.mxu0 %v50
    %2647 = vmatprep.subr.mxu0 0.0
    %2648 = vmatpush1.msra.mxu0 %v51
    %2649 = vmatprep.subr.mxu0 0.0
    %2650 = vmatpush1.msra.mxu0 %v52
    %2651 = vmatprep.subr.mxu0 0.0
    %2652 = vmatpush1.msra.mxu0 %v53
    %2653 = vmatprep.subr.mxu0 0.0
    %2654 = vmatpush1.msra.mxu0 %v398
    %2655 = vmatprep.subr.mxu0 0.0
    %2656 = vmatpush1.msra.mxu0 0.0
    %2657 = vmatprep.subr.mxu0 0.0
    %2658 = vmatpush1.msra.mxu0 0.0
    %2659 = vmatprep.subr.mxu0 0.0
    %2660 = vmatpush1.msra.mxu0 0.0
    %2661 = vmatprep.subr.mxu0 0.0
    %2662 = vmatpush1.msra.mxu0 0.0
    %2663 = vmatprep.subr.mxu0 0.0
    %2664 = vmatpush1.msra.mxu0 0.0
    %2665 = vmatprep.subr.mxu0 0.0
    %2666 = vmatpush1.msra.mxu0 0.0
    %2667 = vmatprep.subr.mxu0 0.0
    %2668 = vmatpush1.msra.mxu0 0.0
    %2669 = vmatprep.subr.mxu0 0.0
    %2670 = vmatpush1.msra.mxu0 0.0
    %2671 = vmatprep.subr.mxu0 0.0
    %2672 = vmatpush1.msra.mxu0 0.0
    %2673 = vmatprep.subr.mxu0 0.0
    %2674 = vmatpush1.msra.mxu0 0.0
    %2675 = vmatprep.subr.mxu0 0.0
    %2676 = vmatpush1.msra.mxu0 0.0
    %2677 = vmatprep.subr.mxu0 0.0
    %2678 = vmatpush1.msra.mxu0 0.0
    %2679 = vmatprep.subr.mxu0 0.0
    %2680 = vmatpush1.msra.mxu0 0.0
    %2681 = vmatprep.subr.mxu0 0.0
    %2682 = vmatpush1.msra.mxu0 0.0
    %2683 = vmatprep.subr.mxu0 0.0
    %2684 = vmatpush1.msra.mxu0 0.0
    %2685 = vmatprep.subr.mxu0 0.0
    %2686 = vmatpush1.msra.mxu0 0.0
    %2687 = vmatprep.subr.mxu0 0.0
    %2688 = vmatpush1.msra.mxu0 0.0
    %2689 = vmatprep.subr.mxu0 0.0
    %2690 = vmatpush1.msra.mxu0 0.0
    %2691 = vmatprep.subr.mxu0 0.0
    %2692 = vmatpush1.msra.mxu0 0.0
    %2693 = vmatprep.mubr.f32.mxu0 0.0
    %2694 = vmatmul.mubr.f32.gmra.mrb[0].mxu0 %v2627
    %v2695 = vpop.f32.mrb[0].mxu0
    %v2696 = vadd.f32 0.0, %v2695
    %v2697 = vpop.f32.mrb[0].mxu0
    %2698 = vdwg.mxu0
    %v2700 = vrot.slane %v2696, 7
    %v2702 = vsel %vm302, %v2623, %v2700
    %s2703 = scalar_lea.vmem %s0, 10
    %v2704 = vld [vmem:[%s2703] sm:$0x3]
    %2705 = vrot.lane.b32.xlu0 %v2383, 80
    %v2706 = vpop.permute.xlu0 %2705
    %2709 = vrot.lane.b32.xlu0 %v2702, 48
    %v2710 = vpop.permute.xlu0 %2709
    %v2712 = vsel %vm524, %v2704, %v2706
    %v2713 = vsel %vm526, %v2712, %v2710
    %v2715 = vsel %vm534, %v2713, 0
    %2717 = vmatprep.subr.mxu0 0.0
    %2718 = vmatpush1.msra.mxu0 %v55
    %2719 = vmatprep.subr.mxu0 0.0
    %2720 = vmatpush1.msra.mxu0 %v56
    %2721 = vmatprep.subr.mxu0 0.0
    %2722 = vmatpush1.msra.mxu0 %v57
    %2723 = vmatprep.subr.mxu0 0.0
    %2724 = vmatpush1.msra.mxu0 %v58
    %2725 = vmatprep.subr.mxu0 0.0
    %2726 = vmatpush1.msra.mxu0 %v59
    %2727 = vmatprep.subr.mxu0 0.0
    %2728 = vmatpush1.msra.mxu0 %v60
    %2729 = vmatprep.subr.mxu0 0.0
    %2730 = vmatpush1.msra.mxu0 %v61
    %2731 = vmatprep.subr.mxu0 0.0
    %2732 = vmatpush1.msra.mxu0 %v62
    %2733 = vmatprep.subr.mxu0 0.0
    %2734 = vmatpush1.msra.mxu0 %v63
    %2735 = vmatprep.subr.mxu0 0.0
    %2736 = vmatpush1.msra.mxu0 %v64
    %2737 = vmatprep.subr.mxu0 0.0
    %2738 = vmatpush1.msra.mxu0 0.0
    %2739 = vmatprep.subr.mxu0 0.0
    %2740 = vmatpush1.msra.mxu0 0.0
    %2741 = vmatprep.subr.mxu0 0.0
    %2742 = vmatpush1.msra.mxu0 0.0
    %2743 = vmatprep.subr.mxu0 0.0
    %2744 = vmatpush1.msra.mxu0 0.0
    %2745 = vmatprep.subr.mxu0 0.0
    %2746 = vmatpush1.msra.mxu0 0.0
    %2747 = vmatprep.subr.mxu0 0.0
    %2748 = vmatpush1.msra.mxu0 0.0
    %2749 = vmatprep.subr.mxu0 0.0
    %2750 = vmatpush1.msra.mxu0 0.0
    %2751 = vmatprep.subr.mxu0 0.0
    %2752 = vmatpush1.msra.mxu0 0.0
    %2753 = vmatprep.subr.mxu0 0.0
    %2754 = vmatpush1.msra.mxu0 0.0
    %2755 = vmatprep.subr.mxu0 0.0
    %2756 = vmatpush1.msra.mxu0 0.0
    %2757 = vmatprep.subr.mxu0 0.0
    %2758 = vmatpush1.msra.mxu0 0.0
    %2759 = vmatprep.subr.mxu0 0.0
    %2760 = vmatpush1.msra.mxu0 0.0
    %2761 = vmatprep.subr.mxu0 0.0
    %2762 = vmatpush1.msra.mxu0 0.0
    %2763 = vmatprep.subr.mxu0 0.0
    %2764 = vmatpush1.msra.mxu0 0.0
    %2765 = vmatprep.subr.mxu0 0.0
    %2766 = vmatpush1.msra.mxu0 0.0
    %2767 = vmatprep.subr.mxu0 0.0
    %2768 = vmatpush1.msra.mxu0 0.0
    %2769 = vmatprep.subr.mxu0 0.0
    %2770 = vmatpush1.msra.mxu0 0.0
    %2771 = vmatprep.subr.mxu0 0.0
    %2772 = vmatpush1.msra.mxu0 0.0
    %2773 = vmatprep.subr.mxu0 0.0
    %2774 = vmatpush1.msra.mxu0 0.0
    %2775 = vmatprep.subr.mxu0 0.0
    %2776 = vmatpush1.msra.mxu0 0.0
    %2777 = vmatprep.subr.mxu0 0.0
    %2778 = vmatpush1.msra.mxu0 0.0
    %2779 = vmatprep.subr.mxu0 0.0
    %2780 = vmatpush1.msra.mxu0 0.0
    %2781 = vmatprep.mubr.f32.mxu0 0.0
    %2782 = vmatmul.mubr.f32.gmra.mrb[0].mxu0 %v2715
    %v2783 = vpop.f32.mrb[0].mxu0
    %v2784 = vadd.f32 %v532, %v2783
    %v2785 = vpop.f32.mrb[0].mxu0
    %2786 = vdwg.mxu0
    %v2787 = vxor.u32 %v2784, 2147483648
    %v2788 = vmul.f32 %v2787, 1.442695
    %v2789 = vpow.pop %v2788
    %v2790 = vadd.f32 %v2789, 1.0
    %v2791 = vrcp.pop %v2790
    %v2792 = vmul.f32 1.0, %v2791
    %v2793 = vtanh.pop %v2784
    %v2794 = vmul.f32 %v2792, %v2377
    %2796 = vrot.lane.b32.xlu0 %v2793, 32
    %v2797 = vpop.permute.xlu0 %2796
    %v2799 = vmul.f32 %v2792, %v2797
    %2801 = vrot.lane.b32.xlu0 %v2799, 32
    %v2802 = vpop.permute.xlu0 %2801
    %v2804 = vadd.f32 %v2794, %v2802
    %v2805 = vtanh.pop %v2804
    %2807 = vrot.lane.b32.xlu0 %v2805, 32
    %v2808 = vpop.permute.xlu0 %2807
    %v2810 = vmul.f32 %v2792, %v2808
    %2812 = vrot.lane.b32.xlu0 %v2810, 64
    %v2813 = vpop.permute.xlu0 %2812
    %s2815 = scalar_lea.vmem [#allocation2], 10
    %2816 = vst.msk [vmem:[%s2815] sm:$0x3] %vm680, %v2813
    %v2817 = vsel %vm131, %v2813, 0
    %2819 = vmatprep.subr.mxu0 0.0
    %2820 = vmatpush1.msra.mxu0 %v21
    %2821 = vmatprep.subr.mxu0 0.0
    %2822 = vmatpush1.msra.mxu0 %v22
    %2823 = vmatprep.subr.mxu0 0.0
    %2824 = vmatpush1.msra.mxu0 %v23
    %2825 = vmatprep.subr.mxu0 0.0
    %2826 = vmatpush1.msra.mxu0 %v24
    %2827 = vmatprep.subr.mxu0 0.0
    %2828 = vmatpush1.msra.mxu0 0.0
    %2829 = vmatprep.subr.mxu0 0.0
    %2830 = vmatpush1.msra.mxu0 0.0
    %2831 = vmatprep.subr.mxu0 0.0
    %2832 = vmatpush1.msra.mxu0 0.0
    %2833 = vmatprep.subr.mxu0 0.0
    %2834 = vmatpush1.msra.mxu0 0.0
    %2835 = vmatprep.subr.mxu0 0.0
    %2836 = vmatpush1.msra.mxu0 0.0
    %2837 = vmatprep.subr.mxu0 0.0
    %2838 = vmatpush1.msra.mxu0 0.0
    %2839 = vmatprep.subr.mxu0 0.0
    %2840 = vmatpush1.msra.mxu0 0.0
    %2841 = vmatprep.subr.mxu0 0.0
    %2842 = vmatpush1.msra.mxu0 0.0
    %2843 = vmatprep.subr.mxu0 0.0
    %2844 = vmatpush1.msra.mxu0 0.0
    %2845 = vmatprep.subr.mxu0 0.0
    %2846 = vmatpush1.msra.mxu0 0.0
    %2847 = vmatprep.subr.mxu0 0.0
    %2848 = vmatpush1.msra.mxu0 0.0
    %2849 = vmatprep.subr.mxu0 0.0
    %2850 = vmatpush1.msra.mxu0 0.0
    %2851 = vmatprep.subr.mxu0 0.0
    %2852 = vmatpush1.msra.mxu0 0.0
    %2853 = vmatprep.subr.mxu0 0.0
    %2854 = vmatpush1.msra.mxu0 0.0
    %2855 = vmatprep.subr.mxu0 0.0
    %2856 = vmatpush1.msra.mxu0 0.0
    %2857 = vmatprep.subr.mxu0 0.0
    %2858 = vmatpush1.msra.mxu0 0.0
    %2859 = vmatprep.subr.mxu0 0.0
    %2860 = vmatpush1.msra.mxu0 0.0
    %2861 = vmatprep.subr.mxu0 0.0
    %2862 = vmatpush1.msra.mxu0 0.0
    %2863 = vmatprep.subr.mxu0 0.0
    %2864 = vmatpush1.msra.mxu0 0.0
    %2865 = vmatprep.subr.mxu0 0.0
    %2866 = vmatpush1.msra.mxu0 0.0
    %2867 = vmatprep.subr.mxu0 0.0
    %2868 = vmatpush1.msra.mxu0 0.0
    %2869 = vmatprep.subr.mxu0 0.0
    %2870 = vmatpush1.msra.mxu0 0.0
    %2871 = vmatprep.subr.mxu0 0.0
    %2872 = vmatpush1.msra.mxu0 0.0
    %2873 = vmatprep.subr.mxu0 0.0
    %2874 = vmatpush1.msra.mxu0 0.0
    %2875 = vmatprep.subr.mxu0 0.0
    %2876 = vmatpush1.msra.mxu0 0.0
    %2877 = vmatprep.subr.mxu0 0.0
    %2878 = vmatpush1.msra.mxu0 0.0
    %2879 = vmatprep.subr.mxu0 0.0
    %2880 = vmatpush1.msra.mxu0 0.0
    %2881 = vmatprep.subr.mxu0 0.0
    %2882 = vmatpush1.msra.mxu0 0.0
    %2883 = vmatprep.mubr.f32.mxu0 0.0
    %2884 = vmatmul.mubr.f32.gmra.mrb[0].mxu0 %v2817
    %v2885 = vpop.f32.mrb[0].mxu0
    %v2886 = vadd.f32 0.0, %v2885
    %v2887 = vpop.f32.mrb[0].mxu0
    %2888 = vdwg.mxu0
    %v2889 = vrot.slane %v2810, 1
    %2890 = vrot.lane.b32.xlu0 %v2889, 64
    %v2891 = vpop.permute.xlu0 %2890
    %v2892 = vsel %vm131, %v2891, 0
    %2894 = vmatprep.subr.mxu0 0.0
    %2895 = vmatpush1.msra.mxu0 %v25
    %2896 = vmatprep.subr.mxu0 0.0
    %2897 = vmatpush1.msra.mxu0 %v26
    %2898 = vmatprep.subr.mxu0 0.0
    %2899 = vmatpush1.msra.mxu0 %v27
    %2900 = vmatprep.subr.mxu0 0.0
    %2901 = vmatpush1.msra.mxu0 %v28
    %2902 = vmatprep.subr.mxu0 0.0
    %2903 = vmatpush1.msra.mxu0 0.0
    %2904 = vmatprep.subr.mxu0 0.0
    %2905 = vmatpush1.msra.mxu0 0.0
    %2906 = vmatprep.subr.mxu0 0.0
    %2907 = vmatpush1.msra.mxu0 0.0
    %2908 = vmatprep.subr.mxu0 0.0
    %2909 = vmatpush1.msra.mxu0 0.0
    %2910 = vmatprep.subr.mxu0 0.0
    %2911 = vmatpush1.msra.mxu0 0.0
    %2912 = vmatprep.subr.mxu0 0.0
    %2913 = vmatpush1.msra.mxu0 0.0
    %2914 = vmatprep.subr.mxu0 0.0
    %2915 = vmatpush1.msra.mxu0 0.0
    %2916 = vmatprep.subr.mxu0 0.0
    %2917 = vmatpush1.msra.mxu0 0.0
    %2918 = vmatprep.subr.mxu0 0.0
    %2919 = vmatpush1.msra.mxu0 0.0
    %2920 = vmatprep.subr.mxu0 0.0
    %2921 = vmatpush1.msra.mxu0 0.0
    %2922 = vmatprep.subr.mxu0 0.0
    %2923 = vmatpush1.msra.mxu0 0.0
    %2924 = vmatprep.subr.mxu0 0.0
    %2925 = vmatpush1.msra.mxu0 0.0
    %2926 = vmatprep.subr.mxu0 0.0
    %2927 = vmatpush1.msra.mxu0 0.0
    %2928 = vmatprep.subr.mxu0 0.0
    %2929 = vmatpush1.msra.mxu0 0.0
    %2930 = vmatprep.subr.mxu0 0.0
    %2931 = vmatpush1.msra.mxu0 0.0
    %2932 = vmatprep.subr.mxu0 0.0
    %2933 = vmatpush1.msra.mxu0 0.0
    %2934 = vmatprep.subr.mxu0 0.0
    %2935 = vmatpush1.msra.mxu0 0.0
    %2936 = vmatprep.subr.mxu0 0.0
    %2937 = vmatpush1.msra.mxu0 0.0
    %2938 = vmatprep.subr.mxu0 0.0
    %2939 = vmatpush1.msra.mxu0 0.0
    %2940 = vmatprep.subr.mxu0 0.0
    %2941 = vmatpush1.msra.mxu0 0.0
    %2942 = vmatprep.subr.mxu0 0.0
    %2943 = vmatpush1.msra.mxu0 0.0
    %2944 = vmatprep.subr.mxu0 0.0
    %2945 = vmatpush1.msra.mxu0 0.0
    %2946 = vmatprep.subr.mxu0 0.0
    %2947 = vmatpush1.msra.mxu0 0.0
    %2948 = vmatprep.subr.mxu0 0.0
    %2949 = vmatpush1.msra.mxu0 0.0
    %2950 = vmatprep.subr.mxu0 0.0
    %2951 = vmatpush1.msra.mxu0 0.0
    %2952 = vmatprep.subr.mxu0 0.0
    %2953 = vmatpush1.msra.mxu0 0.0
    %2954 = vmatprep.subr.mxu0 0.0
    %2955 = vmatpush1.msra.mxu0 0.0
    %2956 = vmatprep.subr.mxu0 0.0
    %2957 = vmatpush1.msra.mxu0 0.0
    %2958 = vmatprep.mubr.f32.mxu0 0.0
    %2959 = vmatmul.mubr.f32.gmra.mrb[0].mxu0 %v2892
    %v2960 = vpop.f32.mrb[0].mxu0
    %v2961 = vadd.f32 0.0, %v2960
    %v2962 = vpop.f32.mrb[0].mxu0
    %2963 = vdwg.mxu0
    %v2965 = vrot.slane %v2961, 7
    %v2967 = vsel %vm302, %v2886, %v2965
    %v2968 = vmul.f32 %v2967, 0.17677669
    %v2969 = vsel %vm305, %v2968, -inf
    %2970 = vmax.xlane.f32.xlu0 %v2969
    %v2971 = vpop.xlane.xlu0 %2970
    %v2972 = vsub.f32 %v2968, %v2971
    %v2973 = vmul.f32 %v2972, 1.442695
    %v2974 = vpow.pop %v2973
    %v2975 = vsel %vm305, %v2974, 0.0
    %2976 = vadd.xlane.f32.xlu0 %v2975
    %v2977 = vpop.xlane.xlu0 %2976
    %v2978 = vrcp.pop %v2977
    %v2979 = vmul.f32 %v2974, %v2978
    %v2981 = vsel %vm66, %v2979, 0
    %2983 = vmatprep.subr.mxu0 0.0
    %2984 = vmatpush1.msra.mxu0 %v29
    %2985 = vmatprep.subr.mxu0 0.0
    %2986 = vmatpush1.msra.mxu0 %v30
    %2987 = vmatprep.subr.mxu0 0.0
    %2988 = vmatpush1.msra.mxu0 %v31
    %2989 = vmatprep.subr.mxu0 0.0
    %2990 = vmatpush1.msra.mxu0 %v32
    %2991 = vmatprep.subr.mxu0 0.0
    %2992 = vmatpush1.msra.mxu0 %v33
    %2993 = vmatprep.subr.mxu0 0.0
    %2994 = vmatpush1.msra.mxu0 %v34
    %2995 = vmatprep.subr.mxu0 0.0
    %2996 = vmatpush1.msra.mxu0 %v35
    %2997 = vmatprep.subr.mxu0 0.0
    %2998 = vmatpush1.msra.mxu0 %v36
    %2999 = vmatprep.subr.mxu0 0.0
    %3000 = vmatpush1.msra.mxu0 %v37
    %3001 = vmatprep.subr.mxu0 0.0
    %3002 = vmatpush1.msra.mxu0 %v38
    %3003 = vmatprep.subr.mxu0 0.0
    %3004 = vmatpush1.msra.mxu0 %v39
    %3005 = vmatprep.subr.mxu0 0.0
    %3006 = vmatpush1.msra.mxu0 %v40
    %3007 = vmatprep.subr.mxu0 0.0
    %3008 = vmatpush1.msra.mxu0 %v322
    %3009 = vmatprep.subr.mxu0 0.0
    %3010 = vmatpush1.msra.mxu0 0.0
    %3011 = vmatprep.subr.mxu0 0.0
    %3012 = vmatpush1.msra.mxu0 0.0
    %3013 = vmatprep.subr.mxu0 0.0
    %3014 = vmatpush1.msra.mxu0 0.0
    %3015 = vmatprep.subr.mxu0 0.0
    %3016 = vmatpush1.msra.mxu0 0.0
    %3017 = vmatprep.subr.mxu0 0.0
    %3018 = vmatpush1.msra.mxu0 0.0
    %3019 = vmatprep.subr.mxu0 0.0
    %3020 = vmatpush1.msra.mxu0 0.0
    %3021 = vmatprep.subr.mxu0 0.0
    %3022 = vmatpush1.msra.mxu0 0.0
    %3023 = vmatprep.subr.mxu0 0.0
    %3024 = vmatpush1.msra.mxu0 0.0
    %3025 = vmatprep.subr.mxu0 0.0
    %3026 = vmatpush1.msra.mxu0 0.0
    %3027 = vmatprep.subr.mxu0 0.0
    %3028 = vmatpush1.msra.mxu0 0.0
    %3029 = vmatprep.subr.mxu0 0.0
    %3030 = vmatpush1.msra.mxu0 0.0
    %3031 = vmatprep.subr.mxu0 0.0
    %3032 = vmatpush1.msra.mxu0 0.0
    %3033 = vmatprep.subr.mxu0 0.0
    %3034 = vmatpush1.msra.mxu0 0.0
    %3035 = vmatprep.subr.mxu0 0.0
    %3036 = vmatpush1.msra.mxu0 0.0
    %3037 = vmatprep.subr.mxu0 0.0
    %3038 = vmatpush1.msra.mxu0 0.0
    %3039 = vmatprep.subr.mxu0 0.0
    %3040 = vmatpush1.msra.mxu0 0.0
    %3041 = vmatprep.subr.mxu0 0.0
    %3042 = vmatpush1.msra.mxu0 0.0
    %3043 = vmatprep.subr.mxu0 0.0
    %3044 = vmatpush1.msra.mxu0 0.0
    %3045 = vmatprep.subr.mxu0 0.0
    %3046 = vmatpush1.msra.mxu0 0.0
    %3047 = vmatprep.mubr.f32.mxu0 0.0
    %3048 = vmatmul.mubr.f32.gmra.mrb[0].mxu0 %v2981
    %v3049 = vpop.f32.mrb[0].mxu0
    %v3050 = vadd.f32 0.0, %v3049
    %v3051 = vpop.f32.mrb[0].mxu0
    %3052 = vdwg.mxu0
    %v3053 = vrot.slane %v2979, 1
    %v3054 = vsel %vm66, %v3053, 0
    %3056 = vmatprep.subr.mxu0 0.0
    %3057 = vmatpush1.msra.mxu0 %v42
    %3058 = vmatprep.subr.mxu0 0.0
    %3059 = vmatpush1.msra.mxu0 %v43
    %3060 = vmatprep.subr.mxu0 0.0
    %3061 = vmatpush1.msra.mxu0 %v44
    %3062 = vmatprep.subr.mxu0 0.0
    %3063 = vmatpush1.msra.mxu0 %v45
    %3064 = vmatprep.subr.mxu0 0.0
    %3065 = vmatpush1.msra.mxu0 %v46
    %3066 = vmatprep.subr.mxu0 0.0
    %3067 = vmatpush1.msra.mxu0 %v47
    %3068 = vmatprep.subr.mxu0 0.0
    %3069 = vmatpush1.msra.mxu0 %v48
    %3070 = vmatprep.subr.mxu0 0.0
    %3071 = vmatpush1.msra.mxu0 %v49
    %3072 = vmatprep.subr.mxu0 0.0
    %3073 = vmatpush1.msra.mxu0 %v50
    %3074 = vmatprep.subr.mxu0 0.0
    %3075 = vmatpush1.msra.mxu0 %v51
    %3076 = vmatprep.subr.mxu0 0.0
    %3077 = vmatpush1.msra.mxu0 %v52
    %3078 = vmatprep.subr.mxu0 0.0
    %3079 = vmatpush1.msra.mxu0 %v53
    %3080 = vmatprep.subr.mxu0 0.0
    %3081 = vmatpush1.msra.mxu0 %v398
    %3082 = vmatprep.subr.mxu0 0.0
    %3083 = vmatpush1.msra.mxu0 0.0
    %3084 = vmatprep.subr.mxu0 0.0
    %3085 = vmatpush1.msra.mxu0 0.0
    %3086 = vmatprep.subr.mxu0 0.0
    %3087 = vmatpush1.msra.mxu0 0.0
    %3088 = vmatprep.subr.mxu0 0.0
    %3089 = vmatpush1.msra.mxu0 0.0
    %3090 = vmatprep.subr.mxu0 0.0
    %3091 = vmatpush1.msra.mxu0 0.0
    %3092 = vmatprep.subr.mxu0 0.0
    %3093 = vmatpush1.msra.mxu0 0.0
    %3094 = vmatprep.subr.mxu0 0.0
    %3095 = vmatpush1.msra.mxu0 0.0
    %3096 = vmatprep.subr.mxu0 0.0
    %3097 = vmatpush1.msra.mxu0 0.0
    %3098 = vmatprep.subr.mxu0 0.0
    %3099 = vmatpush1.msra.mxu0 0.0
    %3100 = vmatprep.subr.mxu0 0.0
    %3101 = vmatpush1.msra.mxu0 0.0
    %3102 = vmatprep.subr.mxu0 0.0
    %3103 = vmatpush1.msra.mxu0 0.0
    %3104 = vmatprep.subr.mxu0 0.0
    %3105 = vmatpush1.msra.mxu0 0.0
    %3106 = vmatprep.subr.mxu0 0.0
    %3107 = vmatpush1.msra.mxu0 0.0
    %3108 = vmatprep.subr.mxu0 0.0
    %3109 = vmatpush1.msra.mxu0 0.0
    %3110 = vmatprep.subr.mxu0 0.0
    %3111 = vmatpush1.msra.mxu0 0.0
    %3112 = vmatprep.subr.mxu0 0.0
    %3113 = vmatpush1.msra.mxu0 0.0
    %3114 = vmatprep.subr.mxu0 0.0
    %3115 = vmatpush1.msra.mxu0 0.0
    %3116 = vmatprep.subr.mxu0 0.0
    %3117 = vmatpush1.msra.mxu0 0.0
    %3118 = vmatprep.subr.mxu0 0.0
    %3119 = vmatpush1.msra.mxu0 0.0
    %3120 = vmatprep.mubr.f32.mxu0 0.0
    %3121 = vmatmul.mubr.f32.gmra.mrb[0].mxu0 %v3054
    %v3122 = vpop.f32.mrb[0].mxu0
    %v3123 = vadd.f32 0.0, %v3122
    %v3124 = vpop.f32.mrb[0].mxu0
    %3125 = vdwg.mxu0
    %v3127 = vrot.slane %v3123, 7
    %v3129 = vsel %vm302, %v3050, %v3127
    %s3130 = scalar_lea.vmem %s0, 12
    %v3131 = vld [vmem:[%s3130] sm:$0x3]
    %3132 = vrot.lane.b32.xlu0 %v2810, 80
    %v3133 = vpop.permute.xlu0 %3132
    %3136 = vrot.lane.b32.xlu0 %v3129, 48
    %v3137 = vpop.permute.xlu0 %3136
    %v3139 = vsel %vm524, %v3131, %v3133
    %v3140 = vsel %vm526, %v3139, %v3137
    %v3142 = vsel %vm534, %v3140, 0
    %3144 = vmatprep.subr.mxu0 0.0
    %3145 = vmatpush1.msra.mxu0 %v55
    %3146 = vmatprep.subr.mxu0 0.0
    %3147 = vmatpush1.msra.mxu0 %v56
    %3148 = vmatprep.subr.mxu0 0.0
    %3149 = vmatpush1.msra.mxu0 %v57
    %3150 = vmatprep.subr.mxu0 0.0
    %3151 = vmatpush1.msra.mxu0 %v58
    %3152 = vmatprep.subr.mxu0 0.0
    %3153 = vmatpush1.msra.mxu0 %v59
    %3154 = vmatprep.subr.mxu0 0.0
    %3155 = vmatpush1.msra.mxu0 %v60
    %3156 = vmatprep.subr.mxu0 0.0
    %3157 = vmatpush1.msra.mxu0 %v61
    %3158 = vmatprep.subr.mxu0 0.0
    %3159 = vmatpush1.msra.mxu0 %v62
    %3160 = vmatprep.subr.mxu0 0.0
    %3161 = vmatpush1.msra.mxu0 %v63
    %3162 = vmatprep.subr.mxu0 0.0
    %3163 = vmatpush1.msra.mxu0 %v64
    %3164 = vmatprep.subr.mxu0 0.0
    %3165 = vmatpush1.msra.mxu0 0.0
    %3166 = vmatprep.subr.mxu0 0.0
    %3167 = vmatpush1.msra.mxu0 0.0
    %3168 = vmatprep.subr.mxu0 0.0
    %3169 = vmatpush1.msra.mxu0 0.0
    %3170 = vmatprep.subr.mxu0 0.0
    %3171 = vmatpush1.msra.mxu0 0.0
    %3172 = vmatprep.subr.mxu0 0.0
    %3173 = vmatpush1.msra.mxu0 0.0
    %3174 = vmatprep.subr.mxu0 0.0
    %3175 = vmatpush1.msra.mxu0 0.0
    %3176 = vmatprep.subr.mxu0 0.0
    %3177 = vmatpush1.msra.mxu0 0.0
    %3178 = vmatprep.subr.mxu0 0.0
    %3179 = vmatpush1.msra.mxu0 0.0
    %3180 = vmatprep.subr.mxu0 0.0
    %3181 = vmatpush1.msra.mxu0 0.0
    %3182 = vmatprep.subr.mxu0 0.0
    %3183 = vmatpush1.msra.mxu0 0.0
    %3184 = vmatprep.subr.mxu0 0.0
    %3185 = vmatpush1.msra.mxu0 0.0
    %3186 = vmatprep.subr.mxu0 0.0
    %3187 = vmatpush1.msra.mxu0 0.0
    %3188 = vmatprep.subr.mxu0 0.0
    %3189 = vmatpush1.msra.mxu0 0.0
    %3190 = vmatprep.subr.mxu0 0.0
    %3191 = vmatpush1.msra.mxu0 0.0
    %3192 = vmatprep.subr.mxu0 0.0
    %3193 = vmatpush1.msra.mxu0 0.0
    %3194 = vmatprep.subr.mxu0 0.0
    %3195 = vmatpush1.msra.mxu0 0.0
    %3196 = vmatprep.subr.mxu0 0.0
    %3197 = vmatpush1.msra.mxu0 0.0
    %3198 = vmatprep.subr.mxu0 0.0
    %3199 = vmatpush1.msra.mxu0 0.0
    %3200 = vmatprep.subr.mxu0 0.0
    %3201 = vmatpush1.msra.mxu0 0.0
    %3202 = vmatprep.subr.mxu0 0.0
    %3203 = vmatpush1.msra.mxu0 0.0
    %3204 = vmatprep.subr.mxu0 0.0
    %3205 = vmatpush1.msra.mxu0 0.0
    %3206 = vmatprep.subr.mxu0 0.0
    %3207 = vmatpush1.msra.mxu0 0.0
    %3208 = vmatprep.mubr.f32.mxu0 0.0
    %3209 = vmatmul.mubr.f32.gmra.mrb[0].mxu0 %v3142
    %v3210 = vpop.f32.mrb[0].mxu0
    %v3211 = vadd.f32 %v532, %v3210
    %v3212 = vpop.f32.mrb[0].mxu0
    %3213 = vdwg.mxu0
    %v3214 = vxor.u32 %v3211, 2147483648
    %v3215 = vmul.f32 %v3214, 1.442695
    %v3216 = vpow.pop %v3215
    %v3217 = vadd.f32 %v3216, 1.0
    %v3218 = vrcp.pop %v3217
    %v3219 = vmul.f32 1.0, %v3218
    %v3220 = vtanh.pop %v3211
    %v3221 = vmul.f32 %v3219, %v2804
    %3223 = vrot.lane.b32.xlu0 %v3220, 32
    %v3224 = vpop.permute.xlu0 %3223
    %v3226 = vmul.f32 %v3219, %v3224
    %3228 = vrot.lane.b32.xlu0 %v3226, 32
    %v3229 = vpop.permute.xlu0 %3228
    %v3231 = vadd.f32 %v3221, %v3229
    %v3232 = vtanh.pop %v3231
    %3234 = vrot.lane.b32.xlu0 %v3232, 32
    %v3235 = vpop.permute.xlu0 %3234
    %v3237 = vmul.f32 %v3219, %v3235
    %3239 = vrot.lane.b32.xlu0 %v3237, 64
    %v3240 = vpop.permute.xlu0 %3239
    %s3242 = scalar_lea.vmem [#allocation2], 12
    %3243 = vst.msk [vmem:[%s3242] sm:$0x3] %vm680, %v3240
    %v3244 = vsel %vm131, %v3240, 0
    %3246 = vmatprep.subr.mxu0 0.0
    %3247 = vmatpush1.msra.mxu0 %v21
    %3248 = vmatprep.subr.mxu0 0.0
    %3249 = vmatpush1.msra.mxu0 %v22
    %3250 = vmatprep.subr.mxu0 0.0
    %3251 = vmatpush1.msra.mxu0 %v23
    %3252 = vmatprep.subr.mxu0 0.0
    %3253 = vmatpush1.msra.mxu0 %v24
    %3254 = vmatprep.subr.mxu0 0.0
    %3255 = vmatpush1.msra.mxu0 0.0
    %3256 = vmatprep.subr.mxu0 0.0
    %3257 = vmatpush1.msra.mxu0 0.0
    %3258 = vmatprep.subr.mxu0 0.0
    %3259 = vmatpush1.msra.mxu0 0.0
    %3260 = vmatprep.subr.mxu0 0.0
    %3261 = vmatpush1.msra.mxu0 0.0
    %3262 = vmatprep.subr.mxu0 0.0
    %3263 = vmatpush1.msra.mxu0 0.0
    %3264 = vmatprep.subr.mxu0 0.0
    %3265 = vmatpush1.msra.mxu0 0.0
    %3266 = vmatprep.subr.mxu0 0.0
    %3267 = vmatpush1.msra.mxu0 0.0
    %3268 = vmatprep.subr.mxu0 0.0
    %3269 = vmatpush1.msra.mxu0 0.0
    %3270 = vmatprep.subr.mxu0 0.0
    %3271 = vmatpush1.msra.mxu0 0.0
    %3272 = vmatprep.subr.mxu0 0.0
    %3273 = vmatpush1.msra.mxu0 0.0
    %3274 = vmatprep.subr.mxu0 0.0
    %3275 = vmatpush1.msra.mxu0 0.0
    %3276 = vmatprep.subr.mxu0 0.0
    %3277 = vmatpush1.msra.mxu0 0.0
    %3278 = vmatprep.subr.mxu0 0.0
    %3279 = vmatpush1.msra.mxu0 0.0
    %3280 = vmatprep.subr.mxu0 0.0
    %3281 = vmatpush1.msra.mxu0 0.0
    %3282 = vmatprep.subr.mxu0 0.0
    %3283 = vmatpush1.msra.mxu0 0.0
    %3284 = vmatprep.subr.mxu0 0.0
    %3285 = vmatpush1.msra.mxu0 0.0
    %3286 = vmatprep.subr.mxu0 0.0
    %3287 = vmatpush1.msra.mxu0 0.0
    %3288 = vmatprep.subr.mxu0 0.0
    %3289 = vmatpush1.msra.mxu0 0.0
    %3290 = vmatprep.subr.mxu0 0.0
    %3291 = vmatpush1.msra.mxu0 0.0
    %3292 = vmatprep.subr.mxu0 0.0
    %3293 = vmatpush1.msra.mxu0 0.0
    %3294 = vmatprep.subr.mxu0 0.0
    %3295 = vmatpush1.msra.mxu0 0.0
    %3296 = vmatprep.subr.mxu0 0.0
    %3297 = vmatpush1.msra.mxu0 0.0
    %3298 = vmatprep.subr.mxu0 0.0
    %3299 = vmatpush1.msra.mxu0 0.0
    %3300 = vmatprep.subr.mxu0 0.0
    %3301 = vmatpush1.msra.mxu0 0.0
    %3302 = vmatprep.subr.mxu0 0.0
    %3303 = vmatpush1.msra.mxu0 0.0
    %3304 = vmatprep.subr.mxu0 0.0
    %3305 = vmatpush1.msra.mxu0 0.0
    %3306 = vmatprep.subr.mxu0 0.0
    %3307 = vmatpush1.msra.mxu0 0.0
    %3308 = vmatprep.subr.mxu0 0.0
    %3309 = vmatpush1.msra.mxu0 0.0
    %3310 = vmatprep.mubr.f32.mxu0 0.0
    %3311 = vmatmul.mubr.f32.gmra.mrb[0].mxu0 %v3244
    %v3312 = vpop.f32.mrb[0].mxu0
    %v3313 = vadd.f32 0.0, %v3312
    %v3314 = vpop.f32.mrb[0].mxu0
    %3315 = vdwg.mxu0
    %v3316 = vrot.slane %v3237, 1
    %3317 = vrot.lane.b32.xlu0 %v3316, 64
    %v3318 = vpop.permute.xlu0 %3317
    %v3319 = vsel %vm131, %v3318, 0
    %3321 = vmatprep.subr.mxu0 0.0
    %3322 = vmatpush1.msra.mxu0 %v25
    %3323 = vmatprep.subr.mxu0 0.0
    %3324 = vmatpush1.msra.mxu0 %v26
    %3325 = vmatprep.subr.mxu0 0.0
    %3326 = vmatpush1.msra.mxu0 %v27
    %3327 = vmatprep.subr.mxu0 0.0
    %3328 = vmatpush1.msra.mxu0 %v28
    %3329 = vmatprep.subr.mxu0 0.0
    %3330 = vmatpush1.msra.mxu0 0.0
    %3331 = vmatprep.subr.mxu0 0.0
    %3332 = vmatpush1.msra.mxu0 0.0
    %3333 = vmatprep.subr.mxu0 0.0
    %3334 = vmatpush1.msra.mxu0 0.0
    %3335 = vmatprep.subr.mxu0 0.0
    %3336 = vmatpush1.msra.mxu0 0.0
    %3337 = vmatprep.subr.mxu0 0.0
    %3338 = vmatpush1.msra.mxu0 0.0
    %3339 = vmatprep.subr.mxu0 0.0
    %3340 = vmatpush1.msra.mxu0 0.0
    %3341 = vmatprep.subr.mxu0 0.0
    %3342 = vmatpush1.msra.mxu0 0.0
    %3343 = vmatprep.subr.mxu0 0.0
    %3344 = vmatpush1.msra.mxu0 0.0
    %3345 = vmatprep.subr.mxu0 0.0
    %3346 = vmatpush1.msra.mxu0 0.0
    %3347 = vmatprep.subr.mxu0 0.0
    %3348 = vmatpush1.msra.mxu0 0.0
    %3349 = vmatprep.subr.mxu0 0.0
    %3350 = vmatpush1.msra.mxu0 0.0
    %3351 = vmatprep.subr.mxu0 0.0
    %3352 = vmatpush1.msra.mxu0 0.0
    %3353 = vmatprep.subr.mxu0 0.0
    %3354 = vmatpush1.msra.mxu0 0.0
    %3355 = vmatprep.subr.mxu0 0.0
    %3356 = vmatpush1.msra.mxu0 0.0
    %3357 = vmatprep.subr.mxu0 0.0
    %3358 = vmatpush1.msra.mxu0 0.0
    %3359 = vmatprep.subr.mxu0 0.0
    %3360 = vmatpush1.msra.mxu0 0.0
    %3361 = vmatprep.subr.mxu0 0.0
    %3362 = vmatpush1.msra.mxu0 0.0
    %3363 = vmatprep.subr.mxu0 0.0
    %3364 = vmatpush1.msra.mxu0 0.0
    %3365 = vmatprep.subr.mxu0 0.0
    %3366 = vmatpush1.msra.mxu0 0.0
    %3367 = vmatprep.subr.mxu0 0.0
    %3368 = vmatpush1.msra.mxu0 0.0
    %3369 = vmatprep.subr.mxu0 0.0
    %3370 = vmatpush1.msra.mxu0 0.0
    %3371 = vmatprep.subr.mxu0 0.0
    %3372 = vmatpush1.msra.mxu0 0.0
    %3373 = vmatprep.subr.mxu0 0.0
    %3374 = vmatpush1.msra.mxu0 0.0
    %3375 = vmatprep.subr.mxu0 0.0
    %3376 = vmatpush1.msra.mxu0 0.0
    %3377 = vmatprep.subr.mxu0 0.0
    %3378 = vmatpush1.msra.mxu0 0.0
    %3379 = vmatprep.subr.mxu0 0.0
    %3380 = vmatpush1.msra.mxu0 0.0
    %3381 = vmatprep.subr.mxu0 0.0
    %3382 = vmatpush1.msra.mxu0 0.0
    %3383 = vmatprep.subr.mxu0 0.0
    %3384 = vmatpush1.msra.mxu0 0.0
    %3385 = vmatprep.mubr.f32.mxu0 0.0
    %3386 = vmatmul.mubr.f32.gmra.mrb[0].mxu0 %v3319
    %v3387 = vpop.f32.mrb[0].mxu0
    %v3388 = vadd.f32 0.0, %v3387
    %v3389 = vpop.f32.mrb[0].mxu0
    %3390 = vdwg.mxu0
    %v3392 = vrot.slane %v3388, 7
    %v3394 = vsel %vm302, %v3313, %v3392
    %v3395 = vmul.f32 %v3394, 0.17677669
    %v3396 = vsel %vm305, %v3395, -inf
    %3397 = vmax.xlane.f32.xlu0 %v3396
    %v3398 = vpop.xlane.xlu0 %3397
    %v3399 = vsub.f32 %v3395, %v3398
    %v3400 = vmul.f32 %v3399, 1.442695
    %v3401 = vpow.pop %v3400
    %v3402 = vsel %vm305, %v3401, 0.0
    %3403 = vadd.xlane.f32.xlu0 %v3402
    %v3404 = vpop.xlane.xlu0 %3403
    %v3405 = vrcp.pop %v3404
    %v3406 = vmul.f32 %v3401, %v3405
    %v3408 = vsel %vm66, %v3406, 0
    %3410 = vmatprep.subr.mxu0 0.0
    %3411 = vmatpush1.msra.mxu0 %v29
    %3412 = vmatprep.subr.mxu0 0.0
    %3413 = vmatpush1.msra.mxu0 %v30
    %3414 = vmatprep.subr.mxu0 0.0
    %3415 = vmatpush1.msra.mxu0 %v31
    %3416 = vmatprep.subr.mxu0 0.0
    %3417 = vmatpush1.msra.mxu0 %v32
    %3418 = vmatprep.subr.mxu0 0.0
    %3419 = vmatpush1.msra.mxu0 %v33
    %3420 = vmatprep.subr.mxu0 0.0
    %3421 = vmatpush1.msra.mxu0 %v34
    %3422 = vmatprep.subr.mxu0 0.0
    %3423 = vmatpush1.msra.mxu0 %v35
    %3424 = vmatprep.subr.mxu0 0.0
    %3425 = vmatpush1.msra.mxu0 %v36
    %3426 = vmatprep.subr.mxu0 0.0
    %3427 = vmatpush1.msra.mxu0 %v37
    %3428 = vmatprep.subr.mxu0 0.0
    %3429 = vmatpush1.msra.mxu0 %v38
    %3430 = vmatprep.subr.mxu0 0.0
    %3431 = vmatpush1.msra.mxu0 %v39
    %3432 = vmatprep.subr.mxu0 0.0
    %3433 = vmatpush1.msra.mxu0 %v40
    %3434 = vmatprep.subr.mxu0 0.0
    %3435 = vmatpush1.msra.mxu0 %v322
    %3436 = vmatprep.subr.mxu0 0.0
    %3437 = vmatpush1.msra.mxu0 0.0
    %3438 = vmatprep.subr.mxu0 0.0
    %3439 = vmatpush1.msra.mxu0 0.0
    %3440 = vmatprep.subr.mxu0 0.0
    %3441 = vmatpush1.msra.mxu0 0.0
    %3442 = vmatprep.subr.mxu0 0.0
    %3443 = vmatpush1.msra.mxu0 0.0
    %3444 = vmatprep.subr.mxu0 0.0
    %3445 = vmatpush1.msra.mxu0 0.0
    %3446 = vmatprep.subr.mxu0 0.0
    %3447 = vmatpush1.msra.mxu0 0.0
    %3448 = vmatprep.subr.mxu0 0.0
    %3449 = vmatpush1.msra.mxu0 0.0
    %3450 = vmatprep.subr.mxu0 0.0
    %3451 = vmatpush1.msra.mxu0 0.0
    %3452 = vmatprep.subr.mxu0 0.0
    %3453 = vmatpush1.msra.mxu0 0.0
    %3454 = vmatprep.subr.mxu0 0.0
    %3455 = vmatpush1.msra.mxu0 0.0
    %3456 = vmatprep.subr.mxu0 0.0
    %3457 = vmatpush1.msra.mxu0 0.0
    %3458 = vmatprep.subr.mxu0 0.0
    %3459 = vmatpush1.msra.mxu0 0.0
    %3460 = vmatprep.subr.mxu0 0.0
    %3461 = vmatpush1.msra.mxu0 0.0
    %3462 = vmatprep.subr.mxu0 0.0
    %3463 = vmatpush1.msra.mxu0 0.0
    %3464 = vmatprep.subr.mxu0 0.0
    %3465 = vmatpush1.msra.mxu0 0.0
    %3466 = vmatprep.subr.mxu0 0.0
    %3467 = vmatpush1.msra.mxu0 0.0
    %3468 = vmatprep.subr.mxu0 0.0
    %3469 = vmatpush1.msra.mxu0 0.0
    %3470 = vmatprep.subr.mxu0 0.0
    %3471 = vmatpush1.msra.mxu0 0.0
    %3472 = vmatprep.subr.mxu0 0.0
    %3473 = vmatpush1.msra.mxu0 0.0
    %3474 = vmatprep.mubr.f32.mxu0 0.0
    %3475 = vmatmul.mubr.f32.gmra.mrb[0].mxu0 %v3408
    %v3476 = vpop.f32.mrb[0].mxu0
    %v3477 = vadd.f32 0.0, %v3476
    %v3478 = vpop.f32.mrb[0].mxu0
    %3479 = vdwg.mxu0
    %v3480 = vrot.slane %v3406, 1
    %v3481 = vsel %vm66, %v3480, 0
    %3483 = vmatprep.subr.mxu0 0.0
    %3484 = vmatpush1.msra.mxu0 %v42
    %3485 = vmatprep.subr.mxu0 0.0
    %3486 = vmatpush1.msra.mxu0 %v43
    %3487 = vmatprep.subr.mxu0 0.0
    %3488 = vmatpush1.msra.mxu0 %v44
    %3489 = vmatprep.subr.mxu0 0.0
    %3490 = vmatpush1.msra.mxu0 %v45
    %3491 = vmatprep.subr.mxu0 0.0
    %3492 = vmatpush1.msra.mxu0 %v46
    %3493 = vmatprep.subr.mxu0 0.0
    %3494 = vmatpush1.msra.mxu0 %v47
    %3495 = vmatprep.subr.mxu0 0.0
    %3496 = vmatpush1.msra.mxu0 %v48
    %3497 = vmatprep.subr.mxu0 0.0
    %3498 = vmatpush1.msra.mxu0 %v49
    %3499 = vmatprep.subr.mxu0 0.0
    %3500 = vmatpush1.msra.mxu0 %v50
    %3501 = vmatprep.subr.mxu0 0.0
    %3502 = vmatpush1.msra.mxu0 %v51
    %3503 = vmatprep.subr.mxu0 0.0
    %3504 = vmatpush1.msra.mxu0 %v52
    %3505 = vmatprep.subr.mxu0 0.0
    %3506 = vmatpush1.msra.mxu0 %v53
    %3507 = vmatprep.subr.mxu0 0.0
    %3508 = vmatpush1.msra.mxu0 %v398
    %3509 = vmatprep.subr.mxu0 0.0
    %3510 = vmatpush1.msra.mxu0 0.0
    %3511 = vmatprep.subr.mxu0 0.0
    %3512 = vmatpush1.msra.mxu0 0.0
    %3513 = vmatprep.subr.mxu0 0.0
    %3514 = vmatpush1.msra.mxu0 0.0
    %3515 = vmatprep.subr.mxu0 0.0
    %3516 = vmatpush1.msra.mxu0 0.0
    %3517 = vmatprep.subr.mxu0 0.0
    %3518 = vmatpush1.msra.mxu0 0.0
    %3519 = vmatprep.subr.mxu0 0.0
    %3520 = vmatpush1.msra.mxu0 0.0
    %3521 = vmatprep.subr.mxu0 0.0
    %3522 = vmatpush1.msra.mxu0 0.0
    %3523 = vmatprep.subr.mxu0 0.0
    %3524 = vmatpush1.msra.mxu0 0.0
    %3525 = vmatprep.subr.mxu0 0.0
    %3526 = vmatpush1.msra.mxu0 0.0
    %3527 = vmatprep.subr.mxu0 0.0
    %3528 = vmatpush1.msra.mxu0 0.0
    %3529 = vmatprep.subr.mxu0 0.0
    %3530 = vmatpush1.msra.mxu0 0.0
    %3531 = vmatprep.subr.mxu0 0.0
    %3532 = vmatpush1.msra.mxu0 0.0
    %3533 = vmatprep.subr.mxu0 0.0
    %3534 = vmatpush1.msra.mxu0 0.0
    %3535 = vmatprep.subr.mxu0 0.0
    %3536 = vmatpush1.msra.mxu0 0.0
    %3537 = vmatprep.subr.mxu0 0.0
    %3538 = vmatpush1.msra.mxu0 0.0
    %3539 = vmatprep.subr.mxu0 0.0
    %3540 = vmatpush1.msra.mxu0 0.0
    %3541 = vmatprep.subr.mxu0 0.0
    %3542 = vmatpush1.msra.mxu0 0.0
    %3543 = vmatprep.subr.mxu0 0.0
    %3544 = vmatpush1.msra.mxu0 0.0
    %3545 = vmatprep.subr.mxu0 0.0
    %3546 = vmatpush1.msra.mxu0 0.0
    %3547 = vmatprep.mubr.f32.mxu0 0.0
    %3548 = vmatmul.mubr.f32.gmra.mrb[0].mxu0 %v3481
    %v3549 = vpop.f32.mrb[0].mxu0
    %v3550 = vadd.f32 0.0, %v3549
    %v3551 = vpop.f32.mrb[0].mxu0
    %3552 = vdwg.mxu0
    %v3554 = vrot.slane %v3550, 7
    %v3556 = vsel %vm302, %v3477, %v3554
    %s3557 = scalar_lea.vmem %s0, 14
    %v3558 = vld [vmem:[%s3557] sm:$0x3]
    %3559 = vrot.lane.b32.xlu0 %v3237, 80
    %v3560 = vpop.permute.xlu0 %3559
    %3563 = vrot.lane.b32.xlu0 %v3556, 48
    %v3564 = vpop.permute.xlu0 %3563
    %v3566 = vsel %vm524, %v3558, %v3560
    %v3567 = vsel %vm526, %v3566, %v3564
    %v3569 = vsel %vm534, %v3567, 0
    %3571 = vmatprep.subr.mxu0 0.0
    %3572 = vmatpush1.msra.mxu0 %v55
    %3573 = vmatprep.subr.mxu0 0.0
    %3574 = vmatpush1.msra.mxu0 %v56
    %3575 = vmatprep.subr.mxu0 0.0
    %3576 = vmatpush1.msra.mxu0 %v57
    %3577 = vmatprep.subr.mxu0 0.0
    %3578 = vmatpush1.msra.mxu0 %v58
    %3579 = vmatprep.subr.mxu0 0.0
    %3580 = vmatpush1.msra.mxu0 %v59
    %3581 = vmatprep.subr.mxu0 0.0
    %3582 = vmatpush1.msra.mxu0 %v60
    %3583 = vmatprep.subr.mxu0 0.0
    %3584 = vmatpush1.msra.mxu0 %v61
    %3585 = vmatprep.subr.mxu0 0.0
    %3586 = vmatpush1.msra.mxu0 %v62
    %3587 = vmatprep.subr.mxu0 0.0
    %3588 = vmatpush1.msra.mxu0 %v63
    %3589 = vmatprep.subr.mxu0 0.0
    %3590 = vmatpush1.msra.mxu0 %v64
    %3591 = vmatprep.subr.mxu0 0.0
    %3592 = vmatpush1.msra.mxu0 0.0
    %3593 = vmatprep.subr.mxu0 0.0
    %3594 = vmatpush1.msra.mxu0 0.0
    %3595 = vmatprep.subr.mxu0 0.0
    %3596 = vmatpush1.msra.mxu0 0.0
    %3597 = vmatprep.subr.mxu0 0.0
    %3598 = vmatpush1.msra.mxu0 0.0
    %3599 = vmatprep.subr.mxu0 0.0
    %3600 = vmatpush1.msra.mxu0 0.0
    %3601 = vmatprep.subr.mxu0 0.0
    %3602 = vmatpush1.msra.mxu0 0.0
    %3603 = vmatprep.subr.mxu0 0.0
    %3604 = vmatpush1.msra.mxu0 0.0
    %3605 = vmatprep.subr.mxu0 0.0
    %3606 = vmatpush1.msra.mxu0 0.0
    %3607 = vmatprep.subr.mxu0 0.0
    %3608 = vmatpush1.msra.mxu0 0.0
    %3609 = vmatprep.subr.mxu0 0.0
    %3610 = vmatpush1.msra.mxu0 0.0
    %3611 = vmatprep.subr.mxu0 0.0
    %3612 = vmatpush1.msra.mxu0 0.0
    %3613 = vmatprep.subr.mxu0 0.0
    %3614 = vmatpush1.msra.mxu0 0.0
    %3615 = vmatprep.subr.mxu0 0.0
    %3616 = vmatpush1.msra.mxu0 0.0
    %3617 = vmatprep.subr.mxu0 0.0
    %3618 = vmatpush1.msra.mxu0 0.0
    %3619 = vmatprep.subr.mxu0 0.0
    %3620 = vmatpush1.msra.mxu0 0.0
    %3621 = vmatprep.subr.mxu0 0.0
    %3622 = vmatpush1.msra.mxu0 0.0
    %3623 = vmatprep.subr.mxu0 0.0
    %3624 = vmatpush1.msra.mxu0 0.0
    %3625 = vmatprep.subr.mxu0 0.0
    %3626 = vmatpush1.msra.mxu0 0.0
    %3627 = vmatprep.subr.mxu0 0.0
    %3628 = vmatpush1.msra.mxu0 0.0
    %3629 = vmatprep.subr.mxu0 0.0
    %3630 = vmatpush1.msra.mxu0 0.0
    %3631 = vmatprep.subr.mxu0 0.0
    %3632 = vmatpush1.msra.mxu0 0.0
    %3633 = vmatprep.subr.mxu0 0.0
    %3634 = vmatpush1.msra.mxu0 0.0
    %3635 = vmatprep.mubr.f32.mxu0 0.0
    %3636 = vmatmul.mubr.f32.gmra.mrb[0].mxu0 %v3569
    %v3637 = vpop.f32.mrb[0].mxu0
    %v3638 = vadd.f32 %v532, %v3637
    %v3639 = vpop.f32.mrb[0].mxu0
    %3640 = vdwg.mxu0
    %v3641 = vxor.u32 %v3638, 2147483648
    %v3642 = vmul.f32 %v3641, 1.442695
    %v3643 = vpow.pop %v3642
    %v3644 = vadd.f32 %v3643, 1.0
    %v3645 = vrcp.pop %v3644
    %v3646 = vmul.f32 1.0, %v3645
    %v3647 = vtanh.pop %v3638
    %v3648 = vmul.f32 %v3646, %v3231
    %3650 = vrot.lane.b32.xlu0 %v3647, 32
    %v3651 = vpop.permute.xlu0 %3650
    %v3653 = vmul.f32 %v3646, %v3651
    %3655 = vrot.lane.b32.xlu0 %v3653, 32
    %v3656 = vpop.permute.xlu0 %3655
    %v3658 = vadd.f32 %v3648, %v3656
    %v3659 = vtanh.pop %v3658
    %3661 = vrot.lane.b32.xlu0 %v3659, 32
    %v3662 = vpop.permute.xlu0 %3661
    %v3664 = vmul.f32 %v3646, %v3662
    %3666 = vrot.lane.b32.xlu0 %v3664, 64
    %v3667 = vpop.permute.xlu0 %3666
    %s3669 = scalar_lea.vmem [#allocation2], 14
    %3670 = vst.msk [vmem:[%s3669] sm:$0x3] %vm680, %v3667
    // Predicated region
    $region22: #{tpu_custom_call.1} parent=1 // pred_check
      _
    $region23: #{tpu_custom_call.1} parent=1 // pred_check_branch
      %3672 = sbr.rel (0) target = $region25
    $region24: #{tpu_custom_call.1} parent=1 // pred_region
      %s3674 = ssub.s32 256, 256
      %3675 = vsyncadd [#allocation3], %s3674
      %s3676 = sshll.u32 [#allocation2], 4
      %s3677 = int_to_ptr.vmem [resolvable:$true] %s3676
      %3682 = dma.vmem_to_hbm [thread:$0]  %s3677, 256, %s5, [#allocation3], 32, 32, 2
    $region25: #{tpu_custom_call.1} parent=1 // pred_fallthru
      _
    // Predicated region
    $region26: #{tpu_custom_call.1} parent=1 // pred_check
      _
    $region27: #{tpu_custom_call.1} parent=1 // pred_check_branch
      %3684 = sbr.rel (0) target = $region29
    $region28: #{tpu_custom_call.1} parent=1 // pred_region
      %3685 = dma.done [#allocation3], 256
    $region29: #{tpu_custom_call.1} parent=1 // pred_fallthru
      _
    %3686 = vsyncpa [#allocation3], 1

</llo_original>
